<compile_context>
chip_gen: v6e
topology: v6e:2x2x1
jax: 0.10.0
libtpu: 0.0.40
codegen_flags: <defaults>
</compile_context>

<pallas_src>
import math

import jax
import jax.numpy as jnp
from jax.experimental import pallas as pl
from jax.experimental.pallas import tpu as pltpu

IN_DIM = 20
H1_DIM = 40
H2_DIM = 1024
OUT_DIM = 784
OUT_PAD = 896          # 7 * 128 lanes (784 = 6*128 + 16 would force masked stores)
MAX_BLOCK_B = 512      # safe on v5e/v6e/v7x scoped-VMEM defaults


def _round_up(x, m):
    return ((x + m - 1) // m) * m


def _decoder_kernel(z_ref, w1_ref, b1_ref, w2_ref, b2_ref, w3_ref, b3_ref, o_ref):
    # One batch tile per grid step.  Weights are VMEM-resident (constant index_map).
    z = z_ref[...]                                                  # (TB, 20) f32

    # Layer 1: tiny (K=20, N=40) -> keep f32, negligible cost.
    h1 = jnp.dot(z, w1_ref[...], preferred_element_type=jnp.float32) + b1_ref[...]
    h1 = jnp.maximum(h1, 0.0)                                       # ReLU (VPU)

    # Layer 2: bf16 inputs, f32 accumulation on the MXU.
    h2 = jnp.dot(h1.astype(jnp.bfloat16), w2_ref[...],
                 preferred_element_type=jnp.float32) + b2_ref[...]
    h2 = jnp.maximum(h2, 0.0)                                       # ReLU (VPU)

    # Layer 3: dominant matmul (1024 x 896), bf16 weights, f32 accumulation.
    logits = jnp.dot(h2.astype(jnp.bfloat16), w3_ref[...],
                     preferred_element_type=jnp.float32) + b3_ref[...]
    o_ref[...] = jax.nn.sigmoid(logits)                             # EUP exp + VPU


def mnist_decoder_forward(z, params, *, block_b=MAX_BLOCK_B, check_nan=False):
    """Pallas implementation of MnistDecoder.forward.  Fully jittable.

    z: (B, 20) float32
    params: dict with
        w1 (20, 40)   f32, b1 (1, 40)   f32,
        w2 (40, 1024) bf16, b2 (1, 1024) f32,
        w3 (1024, 896) bf16 (cols 784: zero), b3 (1, 896) f32 (cols 784: zero)
    returns: (B, 784) float32
    """
    if check_nan:
        # Debug-only, jit-safe mirror of the PyTorch module's print-on-NaN.
        jax.lax.cond(jnp.isnan(z).any(),
                     lambda: jax.debug.print("MnistDecoder nan z"),
                     lambda: None)

    B = z.shape[0]
    tb = min(block_b, _round_up(B, 8))        # fill sublanes for tiny batches
    b_pad = _round_up(B, tb)
    z_p = z if b_pad == B else jnp.pad(z, ((0, b_pad - B), (0, 0)))

    w_bytes = (IN_DIM * H1_DIM * 4 + H1_DIM * 4
               + H1_DIM * H2_DIM * 2 + H2_DIM * 4
               + H2_DIM * OUT_PAD * 2 + OUT_PAD * 4)
    cost = pl.CostEstimate(
        flops=2 * b_pad * (IN_DIM * H1_DIM + H1_DIM * H2_DIM + H2_DIM * OUT_PAD),
        transcendentals=b_pad * OUT_PAD,
        bytes_accessed=w_bytes + b_pad * (IN_DIM + OUT_PAD) * 4,
    )

    out = pl.pallas_call(
        _decoder_kernel,
        out_shape=jax.ShapeDtypeStruct((b_pad, OUT_PAD), jnp.float32),
        grid=(pl.cdiv(b_pad, tb),),
        in_specs=[
            pl.BlockSpec((tb, IN_DIM), lambda i: (i, 0)),        # z tile (pipelined)
            pl.BlockSpec((IN_DIM, H1_DIM), lambda i: (0, 0)),    # w1 (resident)
            pl.BlockSpec((1, H1_DIM), lambda i: (0, 0)),         # b1
            pl.BlockSpec((H1_DIM, H2_DIM), lambda i: (0, 0)),    # w2
            pl.BlockSpec((1, H2_DIM), lambda i: (0, 0)),         # b2
            pl.BlockSpec((H2_DIM, OUT_PAD), lambda i: (0, 0)),   # w3
            pl.BlockSpec((1, OUT_PAD), lambda i: (0, 0)),        # b3
        ],
        out_specs=pl.BlockSpec((tb, OUT_PAD), lambda i: (i, 0)),
        compiler_params=pltpu.CompilerParams(
            dimension_semantics=("parallel",)),                  # v7x: 2 TCs
        cost_estimate=cost,
    )(
        z_p,
        params["w1"], params["b1"],
        params["w2"], params["b2"],
        params["w3"], params["b3"],
    )

    x_pro = out[:B, :OUT_DIM]

    if check_nan:
        jax.lax.cond(jnp.isnan(x_pro).any(),
                     lambda: jax.debug.print("MnistDecoder nan x_pro"),
                     lambda: None)
    return x_pro


def init_params(key):
    """Deterministic init mimicking nn.Linear default (uniform +/- 1/sqrt(fan_in)).

    w2/w3 are stored bf16; w3/b3 are zero-padded from 784 to 896 output columns.
    """
    def linear(key, fan_in, fan_out):
        kw, kb = jax.random.split(key)
        bound = 1.0 / math.sqrt(fan_in)
        w = jax.random.uniform(kw, (fan_in, fan_out), jnp.float32, -bound, bound)
        b = jax.random.uniform(kb, (1, fan_out), jnp.float32, -bound, bound)
        return w, b

    k1, k2, k3 = jax.random.split(key, 3)
    w1, b1 = linear(k1, IN_DIM, H1_DIM)
    w2, b2 = linear(k2, H1_DIM, H2_DIM)
    w3, b3 = linear(k3, H2_DIM, OUT_DIM)

    w3p = jnp.zeros((H2_DIM, OUT_PAD), jnp.float32).at[:, :OUT_DIM].set(w3)
    b3p = jnp.zeros((1, OUT_PAD), jnp.float32).at[:, :OUT_DIM].set(b3)

    return {
        "w1": w1, "b1": b1,
        "w2": w2.astype(jnp.bfloat16), "b2": b2,
        "w3": w3p.astype(jnp.bfloat16), "b3": b3p,
    }


if __name__ == "__main__":
    key = jax.random.PRNGKey(0)
    k_params, k_z = jax.random.split(key)

    params = init_params(k_params)
    B = 2
    z = jax.random.normal(k_z, (B, IN_DIM), dtype=jnp.float32)

    fwd = jax.jit(mnist_decoder_forward)
    x_pro = jax.block_until_ready(fwd(z, params))

    # Reference in plain JAX using the same arithmetic (bf16 weights, f32 acc).
    h1 = jnp.maximum(jnp.dot(z, params["w1"]) + params["b1"], 0.0)
    h2 = jnp.maximum(
        jnp.dot(h1.astype(jnp.bfloat16), params["w2"],
                preferred_element_type=jnp.float32) + params["b2"], 0.0)
    logits = jnp.dot(h2.astype(jnp.bfloat16), params["w3"],
                     preferred_element_type=jnp.float32) + params["b3"]
    ref = jax.nn.sigmoid(logits)[:, :OUT_DIM]

    assert x_pro.shape == (B, OUT_DIM), x_pro.shape
    assert jnp.allclose(x_pro, ref, atol=2e-3, rtol=2e-3), float(
        jnp.max(jnp.abs(x_pro - ref)))

    print("KERNEL_OK")
</pallas_src>

<mosaic_0001>
module attributes {stable_mosaic.version = 11 : i64} {
  func.func @_decoder_kernel(%arg0: i32, %arg1: memref<8x20xf32, #tpu.memory_space<vmem>>, %arg2: memref<20x40xf32, #tpu.memory_space<vmem>>, %arg3: memref<1x40xf32, #tpu.memory_space<vmem>>, %arg4: memref<40x1024xbf16, #tpu.memory_space<vmem>>, %arg5: memref<1x1024xf32, #tpu.memory_space<vmem>>, %arg6: memref<1024x896xbf16, #tpu.memory_space<vmem>>, %arg7: memref<1x896xf32, #tpu.memory_space<vmem>>, %arg8: memref<8x896xf32, #tpu.memory_space<vmem>>) attributes {dimension_semantics = [#tpu.dimension_semantics<parallel>], iteration_bounds = array<i64: 1>, scalar_prefetch = 0 : i64, scratch_operands = 0 : i64, tpu.core_type = #tpu.core_type<tc>, window_params = [{transform_indices = @transform_0, window_bounds = array<i64: 8, 20>}, {pipeline_mode = #tpu.pipeline_mode<synchronous>, transform_indices = @transform_1, window_bounds = array<i64: 20, 40>}, {pipeline_mode = #tpu.pipeline_mode<synchronous>, transform_indices = @transform_2, window_bounds = array<i64: 1, 40>}, {pipeline_mode = #tpu.pipeline_mode<synchronous>, transform_indices = @transform_3, window_bounds = array<i64: 40, 1024>}, {pipeline_mode = #tpu.pipeline_mode<synchronous>, transform_indices = @transform_4, window_bounds = array<i64: 1, 1024>}, {pipeline_mode = #tpu.pipeline_mode<synchronous>, transform_indices = @transform_5, window_bounds = array<i64: 1024, 896>}, {pipeline_mode = #tpu.pipeline_mode<synchronous>, transform_indices = @transform_6, window_bounds = array<i64: 1, 896>}, {transform_indices = @transform_7, window_bounds = array<i64: 8, 896>}]} {
    %c0 = arith.constant 0 : index
    %c0_0 = arith.constant 0 : index
    %0 = vector.load %arg1[%c0, %c0_0] : memref<8x20xf32, #tpu.memory_space<vmem>>, vector<8x20xf32>
    %c0_1 = arith.constant 0 : index
    %c0_2 = arith.constant 0 : index
    %1 = vector.load %arg2[%c0_1, %c0_2] : memref<20x40xf32, #tpu.memory_space<vmem>>, vector<20x40xf32>
    %cst = arith.constant dense<0.000000e+00> : vector<8x40xf32>
    %2 = tpu.matmul %0, %1, %cst {dimension_numbers = #tpu.dot_dimension_numbers<[1], [0], [0], [1], [0, 0, 1, 1], [], []>} : vector<8x20xf32>, vector<20x40xf32>, vector<8x40xf32> -> vector<8x40xf32>
    %c0_3 = arith.constant 0 : index
    %c0_4 = arith.constant 0 : index
    %3 = vector.load %arg3[%c0_3, %c0_4] : memref<1x40xf32, #tpu.memory_space<vmem>>, vector<1x40xf32>
    %4 = vector.broadcast %3 : vector<1x40xf32> to vector<8x40xf32>
    %5 = arith.addf %2, %4 : vector<8x40xf32>
    %cst_5 = arith.constant 0.000000e+00 : f32
    %6 = vector.broadcast %cst_5 : f32 to vector<8x40xf32>
    %7 = arith.maximumf %5, %6 : vector<8x40xf32>
    %8 = arith.truncf %7 : vector<8x40xf32> to vector<8x40xbf16>
    %c0_6 = arith.constant 0 : index
    %c0_7 = arith.constant 0 : index
    %9 = vector.load %arg4[%c0_6, %c0_7] : memref<40x1024xbf16, #tpu.memory_space<vmem>>, vector<40x1024xbf16>
    %cst_8 = arith.constant dense<0.000000e+00> : vector<8x1024xf32>
    %10 = tpu.matmul %8, %9, %cst_8 {dimension_numbers = #tpu.dot_dimension_numbers<[1], [0], [0], [1], [0, 0, 1, 1], [], []>} : vector<8x40xbf16>, vector<40x1024xbf16>, vector<8x1024xf32> -> vector<8x1024xf32>
    %c0_9 = arith.constant 0 : index
    %c0_10 = arith.constant 0 : index
    %11 = vector.load %arg5[%c0_9, %c0_10] : memref<1x1024xf32, #tpu.memory_space<vmem>>, vector<1x1024xf32>
    %12 = vector.broadcast %11 : vector<1x1024xf32> to vector<8x1024xf32>
    %13 = arith.addf %10, %12 : vector<8x1024xf32>
    %cst_11 = arith.constant 0.000000e+00 : f32
    %14 = vector.broadcast %cst_11 : f32 to vector<8x1024xf32>
    %15 = arith.maximumf %13, %14 : vector<8x1024xf32>
    %16 = arith.truncf %15 : vector<8x1024xf32> to vector<8x1024xbf16>
    %c0_12 = arith.constant 0 : index
    %c0_13 = arith.constant 0 : index
    %17 = vector.load %arg6[%c0_12, %c0_13] : memref<1024x896xbf16, #tpu.memory_space<vmem>>, vector<1024x896xbf16>
    %cst_14 = arith.constant dense<0.000000e+00> : vector<8x896xf32>
    %18 = tpu.matmul %16, %17, %cst_14 {dimension_numbers = #tpu.dot_dimension_numbers<[1], [0], [0], [1], [0, 0, 1, 1], [], []>} : vector<8x1024xbf16>, vector<1024x896xbf16>, vector<8x896xf32> -> vector<8x896xf32>
    %c0_15 = arith.constant 0 : index
    %c0_16 = arith.constant 0 : index
    %19 = vector.load %arg7[%c0_15, %c0_16] : memref<1x896xf32, #tpu.memory_space<vmem>>, vector<1x896xf32>
    %20 = vector.broadcast %19 : vector<1x896xf32> to vector<8x896xf32>
    %21 = arith.addf %18, %20 : vector<8x896xf32>
    %22 = arith.negf %21 : vector<8x896xf32>
    %23 = math.exp %22 : vector<8x896xf32>
    %cst_17 = arith.constant 1.000000e+00 : f32
    %24 = vector.broadcast %cst_17 : f32 to vector<8x896xf32>
    %25 = arith.addf %24, %23 : vector<8x896xf32>
    %26 = arith.divf %24, %25 : vector<8x896xf32>
    %c0_18 = arith.constant 0 : index
    %c0_19 = arith.constant 0 : index
    %27 = vector.load %arg8[%c0_18, %c0_19] : memref<8x896xf32, #tpu.memory_space<vmem>>, vector<8x896xf32>
    tpu.vector_store %arg8[%c0_18, %c0_19], %26 {strides = array<i32>} : memref<8x896xf32, #tpu.memory_space<vmem>>, vector<8x896xf32>,
    return
  }
  func.func @transform_0(%arg0: i32) -> (i32, i32) {
    %c0_i32 = arith.constant 0 : i32
    %c0_i32_0 = arith.constant 0 : i32
    return %arg0, %c0_i32 : i32, i32
  }
  func.func @transform_1(%arg0: i32) -> (i32, i32) {
    %c0_i32 = arith.constant 0 : i32
    %c0_i32_0 = arith.constant 0 : i32
    %c0_i32_1 = arith.constant 0 : i32
    return %c0_i32, %c0_i32_0 : i32, i32
  }
  func.func @transform_2(%arg0: i32) -> (i32, i32) {
    %c0_i32 = arith.constant 0 : i32
    %c0_i32_0 = arith.constant 0 : i32
    %c0_i32_1 = arith.constant 0 : i32
    return %c0_i32, %c0_i32_0 : i32, i32
  }
  func.func @transform_3(%arg0: i32) -> (i32, i32) {
    %c0_i32 = arith.constant 0 : i32
    %c0_i32_0 = arith.constant 0 : i32
    %c0_i32_1 = arith.constant 0 : i32
    return %c0_i32, %c0_i32_0 : i32, i32
  }
  func.func @transform_4(%arg0: i32) -> (i32, i32) {
    %c0_i32 = arith.constant 0 : i32
    %c0_i32_0 = arith.constant 0 : i32
    %c0_i32_1 = arith.constant 0 : i32
    return %c0_i32, %c0_i32_0 : i32, i32
  }
  func.func @transform_5(%arg0: i32) -> (i32, i32) {
    %c0_i32 = arith.constant 0 : i32
    %c0_i32_0 = arith.constant 0 : i32
    %c0_i32_1 = arith.constant 0 : i32
    return %c0_i32, %c0_i32_0 : i32, i32
  }
  func.func @transform_6(%arg0: i32) -> (i32, i32) {
    %c0_i32 = arith.constant 0 : i32
    %c0_i32_0 = arith.constant 0 : i32
    %c0_i32_1 = arith.constant 0 : i32
    return %c0_i32, %c0_i32_0 : i32, i32
  }
  func.func @transform_7(%arg0: i32) -> (i32, i32) {
    %c0_i32 = arith.constant 0 : i32
    %c0_i32_0 = arith.constant 0 : i32
    return %arg0, %c0_i32 : i32, i32
  }
}

</mosaic_0001>

<llo_original>
// kernel: mnist_decoder_forward.1
$region0: #{mnist_decoder_forward.1}
  #allocation0 [shape = 'u32[]', space=smem, size = 0x4, offset = 0x4, fixed_abs, tag = 'smem constant byte address 0x4 - core index']
  #allocation1 [shape = 'u32[144,128]{1,0:T(1,128)}', space=vmem, size = 0x12000, scoped, tag = 'internal scratch']
  %s0 = inlined_call_operand.vmem [shape: f32[8,20], index: 0, kind: input, shape index: {}]
  %s1 = inlined_call_operand.hbm [shape: f32[20,40], index: 1, kind: input, shape index: {}]
  %s2 = inlined_call_operand.hbm [shape: f32[1,40], index: 2, kind: input, shape index: {}]
  %s3 = inlined_call_operand.hbm [shape: bf16[40,1024], index: 3, kind: input, shape index: {}]
  %s4 = inlined_call_operand.hbm [shape: f32[1,1024], index: 4, kind: input, shape index: {}]
  %s5 = inlined_call_operand.hbm [shape: bf16[1024,896], index: 5, kind: input, shape index: {}]
  %s6 = inlined_call_operand.hbm [shape: f32[1,896], index: 6, kind: input, shape index: {}]
  %s7 = inlined_call_operand.vmem [shape: f32[8,896], index: 7, kind: output, shape index: {}]
  %s8 = sld [smem:[#allocation0]]
  $region62: #{mnist_decoder_forward.1} parent=0
    _
  %s10 = ssub.s32 1, %s8
  %s11 = scalar_select 0, %s10, %s8
  $region1: #{mnist_decoder_forward.1} parent=0
    #allocation2 [shape = 'u8[12288]{0}', space=vmem, size = 0x3000, scoped, tag = 'input window, operand 1, single buffered']
    #allocation3 [shape = 's32[1]{0}', space=sflag, size = 0x4, scoped, tag = 'scoped memory for mnist_decoder_forward.1']
    #allocation4 [shape = 'u8[512]{0}', space=vmem, size = 0x400, scoped, tag = 'input window, operand 2, single buffered']
    #allocation5 [shape = 's32[1]{0}', space=sflag, size = 0x4, scoped, tag = 'scoped memory for mnist_decoder_forward.1']
    #allocation6 [shape = 'u8[81920]{0}', space=vmem, size = 0x14000, scoped, tag = 'input window, operand 3, single buffered']
    #allocation7 [shape = 'u8[4096]{0}', space=vmem, size = 0x1000, scoped, tag = 'input window, operand 4, single buffered']
    #allocation8 [shape = 's32[1]{0}', space=sflag, size = 0x4, scoped, tag = 'scoped memory for mnist_decoder_forward.1']
    #allocation9 [shape = 'u8[1835008]{0}', space=vmem, size = 0x1c0000, scoped, tag = 'input window, operand 5, single buffered']
    #allocation10 [shape = 'u8[3584]{0}', space=vmem, size = 0x1000, scoped, tag = 'input window, operand 6, single buffered']
    #allocation11 [shape = 's32[1]{0}', space=sflag, size = 0x4, scoped, tag = 'scoped memory for mnist_decoder_forward.1']
    %12 = vsyncpa [#allocation3], 0
    %13 = vsyncpa [#allocation5], 0
    %14 = vsyncpa [#allocation8], 0
    %15 = vsyncpa [#allocation11], 0
    // Predicated region
    $region2: #{mnist_decoder_forward.1} parent=1 // pred_check
      _
    $region3: #{mnist_decoder_forward.1} parent=1 // pred_check_branch
      %17 = sbr.rel (0) target = $region5
    $region4: #{mnist_decoder_forward.1} parent=1 // pred_region
      _
    $region5: #{mnist_decoder_forward.1} parent=1 // pred_fallthru
      _
    // Predicated region
    $region6: #{mnist_decoder_forward.1} parent=1 // pred_check
      _
    $region7: #{mnist_decoder_forward.1} parent=1 // pred_check_branch
      %19 = sbr.rel (0) target = $region9
    $region8: #{mnist_decoder_forward.1} parent=1 // pred_region
      %s21 = ssub.s32 384, 384
      %22 = vsyncadd [#allocation3], %s21
      %s23 = sshll.u32 [#allocation2], 4
      %s24 = int_to_ptr.vmem [resolvable:$true] %s23
      %29 = dma.hbm_to_vmem [thread:$0]  %s1, 384, %s24, [#allocation3], 128, 128, 8
    $region9: #{mnist_decoder_forward.1} parent=1 // pred_fallthru
      _
    // Predicated region
    $region10: #{mnist_decoder_forward.1} parent=1 // pred_check
      _
    $region11: #{mnist_decoder_forward.1} parent=1 // pred_check_branch
      %31 = sbr.rel (0) target = $region13
    $region12: #{mnist_decoder_forward.1} parent=1 // pred_region
      %s33 = ssub.s32 16, 16
      %34 = vsyncadd [#allocation5], %s33
      %s36 = sshll.u32 [#allocation4], 4
      %s37 = int_to_ptr.vmem [resolvable:$true] %s36
      %39 = dma.hbm_to_vmem [thread:$0]  %s2, 16, %s37, [#allocation5]
    $region13: #{mnist_decoder_forward.1} parent=1 // pred_fallthru
      _
    // Predicated region
    $region14: #{mnist_decoder_forward.1} parent=1 // pred_check
      _
    $region15: #{mnist_decoder_forward.1} parent=1 // pred_check_branch
      %41 = sbr.rel (0) target = $region17
    $region16: #{mnist_decoder_forward.1} parent=1 // pred_region
      %s43 = ssub.s32 2560, 2560
      %44 = vsyncadd [#allocation5], %s43
      %s45 = sshll.u32 [#allocation6], 4
      %s46 = int_to_ptr.vmem [resolvable:$true] %s45
      %51 = dma.hbm_to_vmem [thread:$0]  %s3, 2560, %s46, [#allocation5], 512, 512, 32
    $region17: #{mnist_decoder_forward.1} parent=1 // pred_fallthru
      _
    // Predicated region
    $region18: #{mnist_decoder_forward.1} parent=1 // pred_check
      _
    $region19: #{mnist_decoder_forward.1} parent=1 // pred_check_branch
      %53 = sbr.rel (0) target = $region21
    $region20: #{mnist_decoder_forward.1} parent=1 // pred_region
      %s55 = ssub.s32 128, 128
      %56 = vsyncadd [#allocation8], %s55
      %s58 = sshll.u32 [#allocation7], 4
      %s59 = int_to_ptr.vmem [resolvable:$true] %s58
      %61 = dma.hbm_to_vmem [thread:$0]  %s4, 128, %s59, [#allocation8]
    $region21: #{mnist_decoder_forward.1} parent=1 // pred_fallthru
      _
    // Predicated region
    $region22: #{mnist_decoder_forward.1} parent=1 // pred_check
      _
    $region23: #{mnist_decoder_forward.1} parent=1 // pred_check_branch
      %63 = sbr.rel (0) target = $region25
    $region24: #{mnist_decoder_forward.1} parent=1 // pred_region
      %s65 = ssub.s32 57344, 57344
      %66 = vsyncadd [#allocation8], %s65
      %s67 = sshll.u32 [#allocation9], 4
      %s68 = int_to_ptr.vmem [resolvable:$true] %s67
      %73 = dma.hbm_to_vmem [thread:$0]  %s5, 57344, %s68, [#allocation8], 448, 448, 28
    $region25: #{mnist_decoder_forward.1} parent=1 // pred_fallthru
      _
    // Predicated region
    $region26: #{mnist_decoder_forward.1} parent=1 // pred_check
      _
    $region27: #{mnist_decoder_forward.1} parent=1 // pred_check_branch
      %75 = sbr.rel (0) target = $region29
    $region28: #{mnist_decoder_forward.1} parent=1 // pred_region
      %s77 = ssub.s32 112, 112
      %78 = vsyncadd [#allocation11], %s77
      %s80 = sshll.u32 [#allocation10], 4
      %s81 = int_to_ptr.vmem [resolvable:$true] %s80
      %83 = dma.hbm_to_vmem [thread:$0]  %s6, 112, %s81, [#allocation11]
    $region29: #{mnist_decoder_forward.1} parent=1 // pred_fallthru
      _
    // Predicated region
    $region30: #{mnist_decoder_forward.1} parent=1 // pred_check
      _
    $region31: #{mnist_decoder_forward.1} parent=1 // pred_check_branch
      %85 = sbr.rel (0) target = $region33
    $region32: #{mnist_decoder_forward.1} parent=1 // pred_region
      %86 = dma.done [#allocation3], 384
    $region33: #{mnist_decoder_forward.1} parent=1 // pred_fallthru
      _
    // Predicated region
    $region34: #{mnist_decoder_forward.1} parent=1 // pred_check
      _
    $region35: #{mnist_decoder_forward.1} parent=1 // pred_check_branch
      %88 = sbr.rel (0) target = $region37
    $region36: #{mnist_decoder_forward.1} parent=1 // pred_region
      %89 = dma.done [#allocation5], 16
    $region37: #{mnist_decoder_forward.1} parent=1 // pred_fallthru
      _
    // Predicated region
    $region38: #{mnist_decoder_forward.1} parent=1 // pred_check
      _
    $region39: #{mnist_decoder_forward.1} parent=1 // pred_check_branch
      %91 = sbr.rel (0) target = $region41
    $region40: #{mnist_decoder_forward.1} parent=1 // pred_region
      %92 = dma.done [#allocation5], 2560
    $region41: #{mnist_decoder_forward.1} parent=1 // pred_fallthru
      _
    // Predicated region
    $region42: #{mnist_decoder_forward.1} parent=1 // pred_check
      _
    $region43: #{mnist_decoder_forward.1} parent=1 // pred_check_branch
      %94 = sbr.rel (0) target = $region45
    $region44: #{mnist_decoder_forward.1} parent=1 // pred_region
      %95 = dma.done [#allocation8], 128
    $region45: #{mnist_decoder_forward.1} parent=1 // pred_fallthru
      _
    // Predicated region
    $region46: #{mnist_decoder_forward.1} parent=1 // pred_check
      _
    $region47: #{mnist_decoder_forward.1} parent=1 // pred_check_branch
      %97 = sbr.rel (0) target = $region49
    $region48: #{mnist_decoder_forward.1} parent=1 // pred_region
      %98 = dma.done [#allocation8], 57344
    $region49: #{mnist_decoder_forward.1} parent=1 // pred_fallthru
      _
    // Predicated region
    $region50: #{mnist_decoder_forward.1} parent=1 // pred_check
      _
    $region51: #{mnist_decoder_forward.1} parent=1 // pred_check_branch
      %100 = sbr.rel (0) target = $region53
    $region52: #{mnist_decoder_forward.1} parent=1 // pred_region
      %101 = dma.done [#allocation11], 112
    $region53: #{mnist_decoder_forward.1} parent=1 // pred_fallthru
      _
    %v103 = vld [vmem:[%s0] sm:$0xff]
    %v104 = vld [vmem:[#allocation2] sm:$0xff]
    %v105 = vld [vmem:[#allocation2 + $0x8] sm:$0xff]
    %v106 = vld [vmem:[#allocation2 + $0x10] sm:$0xf]
    %v107 = vld [vmem:[#allocation4] sm:$0x1]
    %v109 = vlaneseq
    %v110 = vshrl.u32 %v109, 7
    %v111 = vsub.s32 0, %v110
    %v112 = vrot.slane %v107, %v111
    %vm114 = vcmask 162816
    %v116 = vsel %vm114, %v103, 0
    %vm118 = vcmask 1043456
    %v120 = vsel %vm118, %v106, 0
    %122 = vmatprep.subr.mxu0 0.0
    %123 = vmatpush1.msra.mxu0 0.0
    %124 = vmatprep.subr.mxu0 0.0
    %125 = vmatpush1.msra.mxu0 0.0
    %126 = vmatprep.subr.mxu0 0.0
    %127 = vmatpush1.msra.mxu0 0.0
    %128 = vmatprep.subr.mxu0 0.0
    %129 = vmatpush1.msra.mxu0 0.0
    %130 = vmatprep.subr.mxu0 0.0
    %131 = vmatpush1.msra.mxu0 0.0
    %132 = vmatprep.subr.mxu0 0.0
    %133 = vmatpush1.msra.mxu0 0.0
    %134 = vmatprep.subr.mxu0 0.0
    %135 = vmatpush1.msra.mxu0 0.0
    %136 = vmatprep.subr.mxu0 0.0
    %137 = vmatpush1.msra.mxu0 0.0
    %138 = vmatprep.subr.mxu0 0.0
    %139 = vmatpush1.msra.mxu0 0.0
    %140 = vmatprep.subr.mxu0 0.0
    %141 = vmatpush1.msra.mxu0 0.0
    %142 = vmatprep.subr.mxu0 0.0
    %143 = vmatpush1.msra.mxu0 0.0
    %144 = vmatprep.subr.mxu0 0.0
    %145 = vmatpush1.msra.mxu0 0.0
    %146 = vmatprep.subr.mxu0 0.0
    %147 = vmatpush1.msra.mxu0 0.0
    %148 = vmatprep.subr.mxu0 0.0
    %149 = vmatpush1.msra.mxu0 %v120
    %150 = vmatprep.subr.mxu0 0.0
    %151 = vmatpush1.msra.mxu0 %v105
    %152 = vmatprep.subr.mxu0 0.0
    %153 = vmatpush1.msra.mxu0 %v104
    %154 = vmatprep.subr.mxu0 0.0
    %155 = vmatpush2.msra.mxu0 0.0
    %156 = vmatprep.subr.mxu0 0.0
    %157 = vmatpush2.msra.mxu0 0.0
    %158 = vmatprep.subr.mxu0 0.0
    %159 = vmatpush2.msra.mxu0 0.0
    %160 = vmatprep.subr.mxu0 0.0
    %161 = vmatpush2.msra.mxu0 0.0
    %162 = vmatprep.subr.mxu0 0.0
    %163 = vmatpush2.msra.mxu0 0.0
    %164 = vmatprep.subr.mxu0 0.0
    %165 = vmatpush2.msra.mxu0 0.0
    %166 = vmatprep.subr.mxu0 0.0
    %167 = vmatpush2.msra.mxu0 0.0
    %168 = vmatprep.subr.mxu0 0.0
    %169 = vmatpush2.msra.mxu0 0.0
    %170 = vmatprep.subr.mxu0 0.0
    %171 = vmatpush2.msra.mxu0 0.0
    %172 = vmatprep.subr.mxu0 0.0
    %173 = vmatpush2.msra.mxu0 0.0
    %174 = vmatprep.subr.mxu0 0.0
    %175 = vmatpush2.msra.mxu0 0.0
    %176 = vmatprep.subr.mxu0 0.0
    %177 = vmatpush2.msra.mxu0 0.0
    %178 = vmatprep.subr.mxu0 0.0
    %179 = vmatpush2.msra.mxu0 0.0
    %180 = vmatprep.subr.mxu0 0.0
    %181 = vmatpush2.msra.mxu0 0.0
    %182 = vmatprep.subr.mxu0 0.0
    %183 = vmatpush2.msra.mxu0 0.0
    %184 = vmatprep.subr.mxu0 0.0
    %185 = vmatpush2.msra.mxu0 0.0
    %186 = vmatprep.mubr.f32.mxu0 0.0
    %187 = vmatmul.mubr.f32.gmra.mxu0 %v116
    %v188 = vpop.f32.mrf.mxu0
    %v189 = vadd.f32 %v112, %v188
    %v190 = vpop.f32.mrf.mxu0
    %191 = vdwg.mxu0
    %v192 = vmax.f32 %v189, 0.0
    %v193 = vpack.c.bf16 %v192, %v192
    %v194 = vld [vmem:[#allocation6] sm:$0xff]
    %v195 = vld [vmem:[#allocation6 + $0x8] sm:$0xff]
    %v196 = vld [vmem:[#allocation6 + $0x10] sm:$0xff]
    %v197 = vld [vmem:[#allocation6 + $0x18] sm:$0xff]
    %v198 = vld [vmem:[#allocation6 + $0x20] sm:$0xff]
    %v199 = vld [vmem:[#allocation6 + $0x28] sm:$0xff]
    %v200 = vld [vmem:[#allocation6 + $0x30] sm:$0xff]
    %v201 = vld [vmem:[#allocation6 + $0x38] sm:$0xff]
    %v202 = vld [vmem:[#allocation6 + $0x40] sm:$0xff]
    %v203 = vld [vmem:[#allocation6 + $0x48] sm:$0xff]
    %v204 = vld [vmem:[#allocation6 + $0x50] sm:$0xff]
    %v205 = vld [vmem:[#allocation6 + $0x58] sm:$0xff]
    %v206 = vld [vmem:[#allocation6 + $0x60] sm:$0xff]
    %v207 = vld [vmem:[#allocation6 + $0x68] sm:$0xff]
    %v208 = vld [vmem:[#allocation6 + $0x70] sm:$0xff]
    %v209 = vld [vmem:[#allocation6 + $0x78] sm:$0xff]
    %v210 = vld [vmem:[#allocation6 + $0x80] sm:$0xff]
    %v211 = vld [vmem:[#allocation6 + $0x88] sm:$0xff]
    %v212 = vld [vmem:[#allocation6 + $0x90] sm:$0xff]
    %v213 = vld [vmem:[#allocation6 + $0x98] sm:$0xff]
    %v214 = vld [vmem:[#allocation7] sm:$0xff]
    %v216 = vlaneseq
    %v217 = vshrl.u32 %v216, 7
    %v218 = vsub.s32 0, %v217
    %v219 = vrot.slane %v214, %v218
    %v220 = vlaneseq
    %v221 = vshrl.u32 %v220, 7
    %v222 = vsub.s32 1, %v221
    %v223 = vrot.slane %v214, %v222
    %v224 = vlaneseq
    %v225 = vshrl.u32 %v224, 7
    %v226 = vsub.s32 2, %v225
    %v227 = vrot.slane %v214, %v226
    %v228 = vlaneseq
    %v229 = vshrl.u32 %v228, 7
    %v230 = vsub.s32 3, %v229
    %v231 = vrot.slane %v214, %v230
    %v232 = vlaneseq
    %v233 = vshrl.u32 %v232, 7
    %v234 = vsub.s32 4, %v233
    %v235 = vrot.slane %v214, %v234
    %v236 = vlaneseq
    %v237 = vshrl.u32 %v236, 7
    %v238 = vsub.s32 5, %v237
    %v239 = vrot.slane %v214, %v238
    %v240 = vlaneseq
    %v241 = vshrl.u32 %v240, 7
    %v242 = vsub.s32 6, %v241
    %v243 = vrot.slane %v214, %v242
    %v244 = vlaneseq
    %v245 = vshrl.u32 %v244, 7
    %v246 = vsub.s32 7, %v245
    %v247 = vrot.slane %v214, %v246
    %v276 = vunpack.c.l.b16 %v194
    %v277 = vunpack.c.h.b16 %v194
    %v278 = vunpack.c.l.b16 %v195
    %v279 = vunpack.c.h.b16 %v195
    %v280 = vunpack.c.l.b16 %v196
    %v281 = vunpack.c.h.b16 %v196
    %v282 = vunpack.c.l.b16 %v197
    %v283 = vunpack.c.h.b16 %v197
    %v284 = vunpack.c.l.b16 %v198
    %v285 = vunpack.c.h.b16 %v198
    %v286 = vunpack.c.l.b16 %v199
    %v287 = vunpack.c.h.b16 %v199
    %v288 = vunpack.c.l.b16 %v200
    %v289 = vunpack.c.h.b16 %v200
    %v290 = vunpack.c.l.b16 %v201
    %v291 = vunpack.c.h.b16 %v201
    %v292 = vunpack.c.l.b16 %v202
    %v293 = vunpack.c.h.b16 %v202
    %v294 = vunpack.c.l.b16 %v203
    %v295 = vunpack.c.h.b16 %v203
    %v296 = vunpack.c.l.b16 %v204
    %v297 = vunpack.c.h.b16 %v204
    %v298 = vunpack.c.l.b16 %v205
    %v299 = vunpack.c.h.b16 %v205
    %v300 = vunpack.c.l.b16 %v206
    %v301 = vunpack.c.h.b16 %v206
    %v302 = vunpack.c.l.b16 %v207
    %v303 = vunpack.c.h.b16 %v207
    %v304 = vunpack.c.l.b16 %v208
    %v305 = vunpack.c.h.b16 %v208
    %v306 = vunpack.c.l.b16 %v209
    %v307 = vunpack.c.h.b16 %v209
    %v308 = vunpack.c.l.b16 %v210
    %v309 = vunpack.c.h.b16 %v210
    %v310 = vunpack.c.l.b16 %v211
    %v311 = vunpack.c.h.b16 %v211
    %v312 = vunpack.c.l.b16 %v212
    %v313 = vunpack.c.h.b16 %v212
    %v314 = vunpack.c.l.b16 %v213
    %v315 = vunpack.c.h.b16 %v213
    %v316 = vpack.c.b16 %v284, %v276
    %v317 = vpack.c.b16 %v285, %v277
    %v318 = vpack.c.b16 %v286, %v278
    %v319 = vpack.c.b16 %v287, %v279
    %v320 = vpack.c.b16 %v288, %v280
    %v321 = vpack.c.b16 %v289, %v281
    %v322 = vpack.c.b16 %v290, %v282
    %v323 = vpack.c.b16 %v291, %v283
    %v324 = vpack.c.b16 %v300, %v292
    %v325 = vpack.c.b16 %v301, %v293
    %v326 = vpack.c.b16 %v302, %v294
    %v327 = vpack.c.b16 %v303, %v295
    %v328 = vpack.c.b16 %v304, %v296
    %v329 = vpack.c.b16 %v305, %v297
    %v330 = vpack.c.b16 %v306, %v298
    %v331 = vpack.c.b16 %v307, %v299
    %v332 = vpack.c.b16 %v308, %v308
    %v333 = vpack.c.b16 %v309, %v309
    %v334 = vpack.c.b16 %v310, %v310
    %v335 = vpack.c.b16 %v311, %v311
    %v336 = vpack.c.b16 %v312, %v312
    %v337 = vpack.c.b16 %v313, %v313
    %v338 = vpack.c.b16 %v314, %v314
    %v339 = vpack.c.b16 %v315, %v315
    %vm356 = vcmask 326656
    %v358 = vsel %vm356, %v193, 0
    %v361 = vsel %vm118, %v332, 0
    %v364 = vsel %vm118, %v333, 0
    %v367 = vsel %vm118, %v334, 0
    %v370 = vsel %vm118, %v335, 0
    %v373 = vsel %vm118, %v336, 0
    %v376 = vsel %vm118, %v337, 0
    %v379 = vsel %vm118, %v338, 0
    %v382 = vsel %vm118, %v339, 0
    %384 = vmatprep.subr.bf16.mxu0 0
    %385 = vmatpush1.bf16.msra.mxu0 0
    %386 = vmatprep.subr.bf16.mxu0 0
    %387 = vmatpush1.bf16.msra.mxu0 0
    %388 = vmatprep.subr.bf16.mxu0 0
    %389 = vmatpush1.bf16.msra.mxu0 0
    %390 = vmatprep.subr.bf16.mxu0 0
    %391 = vmatpush1.bf16.msra.mxu0 0
    %392 = vmatprep.subr.bf16.mxu0 0
    %393 = vmatpush1.bf16.msra.mxu0 0
    %394 = vmatprep.subr.bf16.mxu0 %v364
    %395 = vmatpush1.bf16.msra.mxu0 %v361
    %396 = vmatprep.subr.bf16.mxu0 %v325
    %397 = vmatpush1.bf16.msra.mxu0 %v324
    %398 = vmatprep.subr.bf16.mxu0 %v317
    %399 = vmatpush1.bf16.msra.mxu0 %v316
    %400 = vmatprep.subr.bf16.mxu0 0
    %401 = vmatpush2.bf16.msra.mxu0 0
    %402 = vmatprep.subr.bf16.mxu0 0
    %403 = vmatpush2.bf16.msra.mxu0 0
    %404 = vmatprep.subr.bf16.mxu0 0
    %405 = vmatpush2.bf16.msra.mxu0 0
    %406 = vmatprep.subr.bf16.mxu0 0
    %407 = vmatpush2.bf16.msra.mxu0 0
    %408 = vmatprep.subr.bf16.mxu0 0
    %409 = vmatpush2.bf16.msra.mxu0 0
    %410 = vmatprep.subr.bf16.mxu0 0
    %411 = vmatpush2.bf16.msra.mxu0 0
    %412 = vmatprep.subr.bf16.mxu0 0
    %413 = vmatpush2.bf16.msra.mxu0 0
    %414 = vmatprep.subr.bf16.mxu0 0
    %415 = vmatpush2.bf16.msra.mxu0 0
    %416 = vmatprep.mubr.bf16.mxu0 0
    %417 = vmatmul.mubr.bf16.gmra.mxu0 %v358
    %v418 = vpop.f32.mrf.mxu0
    %v419 = vadd.f32 %v219, %v418
    %v420 = vpop.f32.mrf.mxu0
    %v421 = vadd.f32 %v223, %v420
    %v422 = vpop.f32.mrf.mxu0
    %v423 = vpop.f32.mrf.mxu0
    %424 = vdwg.mxu0
    %425 = vmatprep.subr.bf16.mxu0 0
    %426 = vmatpush1.bf16.msra.mxu0 0
    %427 = vmatprep.subr.bf16.mxu0 0
    %428 = vmatpush1.bf16.msra.mxu0 0
    %429 = vmatprep.subr.bf16.mxu0 0
    %430 = vmatpush1.bf16.msra.mxu0 0
    %431 = vmatprep.subr.bf16.mxu0 0
    %432 = vmatpush1.bf16.msra.mxu0 0
    %433 = vmatprep.subr.bf16.mxu0 0
    %434 = vmatpush1.bf16.msra.mxu0 0
    %435 = vmatprep.subr.bf16.mxu0 %v370
    %436 = vmatpush1.bf16.msra.mxu0 %v367
    %437 = vmatprep.subr.bf16.mxu0 %v327
    %438 = vmatpush1.bf16.msra.mxu0 %v326
    %439 = vmatprep.subr.bf16.mxu0 %v319
    %440 = vmatpush1.bf16.msra.mxu0 %v318
    %441 = vmatprep.subr.bf16.mxu0 0
    %442 = vmatpush2.bf16.msra.mxu0 0
    %443 = vmatprep.subr.bf16.mxu0 0
    %444 = vmatpush2.bf16.msra.mxu0 0
    %445 = vmatprep.subr.bf16.mxu0 0
    %446 = vmatpush2.bf16.msra.mxu0 0
    %447 = vmatprep.subr.bf16.mxu0 0
    %448 = vmatpush2.bf16.msra.mxu0 0
    %449 = vmatprep.subr.bf16.mxu0 0
    %450 = vmatpush2.bf16.msra.mxu0 0
    %451 = vmatprep.subr.bf16.mxu0 0
    %452 = vmatpush2.bf16.msra.mxu0 0
    %453 = vmatprep.subr.bf16.mxu0 0
    %454 = vmatpush2.bf16.msra.mxu0 0
    %455 = vmatprep.subr.bf16.mxu0 0
    %456 = vmatpush2.bf16.msra.mxu0 0
    %457 = vmatprep.mubr.bf16.mxu0 0
    %458 = vmatmul.mubr.bf16.gmra.mxu0 %v358
    %v459 = vpop.f32.mrf.mxu0
    %v460 = vadd.f32 %v227, %v459
    %v461 = vpop.f32.mrf.mxu0
    %v462 = vadd.f32 %v231, %v461
    %v463 = vpop.f32.mrf.mxu0
    %v464 = vpop.f32.mrf.mxu0
    %465 = vdwg.mxu0
    %466 = vmatprep.subr.bf16.mxu0 0
    %467 = vmatpush1.bf16.msra.mxu0 0
    %468 = vmatprep.subr.bf16.mxu0 0
    %469 = vmatpush1.bf16.msra.mxu0 0
    %470 = vmatprep.subr.bf16.mxu0 0
    %471 = vmatpush1.bf16.msra.mxu0 0
    %472 = vmatprep.subr.bf16.mxu0 0
    %473 = vmatpush1.bf16.msra.mxu0 0
    %474 = vmatprep.subr.bf16.mxu0 0
    %475 = vmatpush1.bf16.msra.mxu0 0
    %476 = vmatprep.subr.bf16.mxu0 %v376
    %477 = vmatpush1.bf16.msra.mxu0 %v373
    %478 = vmatprep.subr.bf16.mxu0 %v329
    %479 = vmatpush1.bf16.msra.mxu0 %v328
    %480 = vmatprep.subr.bf16.mxu0 %v321
    %481 = vmatpush1.bf16.msra.mxu0 %v320
    %482 = vmatprep.subr.bf16.mxu0 0
    %483 = vmatpush2.bf16.msra.mxu0 0
    %484 = vmatprep.subr.bf16.mxu0 0
    %485 = vmatpush2.bf16.msra.mxu0 0
    %486 = vmatprep.subr.bf16.mxu0 0
    %487 = vmatpush2.bf16.msra.mxu0 0
    %488 = vmatprep.subr.bf16.mxu0 0
    %489 = vmatpush2.bf16.msra.mxu0 0
    %490 = vmatprep.subr.bf16.mxu0 0
    %491 = vmatpush2.bf16.msra.mxu0 0
    %492 = vmatprep.subr.bf16.mxu0 0
    %493 = vmatpush2.bf16.msra.mxu0 0
    %494 = vmatprep.subr.bf16.mxu0 0
    %495 = vmatpush2.bf16.msra.mxu0 0
    %496 = vmatprep.subr.bf16.mxu0 0
    %497 = vmatpush2.bf16.msra.mxu0 0
    %498 = vmatprep.mubr.bf16.mxu0 0
    %499 = vmatmul.mubr.bf16.gmra.mxu0 %v358
    %v500 = vpop.f32.mrf.mxu0
    %v501 = vadd.f32 %v235, %v500
    %v502 = vpop.f32.mrf.mxu0
    %v503 = vadd.f32 %v239, %v502
    %v504 = vpop.f32.mrf.mxu0
    %v505 = vpop.f32.mrf.mxu0
    %506 = vdwg.mxu0
    %507 = vmatprep.subr.bf16.mxu0 0
    %508 = vmatpush1.bf16.msra.mxu0 0
    %509 = vmatprep.subr.bf16.mxu0 0
    %510 = vmatpush1.bf16.msra.mxu0 0
    %511 = vmatprep.subr.bf16.mxu0 0
    %512 = vmatpush1.bf16.msra.mxu0 0
    %513 = vmatprep.subr.bf16.mxu0 0
    %514 = vmatpush1.bf16.msra.mxu0 0
    %515 = vmatprep.subr.bf16.mxu0 0
    %516 = vmatpush1.bf16.msra.mxu0 0
    %517 = vmatprep.subr.bf16.mxu0 %v382
    %518 = vmatpush1.bf16.msra.mxu0 %v379
    %519 = vmatprep.subr.bf16.mxu0 %v331
    %520 = vmatpush1.bf16.msra.mxu0 %v330
    %521 = vmatprep.subr.bf16.mxu0 %v323
    %522 = vmatpush1.bf16.msra.mxu0 %v322
    %523 = vmatprep.subr.bf16.mxu0 0
    %524 = vmatpush2.bf16.msra.mxu0 0
    %525 = vmatprep.subr.bf16.mxu0 0
    %526 = vmatpush2.bf16.msra.mxu0 0
    %527 = vmatprep.subr.bf16.mxu0 0
    %528 = vmatpush2.bf16.msra.mxu0 0
    %529 = vmatprep.subr.bf16.mxu0 0
    %530 = vmatpush2.bf16.msra.mxu0 0
    %531 = vmatprep.subr.bf16.mxu0 0
    %532 = vmatpush2.bf16.msra.mxu0 0
    %533 = vmatprep.subr.bf16.mxu0 0
    %534 = vmatpush2.bf16.msra.mxu0 0
    %535 = vmatprep.subr.bf16.mxu0 0
    %536 = vmatpush2.bf16.msra.mxu0 0
    %537 = vmatprep.subr.bf16.mxu0 0
    %538 = vmatpush2.bf16.msra.mxu0 0
    %539 = vmatprep.mubr.bf16.mxu0 0
    %540 = vmatmul.mubr.bf16.gmra.mxu0 %v358
    %v541 = vpop.f32.mrf.mxu0
    %v542 = vadd.f32 %v243, %v541
    %v543 = vpop.f32.mrf.mxu0
    %v544 = vadd.f32 %v247, %v543
    %v545 = vpop.f32.mrf.mxu0
    %v546 = vpop.f32.mrf.mxu0
    %547 = vdwg.mxu0
    %v548 = vmax.f32 %v419, 0.0
    %v549 = vmax.f32 %v421, 0.0
    %v550 = vmax.f32 %v460, 0.0
    %v551 = vmax.f32 %v462, 0.0
    %v552 = vmax.f32 %v501, 0.0
    %v553 = vmax.f32 %v503, 0.0
    %v554 = vmax.f32 %v542, 0.0
    %v555 = vmax.f32 %v544, 0.0
    %v556 = vpack.c.bf16 %v548, %v548
    %v557 = vpack.c.bf16 %v549, %v549
    %v558 = vpack.c.bf16 %v550, %v550
    %v559 = vpack.c.bf16 %v551, %v551
    %v560 = vpack.c.bf16 %v552, %v552
    %v561 = vpack.c.bf16 %v553, %v553
    %v562 = vpack.c.bf16 %v554, %v554
    %v563 = vpack.c.bf16 %v555, %v555
    %v564 = vld [vmem:[#allocation9] sm:$0xff]
    %v565 = vld [vmem:[#allocation9 + $0x8] sm:$0xff]
    %v566 = vld [vmem:[#allocation9 + $0x10] sm:$0xff]
    %v567 = vld [vmem:[#allocation9 + $0x18] sm:$0xf]
    %v568 = vld [vmem:[#allocation9 + $0x1c] sm:$0xff]
    %v569 = vld [vmem:[#allocation9 + $0x24] sm:$0xff]
    %v570 = vld [vmem:[#allocation9 + $0x2c] sm:$0xff]
    %v571 = vld [vmem:[#allocation9 + $0x34] sm:$0xf]
    %v572 = vld [vmem:[#allocation9 + $0x38] sm:$0xff]
    %v573 = vld [vmem:[#allocation9 + $0x40] sm:$0xff]
    %v574 = vld [vmem:[#allocation9 + $0x48] sm:$0xff]
    %v575 = vld [vmem:[#allocation9 + $0x50] sm:$0xf]
    %v576 = vld [vmem:[#allocation9 + $0x54] sm:$0xff]
    %v577 = vld [vmem:[#allocation9 + $0x5c] sm:$0xff]
    %v578 = vld [vmem:[#allocation9 + $0x64] sm:$0xff]
    %v579 = vld [vmem:[#allocation9 + $0x6c] sm:$0xf]
    %v580 = vld [vmem:[#allocation9 + $0x70] sm:$0xff]
    %v581 = vld [vmem:[#allocation9 + $0x78] sm:$0xff]
    %v582 = vld [vmem:[#allocation9 + $0x80] sm:$0xff]
    %v583 = vld [vmem:[#allocation9 + $0x88] sm:$0xf]
    %v584 = vld [vmem:[#allocation9 + $0x8c] sm:$0xff]
    %v585 = vld [vmem:[#allocation9 + $0x94] sm:$0xff]
    %v586 = vld [vmem:[#allocation9 + $0x9c] sm:$0xff]
    %v587 = vld [vmem:[#allocation9 + $0xa4] sm:$0xf]
    %v588 = vld [vmem:[#allocation9 + $0xa8] sm:$0xff]
    %v589 = vld [vmem:[#allocation9 + $0xb0] sm:$0xff]
    %v590 = vld [vmem:[#allocation9 + $0xb8] sm:$0xff]
    %v591 = vld [vmem:[#allocation9 + $0xc0] sm:$0xf]
    %v592 = vld [vmem:[#allocation9 + $0xc4] sm:$0xff]
    %v593 = vld [vmem:[#allocation9 + $0xcc] sm:$0xff]
    %v594 = vld [vmem:[#allocation9 + $0xd4] sm:$0xff]
    %v595 = vld [vmem:[#allocation9 + $0xdc] sm:$0xf]
    %v596 = vld [vmem:[#allocation9 + $0xe0] sm:$0xff]
    %v597 = vld [vmem:[#allocation9 + $0xe8] sm:$0xff]
    %v598 = vld [vmem:[#allocation9 + $0xf0] sm:$0xff]
    %v599 = vld [vmem:[#allocation9 + $0xf8] sm:$0xf]
    %v600 = vld [vmem:[#allocation9 + $0xfc] sm:$0xff]
    %v601 = vld [vmem:[#allocation9 + $0x104] sm:$0xff]
    %v602 = vld [vmem:[#allocation9 + $0x10c] sm:$0xff]
    %v603 = vld [vmem:[#allocation9 + $0x114] sm:$0xf]
    %v604 = vld [vmem:[#allocation9 + $0x118] sm:$0xff]
    %v605 = vld [vmem:[#allocation9 + $0x120] sm:$0xff]
    %v606 = vld [vmem:[#allocation9 + $0x128] sm:$0xff]
    %v607 = vld [vmem:[#allocation9 + $0x130] sm:$0xf]
    %v608 = vld [vmem:[#allocation9 + $0x134] sm:$0xff]
    %v609 = vld [vmem:[#allocation9 + $0x13c] sm:$0xff]
    %v610 = vld [vmem:[#allocation9 + $0x144] sm:$0xff]
    %v611 = vld [vmem:[#allocation9 + $0x14c] sm:$0xf]
    %v612 = vld [vmem:[#allocation9 + $0x150] sm:$0xff]
    %v613 = vld [vmem:[#allocation9 + $0x158] sm:$0xff]
    %v614 = vld [vmem:[#allocation9 + $0x160] sm:$0xff]
    %v615 = vld [vmem:[#allocation9 + $0x168] sm:$0xf]
    %v616 = vld [vmem:[#allocation9 + $0x16c] sm:$0xff]
    %v617 = vld [vmem:[#allocation9 + $0x174] sm:$0xff]
    %v618 = vld [vmem:[#allocation9 + $0x17c] sm:$0xff]
    %v619 = vld [vmem:[#allocation9 + $0x184] sm:$0xf]
    %v620 = vld [vmem:[#allocation9 + $0x188] sm:$0xff]
    %v621 = vld [vmem:[#allocation9 + $0x190] sm:$0xff]
    %v622 = vld [vmem:[#allocation9 + $0x198] sm:$0xff]
    %v623 = vld [vmem:[#allocation9 + $0x1a0] sm:$0xf]
    %v624 = vld [vmem:[#allocation9 + $0x1a4] sm:$0xff]
    %v625 = vld [vmem:[#allocation9 + $0x1ac] sm:$0xff]
    %v626 = vld [vmem:[#allocation9 + $0x1b4] sm:$0xff]
    %v627 = vld [vmem:[#allocation9 + $0x1bc] sm:$0xf]
    %v628 = vld [vmem:[#allocation9 + $0x1c0] sm:$0xff]
    %v629 = vld [vmem:[#allocation9 + $0x1c8] sm:$0xff]
    %v630 = vld [vmem:[#allocation9 + $0x1d0] sm:$0xff]
    %v631 = vld [vmem:[#allocation9 + $0x1d8] sm:$0xf]
    %v632 = vld [vmem:[#allocation9 + $0x1dc] sm:$0xff]
    %v633 = vld [vmem:[#allocation9 + $0x1e4] sm:$0xff]
    %v634 = vld [vmem:[#allocation9 + $0x1ec] sm:$0xff]
    %v635 = vld [vmem:[#allocation9 + $0x1f4] sm:$0xf]
    %v636 = vld [vmem:[#allocation9 + $0x1f8] sm:$0xff]
    %v637 = vld [vmem:[#allocation9 + $0x200] sm:$0xff]
    %v638 = vld [vmem:[#allocation9 + $0x208] sm:$0xff]
    %v639 = vld [vmem:[#allocation9 + $0x210] sm:$0xf]
    %v640 = vld [vmem:[#allocation9 + $0x214] sm:$0xff]
    %v641 = vld [vmem:[#allocation9 + $0x21c] sm:$0xff]
    %v642 = vld [vmem:[#allocation9 + $0x224] sm:$0xff]
    %v643 = vld [vmem:[#allocation9 + $0x22c] sm:$0xf]
    %v644 = vld [vmem:[#allocation9 + $0x230] sm:$0xff]
    %v645 = vld [vmem:[#allocation9 + $0x238] sm:$0xff]
    %v646 = vld [vmem:[#allocation9 + $0x240] sm:$0xff]
    %v647 = vld [vmem:[#allocation9 + $0x248] sm:$0xf]
    %v648 = vld [vmem:[#allocation9 + $0x24c] sm:$0xff]
    %v649 = vld [vmem:[#allocation9 + $0x254] sm:$0xff]
    %v650 = vld [vmem:[#allocation9 + $0x25c] sm:$0xff]
    %v651 = vld [vmem:[#allocation9 + $0x264] sm:$0xf]
    %v652 = vld [vmem:[#allocation9 + $0x268] sm:$0xff]
    %v653 = vld [vmem:[#allocation9 + $0x270] sm:$0xff]
    %v654 = vld [vmem:[#allocation9 + $0x278] sm:$0xff]
    %v655 = vld [vmem:[#allocation9 + $0x280] sm:$0xf]
    %v656 = vld [vmem:[#allocation9 + $0x284] sm:$0xff]
    %v657 = vld [vmem:[#allocation9 + $0x28c] sm:$0xff]
    %v658 = vld [vmem:[#allocation9 + $0x294] sm:$0xff]
    %v659 = vld [vmem:[#allocation9 + $0x29c] sm:$0xf]
    %v660 = vld [vmem:[#allocation9 + $0x2a0] sm:$0xff]
    %v661 = vld [vmem:[#allocation9 + $0x2a8] sm:$0xff]
    %v662 = vld [vmem:[#allocation9 + $0x2b0] sm:$0xff]
    %v663 = vld [vmem:[#allocation9 + $0x2b8] sm:$0xf]
    %v664 = vld [vmem:[#allocation9 + $0x2bc] sm:$0xff]
    %v665 = vld [vmem:[#allocation9 + $0x2c4] sm:$0xff]
    %v666 = vld [vmem:[#allocation9 + $0x2cc] sm:$0xff]
    %v667 = vld [vmem:[#allocation9 + $0x2d4] sm:$0xf]
    %v668 = vld [vmem:[#allocation9 + $0x2d8] sm:$0xff]
    %v669 = vld [vmem:[#allocation9 + $0x2e0] sm:$0xff]
    %v670 = vld [vmem:[#allocation9 + $0x2e8] sm:$0xff]
    %v671 = vld [vmem:[#allocation9 + $0x2f0] sm:$0xf]
    %v672 = vld [vmem:[#allocation9 + $0x2f4] sm:$0xff]
    %v673 = vld [vmem:[#allocation9 + $0x2fc] sm:$0xff]
    %v674 = vld [vmem:[#allocation9 + $0x304] sm:$0xff]
    %v675 = vld [vmem:[#allocation9 + $0x30c] sm:$0xf]
    %v676 = vld [vmem:[#allocation9 + $0x310] sm:$0xff]
    %v677 = vld [vmem:[#allocation9 + $0x318] sm:$0xff]
    %v678 = vld [vmem:[#allocation9 + $0x320] sm:$0xff]
    %v679 = vld [vmem:[#allocation9 + $0x328] sm:$0xf]
    %v680 = vld [vmem:[#allocation9 + $0x32c] sm:$0xff]
    %v681 = vld [vmem:[#allocation9 + $0x334] sm:$0xff]
    %v682 = vld [vmem:[#allocation9 + $0x33c] sm:$0xff]
    %v683 = vld [vmem:[#allocation9 + $0x344] sm:$0xf]
    %v684 = vld [vmem:[#allocation9 + $0x348] sm:$0xff]
    %v685 = vld [vmem:[#allocation9 + $0x350] sm:$0xff]
    %v686 = vld [vmem:[#allocation9 + $0x358] sm:$0xff]
    %v687 = vld [vmem:[#allocation9 + $0x360] sm:$0xf]
    %v688 = vld [vmem:[#allocation9 + $0x364] sm:$0xff]
    %v689 = vld [vmem:[#allocation9 + $0x36c] sm:$0xff]
    %v690 = vld [vmem:[#allocation9 + $0x374] sm:$0xff]
    %v691 = vld [vmem:[#allocation9 + $0x37c] sm:$0xf]
    %v692 = vld [vmem:[#allocation9 + $0x380] sm:$0xff]
    %v693 = vld [vmem:[#allocation9 + $0x388] sm:$0xff]
    %v694 = vld [vmem:[#allocation9 + $0x390] sm:$0xff]
    %v695 = vld [vmem:[#allocation9 + $0x398] sm:$0xf]
    %v696 = vld [vmem:[#allocation9 + $0x39c] sm:$0xff]
    %v697 = vld [vmem:[#allocation9 + $0x3a4] sm:$0xff]
    %v698 = vld [vmem:[#allocation9 + $0x3ac] sm:$0xff]
    %v699 = vld [vmem:[#allocation9 + $0x3b4] sm:$0xf]
    %v700 = vld [vmem:[#allocation9 + $0x3b8] sm:$0xff]
    %v701 = vld [vmem:[#allocation9 + $0x3c0] sm:$0xff]
    %v702 = vld [vmem:[#allocation9 + $0x3c8] sm:$0xff]
    %v703 = vld [vmem:[#allocation9 + $0x3d0] sm:$0xf]
    %v704 = vld [vmem:[#allocation9 + $0x3d4] sm:$0xff]
    %v705 = vld [vmem:[#allocation9 + $0x3dc] sm:$0xff]
    %v706 = vld [vmem:[#allocation9 + $0x3e4] sm:$0xff]
    %v707 = vld [vmem:[#allocation9 + $0x3ec] sm:$0xf]
    %v708 = vld [vmem:[#allocation9 + $0x3f0] sm:$0xff]
    %v709 = vld [vmem:[#allocation9 + $0x3f8] sm:$0xff]
    %v710 = vld [vmem:[#allocation9 + $0x400] sm:$0xff]
    %v711 = vld [vmem:[#allocation9 + $0x408] sm:$0xf]
    %v712 = vld [vmem:[#allocation9 + $0x40c] sm:$0xff]
    %v713 = vld [vmem:[#allocation9 + $0x414] sm:$0xff]
    %v714 = vld [vmem:[#allocation9 + $0x41c] sm:$0xff]
    %v715 = vld [vmem:[#allocation9 + $0x424] sm:$0xf]
    %v716 = vld [vmem:[#allocation9 + $0x428] sm:$0xff]
    %v717 = vld [vmem:[#allocation9 + $0x430] sm:$0xff]
    %v718 = vld [vmem:[#allocation9 + $0x438] sm:$0xff]
    %v719 = vld [vmem:[#allocation9 + $0x440] sm:$0xf]
    %v720 = vld [vmem:[#allocation9 + $0x444] sm:$0xff]
    %v721 = vld [vmem:[#allocation9 + $0x44c] sm:$0xff]
    %v722 = vld [vmem:[#allocation9 + $0x454] sm:$0xff]
    %v723 = vld [vmem:[#allocation9 + $0x45c] sm:$0xf]
    %v724 = vld [vmem:[#allocation9 + $0x460] sm:$0xff]
    %v725 = vld [vmem:[#allocation9 + $0x468] sm:$0xff]
    %v726 = vld [vmem:[#allocation9 + $0x470] sm:$0xff]
    %v727 = vld [vmem:[#allocation9 + $0x478] sm:$0xf]
    %v728 = vld [vmem:[#allocation9 + $0x47c] sm:$0xff]
    %v729 = vld [vmem:[#allocation9 + $0x484] sm:$0xff]
    %v730 = vld [vmem:[#allocation9 + $0x48c] sm:$0xff]
    %v731 = vld [vmem:[#allocation9 + $0x494] sm:$0xf]
    %v732 = vld [vmem:[#allocation9 + $0x498] sm:$0xff]
    %v733 = vld [vmem:[#allocation9 + $0x4a0] sm:$0xff]
    %v734 = vld [vmem:[#allocation9 + $0x4a8] sm:$0xff]
    %v735 = vld [vmem:[#allocation9 + $0x4b0] sm:$0xf]
    %v736 = vld [vmem:[#allocation9 + $0x4b4] sm:$0xff]
    %v737 = vld [vmem:[#allocation9 + $0x4bc] sm:$0xff]
    %v738 = vld [vmem:[#allocation9 + $0x4c4] sm:$0xff]
    %v739 = vld [vmem:[#allocation9 + $0x4cc] sm:$0xf]
    %v740 = vld [vmem:[#allocation9 + $0x4d0] sm:$0xff]
    %v741 = vld [vmem:[#allocation9 + $0x4d8] sm:$0xff]
    %v742 = vld [vmem:[#allocation9 + $0x4e0] sm:$0xff]
    %v743 = vld [vmem:[#allocation9 + $0x4e8] sm:$0xf]
    %v744 = vld [vmem:[#allocation9 + $0x4ec] sm:$0xff]
    %v745 = vld [vmem:[#allocation9 + $0x4f4] sm:$0xff]
    %v746 = vld [vmem:[#allocation9 + $0x4fc] sm:$0xff]
    %v747 = vld [vmem:[#allocation9 + $0x504] sm:$0xf]
    %v748 = vld [vmem:[#allocation9 + $0x508] sm:$0xff]
    %v749 = vld [vmem:[#allocation9 + $0x510] sm:$0xff]
    %v750 = vld [vmem:[#allocation9 + $0x518] sm:$0xff]
    %v751 = vld [vmem:[#allocation9 + $0x520] sm:$0xf]
    %v752 = vld [vmem:[#allocation9 + $0x524] sm:$0xff]
    %v753 = vld [vmem:[#allocation9 + $0x52c] sm:$0xff]
    %v754 = vld [vmem:[#allocation9 + $0x534] sm:$0xff]
    %v755 = vld [vmem:[#allocation9 + $0x53c] sm:$0xf]
    %v756 = vld [vmem:[#allocation9 + $0x540] sm:$0xff]
    %v757 = vld [vmem:[#allocation9 + $0x548] sm:$0xff]
    %v758 = vld [vmem:[#allocation9 + $0x550] sm:$0xff]
    %v759 = vld [vmem:[#allocation9 + $0x558] sm:$0xf]
    %v760 = vld [vmem:[#allocation9 + $0x55c] sm:$0xff]
    %v761 = vld [vmem:[#allocation9 + $0x564] sm:$0xff]
    %v762 = vld [vmem:[#allocation9 + $0x56c] sm:$0xff]
    %v763 = vld [vmem:[#allocation9 + $0x574] sm:$0xf]
    %v764 = vld [vmem:[#allocation9 + $0x578] sm:$0xff]
    %v765 = vld [vmem:[#allocation9 + $0x580] sm:$0xff]
    %v766 = vld [vmem:[#allocation9 + $0x588] sm:$0xff]
    %v767 = vld [vmem:[#allocation9 + $0x590] sm:$0xf]
    %v768 = vld [vmem:[#allocation9 + $0x594] sm:$0xff]
    %v769 = vld [vmem:[#allocation9 + $0x59c] sm:$0xff]
    %v770 = vld [vmem:[#allocation9 + $0x5a4] sm:$0xff]
    %v771 = vld [vmem:[#allocation9 + $0x5ac] sm:$0xf]
    %v772 = vld [vmem:[#allocation9 + $0x5b0] sm:$0xff]
    %v773 = vld [vmem:[#allocation9 + $0x5b8] sm:$0xff]
    %v774 = vld [vmem:[#allocation9 + $0x5c0] sm:$0xff]
    %v775 = vld [vmem:[#allocation9 + $0x5c8] sm:$0xf]
    %v776 = vld [vmem:[#allocation9 + $0x5cc] sm:$0xff]
    %v777 = vld [vmem:[#allocation9 + $0x5d4] sm:$0xff]
    %v778 = vld [vmem:[#allocation9 + $0x5dc] sm:$0xff]
    %v779 = vld [vmem:[#allocation9 + $0x5e4] sm:$0xf]
    %v780 = vld [vmem:[#allocation9 + $0x5e8] sm:$0xff]
    %v781 = vld [vmem:[#allocation9 + $0x5f0] sm:$0xff]
    %v782 = vld [vmem:[#allocation9 + $0x5f8] sm:$0xff]
    %v783 = vld [vmem:[#allocation9 + $0x600] sm:$0xf]
    %v784 = vld [vmem:[#allocation9 + $0x604] sm:$0xff]
    %v785 = vld [vmem:[#allocation9 + $0x60c] sm:$0xff]
    %v786 = vld [vmem:[#allocation9 + $0x614] sm:$0xff]
    %v787 = vld [vmem:[#allocation9 + $0x61c] sm:$0xf]
    %v788 = vld [vmem:[#allocation9 + $0x620] sm:$0xff]
    %v789 = vld [vmem:[#allocation9 + $0x628] sm:$0xff]
    %v790 = vld [vmem:[#allocation9 + $0x630] sm:$0xff]
    %v791 = vld [vmem:[#allocation9 + $0x638] sm:$0xf]
    %v792 = vld [vmem:[#allocation9 + $0x63c] sm:$0xff]
    %v793 = vld [vmem:[#allocation9 + $0x644] sm:$0xff]
    %v794 = vld [vmem:[#allocation9 + $0x64c] sm:$0xff]
    %v795 = vld [vmem:[#allocation9 + $0x654] sm:$0xf]
    %v796 = vld [vmem:[#allocation9 + $0x658] sm:$0xff]
    %v797 = vld [vmem:[#allocation9 + $0x660] sm:$0xff]
    %v798 = vld [vmem:[#allocation9 + $0x668] sm:$0xff]
    %v799 = vld [vmem:[#allocation9 + $0x670] sm:$0xf]
    %v800 = vld [vmem:[#allocation9 + $0x674] sm:$0xff]
    %v801 = vld [vmem:[#allocation9 + $0x67c] sm:$0xff]
    %v802 = vld [vmem:[#allocation9 + $0x684] sm:$0xff]
    %v803 = vld [vmem:[#allocation9 + $0x68c] sm:$0xf]
    %v804 = vld [vmem:[#allocation9 + $0x690] sm:$0xff]
    %v805 = vld [vmem:[#allocation9 + $0x698] sm:$0xff]
    %v806 = vld [vmem:[#allocation9 + $0x6a0] sm:$0xff]
    %v807 = vld [vmem:[#allocation9 + $0x6a8] sm:$0xf]
    %v808 = vld [vmem:[#allocation9 + $0x6ac] sm:$0xff]
    %v809 = vld [vmem:[#allocation9 + $0x6b4] sm:$0xff]
    %v810 = vld [vmem:[#allocation9 + $0x6bc] sm:$0xff]
    %v811 = vld [vmem:[#allocation9 + $0x6c4] sm:$0xf]
    %v812 = vld [vmem:[#allocation9 + $0x6c8] sm:$0xff]
    %v813 = vld [vmem:[#allocation9 + $0x6d0] sm:$0xff]
    %v814 = vld [vmem:[#allocation9 + $0x6d8] sm:$0xff]
    %v815 = vld [vmem:[#allocation9 + $0x6e0] sm:$0xf]
    %v816 = vld [vmem:[#allocation9 + $0x6e4] sm:$0xff]
    %v817 = vld [vmem:[#allocation9 + $0x6ec] sm:$0xff]
    %v818 = vld [vmem:[#allocation9 + $0x6f4] sm:$0xff]
    %v819 = vld [vmem:[#allocation9 + $0x6fc] sm:$0xf]
    %v820 = vld [vmem:[#allocation9 + $0x700] sm:$0xff]
    %v821 = vld [vmem:[#allocation9 + $0x708] sm:$0xff]
    %v822 = vld [vmem:[#allocation9 + $0x710] sm:$0xff]
    %v823 = vld [vmem:[#allocation9 + $0x718] sm:$0xf]
    %v824 = vld [vmem:[#allocation9 + $0x71c] sm:$0xff]
    %v825 = vld [vmem:[#allocation9 + $0x724] sm:$0xff]
    %v826 = vld [vmem:[#allocation9 + $0x72c] sm:$0xff]
    %v827 = vld [vmem:[#allocation9 + $0x734] sm:$0xf]
    %v828 = vld [vmem:[#allocation9 + $0x738] sm:$0xff]
    %v829 = vld [vmem:[#allocation9 + $0x740] sm:$0xff]
    %v830 = vld [vmem:[#allocation9 + $0x748] sm:$0xff]
    %v831 = vld [vmem:[#allocation9 + $0x750] sm:$0xf]
    %v832 = vld [vmem:[#allocation9 + $0x754] sm:$0xff]
    %v833 = vld [vmem:[#allocation9 + $0x75c] sm:$0xff]
    %v834 = vld [vmem:[#allocation9 + $0x764] sm:$0xff]
    %v835 = vld [vmem:[#allocation9 + $0x76c] sm:$0xf]
    %v836 = vld [vmem:[#allocation9 + $0x770] sm:$0xff]
    %v837 = vld [vmem:[#allocation9 + $0x778] sm:$0xff]
    %v838 = vld [vmem:[#allocation9 + $0x780] sm:$0xff]
    %v839 = vld [vmem:[#allocation9 + $0x788] sm:$0xf]
    %v840 = vld [vmem:[#allocation9 + $0x78c] sm:$0xff]
    %v841 = vld [vmem:[#allocation9 + $0x794] sm:$0xff]
    %v842 = vld [vmem:[#allocation9 + $0x79c] sm:$0xff]
    %v843 = vld [vmem:[#allocation9 + $0x7a4] sm:$0xf]
    %v844 = vld [vmem:[#allocation9 + $0x7a8] sm:$0xff]
    %v845 = vld [vmem:[#allocation9 + $0x7b0] sm:$0xff]
    %v846 = vld [vmem:[#allocation9 + $0x7b8] sm:$0xff]
    %v847 = vld [vmem:[#allocation9 + $0x7c0] sm:$0xf]
    %v848 = vld [vmem:[#allocation9 + $0x7c4] sm:$0xff]
    %v849 = vld [vmem:[#allocation9 + $0x7cc] sm:$0xff]
    %v850 = vld [vmem:[#allocation9 + $0x7d4] sm:$0xff]
    %v851 = vld [vmem:[#allocation9 + $0x7dc] sm:$0xf]
    %v852 = vld [vmem:[#allocation9 + $0x7e0] sm:$0xff]
    %v853 = vld [vmem:[#allocation9 + $0x7e8] sm:$0xff]
    %v854 = vld [vmem:[#allocation9 + $0x7f0] sm:$0xff]
    %v855 = vld [vmem:[#allocation9 + $0x7f8] sm:$0xf]
    %v856 = vld [vmem:[#allocation9 + $0x7fc] sm:$0xff]
    %v857 = vld [vmem:[#allocation9 + $0x804] sm:$0xff]
    %v858 = vld [vmem:[#allocation9 + $0x80c] sm:$0xff]
    %v859 = vld [vmem:[#allocation9 + $0x814] sm:$0xf]
    %v860 = vld [vmem:[#allocation9 + $0x818] sm:$0xff]
    %v861 = vld [vmem:[#allocation9 + $0x820] sm:$0xff]
    %v862 = vld [vmem:[#allocation9 + $0x828] sm:$0xff]
    %v863 = vld [vmem:[#allocation9 + $0x830] sm:$0xf]
    %v864 = vld [vmem:[#allocation9 + $0x834] sm:$0xff]
    %v865 = vld [vmem:[#allocation9 + $0x83c] sm:$0xff]
    %v866 = vld [vmem:[#allocation9 + $0x844] sm:$0xff]
    %v867 = vld [vmem:[#allocation9 + $0x84c] sm:$0xf]
    %v868 = vld [vmem:[#allocation9 + $0x850] sm:$0xff]
    %v869 = vld [vmem:[#allocation9 + $0x858] sm:$0xff]
    %v870 = vld [vmem:[#allocation9 + $0x860] sm:$0xff]
    %v871 = vld [vmem:[#allocation9 + $0x868] sm:$0xf]
    %v872 = vld [vmem:[#allocation9 + $0x86c] sm:$0xff]
    %v873 = vld [vmem:[#allocation9 + $0x874] sm:$0xff]
    %v874 = vld [vmem:[#allocation9 + $0x87c] sm:$0xff]
    %v875 = vld [vmem:[#allocation9 + $0x884] sm:$0xf]
    %v876 = vld [vmem:[#allocation9 + $0x888] sm:$0xff]
    %v877 = vld [vmem:[#allocation9 + $0x890] sm:$0xff]
    %v878 = vld [vmem:[#allocation9 + $0x898] sm:$0xff]
    %v879 = vld [vmem:[#allocation9 + $0x8a0] sm:$0xf]
    %v880 = vld [vmem:[#allocation9 + $0x8a4] sm:$0xff]
    %v881 = vld [vmem:[#allocation9 + $0x8ac] sm:$0xff]
    %v882 = vld [vmem:[#allocation9 + $0x8b4] sm:$0xff]
    %v883 = vld [vmem:[#allocation9 + $0x8bc] sm:$0xf]
    %v884 = vld [vmem:[#allocation9 + $0x8c0] sm:$0xff]
    %v885 = vld [vmem:[#allocation9 + $0x8c8] sm:$0xff]
    %v886 = vld [vmem:[#allocation9 + $0x8d0] sm:$0xff]
    %v887 = vld [vmem:[#allocation9 + $0x8d8] sm:$0xf]
    %v888 = vld [vmem:[#allocation9 + $0x8dc] sm:$0xff]
    %v889 = vld [vmem:[#allocation9 + $0x8e4] sm:$0xff]
    %v890 = vld [vmem:[#allocation9 + $0x8ec] sm:$0xff]
    %v891 = vld [vmem:[#allocation9 + $0x8f4] sm:$0xf]
    %v892 = vld [vmem:[#allocation9 + $0x8f8] sm:$0xff]
    %v893 = vld [vmem:[#allocation9 + $0x900] sm:$0xff]
    %v894 = vld [vmem:[#allocation9 + $0x908] sm:$0xff]
    %v895 = vld [vmem:[#allocation9 + $0x910] sm:$0xf]
    %v896 = vld [vmem:[#allocation9 + $0x914] sm:$0xff]
    %v897 = vld [vmem:[#allocation9 + $0x91c] sm:$0xff]
    %v898 = vld [vmem:[#allocation9 + $0x924] sm:$0xff]
    %v899 = vld [vmem:[#allocation9 + $0x92c] sm:$0xf]
    %v900 = vld [vmem:[#allocation9 + $0x930] sm:$0xff]
    %v901 = vld [vmem:[#allocation9 + $0x938] sm:$0xff]
    %v902 = vld [vmem:[#allocation9 + $0x940] sm:$0xff]
    %v903 = vld [vmem:[#allocation9 + $0x948] sm:$0xf]
    %v904 = vld [vmem:[#allocation9 + $0x94c] sm:$0xff]
    %v905 = vld [vmem:[#allocation9 + $0x954] sm:$0xff]
    %v906 = vld [vmem:[#allocation9 + $0x95c] sm:$0xff]
    %v907 = vld [vmem:[#allocation9 + $0x964] sm:$0xf]
    %v908 = vld [vmem:[#allocation9 + $0x968] sm:$0xff]
    %v909 = vld [vmem:[#allocation9 + $0x970] sm:$0xff]
    %v910 = vld [vmem:[#allocation9 + $0x978] sm:$0xff]
    %v911 = vld [vmem:[#allocation9 + $0x980] sm:$0xf]
    %v912 = vld [vmem:[#allocation9 + $0x984] sm:$0xff]
    %v913 = vld [vmem:[#allocation9 + $0x98c] sm:$0xff]
    %v914 = vld [vmem:[#allocation9 + $0x994] sm:$0xff]
    %v915 = vld [vmem:[#allocation9 + $0x99c] sm:$0xf]
    %v916 = vld [vmem:[#allocation9 + $0x9a0] sm:$0xff]
    %v917 = vld [vmem:[#allocation9 + $0x9a8] sm:$0xff]
    %v918 = vld [vmem:[#allocation9 + $0x9b0] sm:$0xff]
    %v919 = vld [vmem:[#allocation9 + $0x9b8] sm:$0xf]
    %v920 = vld [vmem:[#allocation9 + $0x9bc] sm:$0xff]
    %v921 = vld [vmem:[#allocation9 + $0x9c4] sm:$0xff]
    %v922 = vld [vmem:[#allocation9 + $0x9cc] sm:$0xff]
    %v923 = vld [vmem:[#allocation9 + $0x9d4] sm:$0xf]
    %v924 = vld [vmem:[#allocation9 + $0x9d8] sm:$0xff]
    %v925 = vld [vmem:[#allocation9 + $0x9e0] sm:$0xff]
    %v926 = vld [vmem:[#allocation9 + $0x9e8] sm:$0xff]
    %v927 = vld [vmem:[#allocation9 + $0x9f0] sm:$0xf]
    %v928 = vld [vmem:[#allocation9 + $0x9f4] sm:$0xff]
    %v929 = vld [vmem:[#allocation9 + $0x9fc] sm:$0xff]
    %v930 = vld [vmem:[#allocation9 + $0xa04] sm:$0xff]
    %v931 = vld [vmem:[#allocation9 + $0xa0c] sm:$0xf]
    %v932 = vld [vmem:[#allocation9 + $0xa10] sm:$0xff]
    %v933 = vld [vmem:[#allocation9 + $0xa18] sm:$0xff]
    %v934 = vld [vmem:[#allocation9 + $0xa20] sm:$0xff]
    %v935 = vld [vmem:[#allocation9 + $0xa28] sm:$0xf]
    %v936 = vld [vmem:[#allocation9 + $0xa2c] sm:$0xff]
    %v937 = vld [vmem:[#allocation9 + $0xa34] sm:$0xff]
    %v938 = vld [vmem:[#allocation9 + $0xa3c] sm:$0xff]
    %v939 = vld [vmem:[#allocation9 + $0xa44] sm:$0xf]
    %v940 = vld [vmem:[#allocation9 + $0xa48] sm:$0xff]
    %v941 = vld [vmem:[#allocation9 + $0xa50] sm:$0xff]
    %v942 = vld [vmem:[#allocation9 + $0xa58] sm:$0xff]
    %v943 = vld [vmem:[#allocation9 + $0xa60] sm:$0xf]
    %v944 = vld [vmem:[#allocation9 + $0xa64] sm:$0xff]
    %v945 = vld [vmem:[#allocation9 + $0xa6c] sm:$0xff]
    %v946 = vld [vmem:[#allocation9 + $0xa74] sm:$0xff]
    %v947 = vld [vmem:[#allocation9 + $0xa7c] sm:$0xf]
    %v948 = vld [vmem:[#allocation9 + $0xa80] sm:$0xff]
    %v949 = vld [vmem:[#allocation9 + $0xa88] sm:$0xff]
    %v950 = vld [vmem:[#allocation9 + $0xa90] sm:$0xff]
    %v951 = vld [vmem:[#allocation9 + $0xa98] sm:$0xf]
    %v952 = vld [vmem:[#allocation9 + $0xa9c] sm:$0xff]
    %v953 = vld [vmem:[#allocation9 + $0xaa4] sm:$0xff]
    %v954 = vld [vmem:[#allocation9 + $0xaac] sm:$0xff]
    %v955 = vld [vmem:[#allocation9 + $0xab4] sm:$0xf]
    %v956 = vld [vmem:[#allocation9 + $0xab8] sm:$0xff]
    %v957 = vld [vmem:[#allocation9 + $0xac0] sm:$0xff]
    %v958 = vld [vmem:[#allocation9 + $0xac8] sm:$0xff]
    %v959 = vld [vmem:[#allocation9 + $0xad0] sm:$0xf]
    %v960 = vld [vmem:[#allocation9 + $0xad4] sm:$0xff]
    %v961 = vld [vmem:[#allocation9 + $0xadc] sm:$0xff]
    %v962 = vld [vmem:[#allocation9 + $0xae4] sm:$0xff]
    %v963 = vld [vmem:[#allocation9 + $0xaec] sm:$0xf]
    %v964 = vld [vmem:[#allocation9 + $0xaf0] sm:$0xff]
    %v965 = vld [vmem:[#allocation9 + $0xaf8] sm:$0xff]
    %v966 = vld [vmem:[#allocation9 + $0xb00] sm:$0xff]
    %v967 = vld [vmem:[#allocation9 + $0xb08] sm:$0xf]
    %v968 = vld [vmem:[#allocation9 + $0xb0c] sm:$0xff]
    %v969 = vld [vmem:[#allocation9 + $0xb14] sm:$0xff]
    %v970 = vld [vmem:[#allocation9 + $0xb1c] sm:$0xff]
    %v971 = vld [vmem:[#allocation9 + $0xb24] sm:$0xf]
    %v972 = vld [vmem:[#allocation9 + $0xb28] sm:$0xff]
    %v973 = vld [vmem:[#allocation9 + $0xb30] sm:$0xff]
    %v974 = vld [vmem:[#allocation9 + $0xb38] sm:$0xff]
    %v975 = vld [vmem:[#allocation9 + $0xb40] sm:$0xf]
    %v976 = vld [vmem:[#allocation9 + $0xb44] sm:$0xff]
    %v977 = vld [vmem:[#allocation9 + $0xb4c] sm:$0xff]
    %v978 = vld [vmem:[#allocation9 + $0xb54] sm:$0xff]
    %v979 = vld [vmem:[#allocation9 + $0xb5c] sm:$0xf]
    %v980 = vld [vmem:[#allocation9 + $0xb60] sm:$0xff]
    %v981 = vld [vmem:[#allocation9 + $0xb68] sm:$0xff]
    %v982 = vld [vmem:[#allocation9 + $0xb70] sm:$0xff]
    %v983 = vld [vmem:[#allocation9 + $0xb78] sm:$0xf]
    %v984 = vld [vmem:[#allocation9 + $0xb7c] sm:$0xff]
    %v985 = vld [vmem:[#allocation9 + $0xb84] sm:$0xff]
    %v986 = vld [vmem:[#allocation9 + $0xb8c] sm:$0xff]
    %v987 = vld [vmem:[#allocation9 + $0xb94] sm:$0xf]
    %v988 = vld [vmem:[#allocation9 + $0xb98] sm:$0xff]
    %v989 = vld [vmem:[#allocation9 + $0xba0] sm:$0xff]
    %v990 = vld [vmem:[#allocation9 + $0xba8] sm:$0xff]
    %v991 = vld [vmem:[#allocation9 + $0xbb0] sm:$0xf]
    %v992 = vld [vmem:[#allocation9 + $0xbb4] sm:$0xff]
    %v993 = vld [vmem:[#allocation9 + $0xbbc] sm:$0xff]
    %v994 = vld [vmem:[#allocation9 + $0xbc4] sm:$0xff]
    %v995 = vld [vmem:[#allocation9 + $0xbcc] sm:$0xf]
    %v996 = vld [vmem:[#allocation9 + $0xbd0] sm:$0xff]
    %v997 = vld [vmem:[#allocation9 + $0xbd8] sm:$0xff]
    %v998 = vld [vmem:[#allocation9 + $0xbe0] sm:$0xff]
    %v999 = vld [vmem:[#allocation9 + $0xbe8] sm:$0xf]
    %v1000 = vld [vmem:[#allocation9 + $0xbec] sm:$0xff]
    %v1001 = vld [vmem:[#allocation9 + $0xbf4] sm:$0xff]
    %v1002 = vld [vmem:[#allocation9 + $0xbfc] sm:$0xff]
    %v1003 = vld [vmem:[#allocation9 + $0xc04] sm:$0xf]
    %v1004 = vld [vmem:[#allocation9 + $0xc08] sm:$0xff]
    %v1005 = vld [vmem:[#allocation9 + $0xc10] sm:$0xff]
    %v1006 = vld [vmem:[#allocation9 + $0xc18] sm:$0xff]
    %v1007 = vld [vmem:[#allocation9 + $0xc20] sm:$0xf]
    %v1008 = vld [vmem:[#allocation9 + $0xc24] sm:$0xff]
    %v1009 = vld [vmem:[#allocation9 + $0xc2c] sm:$0xff]
    %v1010 = vld [vmem:[#allocation9 + $0xc34] sm:$0xff]
    %v1011 = vld [vmem:[#allocation9 + $0xc3c] sm:$0xf]
    %v1012 = vld [vmem:[#allocation9 + $0xc40] sm:$0xff]
    %v1013 = vld [vmem:[#allocation9 + $0xc48] sm:$0xff]
    %v1014 = vld [vmem:[#allocation9 + $0xc50] sm:$0xff]
    %v1015 = vld [vmem:[#allocation9 + $0xc58] sm:$0xf]
    %v1016 = vld [vmem:[#allocation9 + $0xc5c] sm:$0xff]
    %v1017 = vld [vmem:[#allocation9 + $0xc64] sm:$0xff]
    %v1018 = vld [vmem:[#allocation9 + $0xc6c] sm:$0xff]
    %v1019 = vld [vmem:[#allocation9 + $0xc74] sm:$0xf]
    %v1020 = vld [vmem:[#allocation9 + $0xc78] sm:$0xff]
    %v1021 = vld [vmem:[#allocation9 + $0xc80] sm:$0xff]
    %v1022 = vld [vmem:[#allocation9 + $0xc88] sm:$0xff]
    %v1023 = vld [vmem:[#allocation9 + $0xc90] sm:$0xf]
    %v1024 = vld [vmem:[#allocation9 + $0xc94] sm:$0xff]
    %v1025 = vld [vmem:[#allocation9 + $0xc9c] sm:$0xff]
    %v1026 = vld [vmem:[#allocation9 + $0xca4] sm:$0xff]
    %v1027 = vld [vmem:[#allocation9 + $0xcac] sm:$0xf]
    %v1028 = vld [vmem:[#allocation9 + $0xcb0] sm:$0xff]
    %v1029 = vld [vmem:[#allocation9 + $0xcb8] sm:$0xff]
    %v1030 = vld [vmem:[#allocation9 + $0xcc0] sm:$0xff]
    %v1031 = vld [vmem:[#allocation9 + $0xcc8] sm:$0xf]
    %v1032 = vld [vmem:[#allocation9 + $0xccc] sm:$0xff]
    %v1033 = vld [vmem:[#allocation9 + $0xcd4] sm:$0xff]
    %v1034 = vld [vmem:[#allocation9 + $0xcdc] sm:$0xff]
    %v1035 = vld [vmem:[#allocation9 + $0xce4] sm:$0xf]
    %v1036 = vld [vmem:[#allocation9 + $0xce8] sm:$0xff]
    %v1037 = vld [vmem:[#allocation9 + $0xcf0] sm:$0xff]
    %v1038 = vld [vmem:[#allocation9 + $0xcf8] sm:$0xff]
    %v1039 = vld [vmem:[#allocation9 + $0xd00] sm:$0xf]
    %v1040 = vld [vmem:[#allocation9 + $0xd04] sm:$0xff]
    %v1041 = vld [vmem:[#allocation9 + $0xd0c] sm:$0xff]
    %v1042 = vld [vmem:[#allocation9 + $0xd14] sm:$0xff]
    %v1043 = vld [vmem:[#allocation9 + $0xd1c] sm:$0xf]
    %v1044 = vld [vmem:[#allocation9 + $0xd20] sm:$0xff]
    %v1045 = vld [vmem:[#allocation9 + $0xd28] sm:$0xff]
    %v1046 = vld [vmem:[#allocation9 + $0xd30] sm:$0xff]
    %v1047 = vld [vmem:[#allocation9 + $0xd38] sm:$0xf]
    %v1048 = vld [vmem:[#allocation9 + $0xd3c] sm:$0xff]
    %v1049 = vld [vmem:[#allocation9 + $0xd44] sm:$0xff]
    %v1050 = vld [vmem:[#allocation9 + $0xd4c] sm:$0xff]
    %v1051 = vld [vmem:[#allocation9 + $0xd54] sm:$0xf]
    %v1052 = vld [vmem:[#allocation9 + $0xd58] sm:$0xff]
    %v1053 = vld [vmem:[#allocation9 + $0xd60] sm:$0xff]
    %v1054 = vld [vmem:[#allocation9 + $0xd68] sm:$0xff]
    %v1055 = vld [vmem:[#allocation9 + $0xd70] sm:$0xf]
    %v1056 = vld [vmem:[#allocation9 + $0xd74] sm:$0xff]
    %v1057 = vld [vmem:[#allocation9 + $0xd7c] sm:$0xff]
    %v1058 = vld [vmem:[#allocation9 + $0xd84] sm:$0xff]
    %v1059 = vld [vmem:[#allocation9 + $0xd8c] sm:$0xf]
    %v1060 = vld [vmem:[#allocation9 + $0xd90] sm:$0xff]
    %v1061 = vld [vmem:[#allocation9 + $0xd98] sm:$0xff]
    %v1062 = vld [vmem:[#allocation9 + $0xda0] sm:$0xff]
    %v1063 = vld [vmem:[#allocation9 + $0xda8] sm:$0xf]
    %v1064 = vld [vmem:[#allocation9 + $0xdac] sm:$0xff]
    %v1065 = vld [vmem:[#allocation9 + $0xdb4] sm:$0xff]
    %v1066 = vld [vmem:[#allocation9 + $0xdbc] sm:$0xff]
    %v1067 = vld [vmem:[#allocation9 + $0xdc4] sm:$0xf]
    %v1068 = vld [vmem:[#allocation9 + $0xdc8] sm:$0xff]
    %v1069 = vld [vmem:[#allocation9 + $0xdd0] sm:$0xff]
    %v1070 = vld [vmem:[#allocation9 + $0xdd8] sm:$0xff]
    %v1071 = vld [vmem:[#allocation9 + $0xde0] sm:$0xf]
    %v1072 = vld [vmem:[#allocation9 + $0xde4] sm:$0xff]
    %v1073 = vld [vmem:[#allocation9 + $0xdec] sm:$0xff]
    %v1074 = vld [vmem:[#allocation9 + $0xdf4] sm:$0xff]
    %v1075 = vld [vmem:[#allocation9 + $0xdfc] sm:$0xf]
    %v1076 = vld [vmem:[#allocation10] sm:$0xff]
    %v1078 = vlaneseq
    %v1079 = vshrl.u32 %v1078, 7
    %v1080 = vsub.s32 0, %v1079
    %v1081 = vrot.slane %v1076, %v1080
    %v1082 = vlaneseq
    %v1083 = vshrl.u32 %v1082, 7
    %v1084 = vsub.s32 1, %v1083
    %v1085 = vrot.slane %v1076, %v1084
    %v1086 = vlaneseq
    %v1087 = vshrl.u32 %v1086, 7
    %v1088 = vsub.s32 2, %v1087
    %v1089 = vrot.slane %v1076, %v1088
    %v1090 = vlaneseq
    %v1091 = vshrl.u32 %v1090, 7
    %v1092 = vsub.s32 3, %v1091
    %v1093 = vrot.slane %v1076, %v1092
    %v1094 = vlaneseq
    %v1095 = vshrl.u32 %v1094, 7
    %v1096 = vsub.s32 4, %v1095
    %v1097 = vrot.slane %v1076, %v1096
    %v1098 = vlaneseq
    %v1099 = vshrl.u32 %v1098, 7
    %v1100 = vsub.s32 5, %v1099
    %v1101 = vrot.slane %v1076, %v1100
    %v1102 = vlaneseq
    %v1103 = vshrl.u32 %v1102, 7
    %v1104 = vsub.s32 6, %v1103
    %v1105 = vrot.slane %v1076, %v1104
    %v1625 = vunpack.c.l.b16 %v564
    %v1626 = vunpack.c.h.b16 %v564
    %v1627 = vunpack.c.l.b16 %v565
    %v1628 = vunpack.c.h.b16 %v565
    %v1629 = vunpack.c.l.b16 %v566
    %v1630 = vunpack.c.h.b16 %v566
    %v1631 = vunpack.c.l.b16 %v567
    %v1632 = vunpack.c.l.b16 %v568
    %v1633 = vunpack.c.h.b16 %v568
    %v1634 = vunpack.c.l.b16 %v569
    %v1635 = vunpack.c.h.b16 %v569
    %v1636 = vunpack.c.l.b16 %v570
    %v1637 = vunpack.c.h.b16 %v570
    %v1638 = vunpack.c.l.b16 %v571
    %v1639 = vunpack.c.l.b16 %v572
    %v1640 = vunpack.c.h.b16 %v572
    %v1641 = vunpack.c.l.b16 %v573
    %v1642 = vunpack.c.h.b16 %v573
    %v1643 = vunpack.c.l.b16 %v574
    %v1644 = vunpack.c.h.b16 %v574
    %v1645 = vunpack.c.l.b16 %v575
    %v1646 = vunpack.c.l.b16 %v576
    %v1647 = vunpack.c.h.b16 %v576
    %v1648 = vunpack.c.l.b16 %v577
    %v1649 = vunpack.c.h.b16 %v577
    %v1650 = vunpack.c.l.b16 %v578
    %v1651 = vunpack.c.h.b16 %v578
    %v1652 = vunpack.c.l.b16 %v579
    %v1653 = vunpack.c.l.b16 %v580
    %v1654 = vunpack.c.h.b16 %v580
    %v1655 = vunpack.c.l.b16 %v581
    %v1656 = vunpack.c.h.b16 %v581
    %v1657 = vunpack.c.l.b16 %v582
    %v1658 = vunpack.c.h.b16 %v582
    %v1659 = vunpack.c.l.b16 %v583
    %v1660 = vunpack.c.l.b16 %v584
    %v1661 = vunpack.c.h.b16 %v584
    %v1662 = vunpack.c.l.b16 %v585
    %v1663 = vunpack.c.h.b16 %v585
    %v1664 = vunpack.c.l.b16 %v586
    %v1665 = vunpack.c.h.b16 %v586
    %v1666 = vunpack.c.l.b16 %v587
    %v1667 = vunpack.c.l.b16 %v588
    %v1668 = vunpack.c.h.b16 %v588
    %v1669 = vunpack.c.l.b16 %v589
    %v1670 = vunpack.c.h.b16 %v589
    %v1671 = vunpack.c.l.b16 %v590
    %v1672 = vunpack.c.h.b16 %v590
    %v1673 = vunpack.c.l.b16 %v591
    %v1674 = vunpack.c.l.b16 %v592
    %v1675 = vunpack.c.h.b16 %v592
    %v1676 = vunpack.c.l.b16 %v593
    %v1677 = vunpack.c.h.b16 %v593
    %v1678 = vunpack.c.l.b16 %v594
    %v1679 = vunpack.c.h.b16 %v594
    %v1680 = vunpack.c.l.b16 %v595
    %v1681 = vunpack.c.l.b16 %v596
    %v1682 = vunpack.c.h.b16 %v596
    %v1683 = vunpack.c.l.b16 %v597
    %v1684 = vunpack.c.h.b16 %v597
    %v1685 = vunpack.c.l.b16 %v598
    %v1686 = vunpack.c.h.b16 %v598
    %v1687 = vunpack.c.l.b16 %v599
    %v1688 = vunpack.c.l.b16 %v600
    %v1689 = vunpack.c.h.b16 %v600
    %v1690 = vunpack.c.l.b16 %v601
    %v1691 = vunpack.c.h.b16 %v601
    %v1692 = vunpack.c.l.b16 %v602
    %v1693 = vunpack.c.h.b16 %v602
    %v1694 = vunpack.c.l.b16 %v603
    %v1695 = vunpack.c.l.b16 %v604
    %v1696 = vunpack.c.h.b16 %v604
    %v1697 = vunpack.c.l.b16 %v605
    %v1698 = vunpack.c.h.b16 %v605
    %v1699 = vunpack.c.l.b16 %v606
    %v1700 = vunpack.c.h.b16 %v606
    %v1701 = vunpack.c.l.b16 %v607
    %v1702 = vunpack.c.l.b16 %v608
    %v1703 = vunpack.c.h.b16 %v608
    %v1704 = vunpack.c.l.b16 %v609
    %v1705 = vunpack.c.h.b16 %v609
    %v1706 = vunpack.c.l.b16 %v610
    %v1707 = vunpack.c.h.b16 %v610
    %v1708 = vunpack.c.l.b16 %v611
    %v1709 = vunpack.c.l.b16 %v612
    %v1710 = vunpack.c.h.b16 %v612
    %v1711 = vunpack.c.l.b16 %v613
    %v1712 = vunpack.c.h.b16 %v613
    %v1713 = vunpack.c.l.b16 %v614
    %v1714 = vunpack.c.h.b16 %v614
    %v1715 = vunpack.c.l.b16 %v615
    %v1716 = vunpack.c.l.b16 %v616
    %v1717 = vunpack.c.h.b16 %v616
    %v1718 = vunpack.c.l.b16 %v617
    %v1719 = vunpack.c.h.b16 %v617
    %v1720 = vunpack.c.l.b16 %v618
    %v1721 = vunpack.c.h.b16 %v618
    %v1722 = vunpack.c.l.b16 %v619
    %v1723 = vunpack.c.l.b16 %v620
    %v1724 = vunpack.c.h.b16 %v620
    %v1725 = vunpack.c.l.b16 %v621
    %v1726 = vunpack.c.h.b16 %v621
    %v1727 = vunpack.c.l.b16 %v622
    %v1728 = vunpack.c.h.b16 %v622
    %v1729 = vunpack.c.l.b16 %v623
    %v1730 = vunpack.c.l.b16 %v624
    %v1731 = vunpack.c.h.b16 %v624
    %v1732 = vunpack.c.l.b16 %v625
    %v1733 = vunpack.c.h.b16 %v625
    %v1734 = vunpack.c.l.b16 %v626
    %v1735 = vunpack.c.h.b16 %v626
    %v1736 = vunpack.c.l.b16 %v627
    %v1737 = vunpack.c.l.b16 %v628
    %v1738 = vunpack.c.h.b16 %v628
    %v1739 = vunpack.c.l.b16 %v629
    %v1740 = vunpack.c.h.b16 %v629
    %v1741 = vunpack.c.l.b16 %v630
    %v1742 = vunpack.c.h.b16 %v630
    %v1743 = vunpack.c.l.b16 %v631
    %v1744 = vunpack.c.l.b16 %v632
    %v1745 = vunpack.c.h.b16 %v632
    %v1746 = vunpack.c.l.b16 %v633
    %v1747 = vunpack.c.h.b16 %v633
    %v1748 = vunpack.c.l.b16 %v634
    %v1749 = vunpack.c.h.b16 %v634
    %v1750 = vunpack.c.l.b16 %v635
    %v1751 = vunpack.c.l.b16 %v636
    %v1752 = vunpack.c.h.b16 %v636
    %v1753 = vunpack.c.l.b16 %v637
    %v1754 = vunpack.c.h.b16 %v637
    %v1755 = vunpack.c.l.b16 %v638
    %v1756 = vunpack.c.h.b16 %v638
    %v1757 = vunpack.c.l.b16 %v639
    %v1758 = vunpack.c.l.b16 %v640
    %v1759 = vunpack.c.h.b16 %v640
    %v1760 = vunpack.c.l.b16 %v641
    %v1761 = vunpack.c.h.b16 %v641
    %v1762 = vunpack.c.l.b16 %v642
    %v1763 = vunpack.c.h.b16 %v642
    %v1764 = vunpack.c.l.b16 %v643
    %v1765 = vunpack.c.l.b16 %v644
    %v1766 = vunpack.c.h.b16 %v644
    %v1767 = vunpack.c.l.b16 %v645
    %v1768 = vunpack.c.h.b16 %v645
    %v1769 = vunpack.c.l.b16 %v646
    %v1770 = vunpack.c.h.b16 %v646
    %v1771 = vunpack.c.l.b16 %v647
    %v1772 = vunpack.c.l.b16 %v648
    %v1773 = vunpack.c.h.b16 %v648
    %v1774 = vunpack.c.l.b16 %v649
    %v1775 = vunpack.c.h.b16 %v649
    %v1776 = vunpack.c.l.b16 %v650
    %v1777 = vunpack.c.h.b16 %v650
    %v1778 = vunpack.c.l.b16 %v651
    %v1779 = vunpack.c.l.b16 %v652
    %v1780 = vunpack.c.h.b16 %v652
    %v1781 = vunpack.c.l.b16 %v653
    %v1782 = vunpack.c.h.b16 %v653
    %v1783 = vunpack.c.l.b16 %v654
    %v1784 = vunpack.c.h.b16 %v654
    %v1785 = vunpack.c.l.b16 %v655
    %v1786 = vunpack.c.l.b16 %v656
    %v1787 = vunpack.c.h.b16 %v656
    %v1788 = vunpack.c.l.b16 %v657
    %v1789 = vunpack.c.h.b16 %v657
    %v1790 = vunpack.c.l.b16 %v658
    %v1791 = vunpack.c.h.b16 %v658
    %v1792 = vunpack.c.l.b16 %v659
    %v1793 = vunpack.c.l.b16 %v660
    %v1794 = vunpack.c.h.b16 %v660
    %v1795 = vunpack.c.l.b16 %v661
    %v1796 = vunpack.c.h.b16 %v661
    %v1797 = vunpack.c.l.b16 %v662
    %v1798 = vunpack.c.h.b16 %v662
    %v1799 = vunpack.c.l.b16 %v663
    %v1800 = vunpack.c.l.b16 %v664
    %v1801 = vunpack.c.h.b16 %v664
    %v1802 = vunpack.c.l.b16 %v665
    %v1803 = vunpack.c.h.b16 %v665
    %v1804 = vunpack.c.l.b16 %v666
    %v1805 = vunpack.c.h.b16 %v666
    %v1806 = vunpack.c.l.b16 %v667
    %v1807 = vunpack.c.l.b16 %v668
    %v1808 = vunpack.c.h.b16 %v668
    %v1809 = vunpack.c.l.b16 %v669
    %v1810 = vunpack.c.h.b16 %v669
    %v1811 = vunpack.c.l.b16 %v670
    %v1812 = vunpack.c.h.b16 %v670
    %v1813 = vunpack.c.l.b16 %v671
    %v1814 = vunpack.c.l.b16 %v672
    %v1815 = vunpack.c.h.b16 %v672
    %v1816 = vunpack.c.l.b16 %v673
    %v1817 = vunpack.c.h.b16 %v673
    %v1818 = vunpack.c.l.b16 %v674
    %v1819 = vunpack.c.h.b16 %v674
    %v1820 = vunpack.c.l.b16 %v675
    %v1821 = vunpack.c.l.b16 %v676
    %v1822 = vunpack.c.h.b16 %v676
    %v1823 = vunpack.c.l.b16 %v677
    %v1824 = vunpack.c.h.b16 %v677
    %v1825 = vunpack.c.l.b16 %v678
    %v1826 = vunpack.c.h.b16 %v678
    %v1827 = vunpack.c.l.b16 %v679
    %v1828 = vunpack.c.l.b16 %v680
    %v1829 = vunpack.c.h.b16 %v680
    %v1830 = vunpack.c.l.b16 %v681
    %v1831 = vunpack.c.h.b16 %v681
    %v1832 = vunpack.c.l.b16 %v682
    %v1833 = vunpack.c.h.b16 %v682
    %v1834 = vunpack.c.l.b16 %v683
    %v1835 = vunpack.c.l.b16 %v684
    %v1836 = vunpack.c.h.b16 %v684
    %v1837 = vunpack.c.l.b16 %v685
    %v1838 = vunpack.c.h.b16 %v685
    %v1839 = vunpack.c.l.b16 %v686
    %v1840 = vunpack.c.h.b16 %v686
    %v1841 = vunpack.c.l.b16 %v687
    %v1842 = vunpack.c.l.b16 %v688
    %v1843 = vunpack.c.h.b16 %v688
    %v1844 = vunpack.c.l.b16 %v689
    %v1845 = vunpack.c.h.b16 %v689
    %v1846 = vunpack.c.l.b16 %v690
    %v1847 = vunpack.c.h.b16 %v690
    %v1848 = vunpack.c.l.b16 %v691
    %v1849 = vunpack.c.l.b16 %v692
    %v1850 = vunpack.c.h.b16 %v692
    %v1851 = vunpack.c.l.b16 %v693
    %v1852 = vunpack.c.h.b16 %v693
    %v1853 = vunpack.c.l.b16 %v694
    %v1854 = vunpack.c.h.b16 %v694
    %v1855 = vunpack.c.l.b16 %v695
    %v1856 = vunpack.c.l.b16 %v696
    %v1857 = vunpack.c.h.b16 %v696
    %v1858 = vunpack.c.l.b16 %v697
    %v1859 = vunpack.c.h.b16 %v697
    %v1860 = vunpack.c.l.b16 %v698
    %v1861 = vunpack.c.h.b16 %v698
    %v1862 = vunpack.c.l.b16 %v699
    %v1863 = vunpack.c.l.b16 %v700
    %v1864 = vunpack.c.h.b16 %v700
    %v1865 = vunpack.c.l.b16 %v701
    %v1866 = vunpack.c.h.b16 %v701
    %v1867 = vunpack.c.l.b16 %v702
    %v1868 = vunpack.c.h.b16 %v702
    %v1869 = vunpack.c.l.b16 %v703
    %v1870 = vunpack.c.l.b16 %v704
    %v1871 = vunpack.c.h.b16 %v704
    %v1872 = vunpack.c.l.b16 %v705
    %v1873 = vunpack.c.h.b16 %v705
    %v1874 = vunpack.c.l.b16 %v706
    %v1875 = vunpack.c.h.b16 %v706
    %v1876 = vunpack.c.l.b16 %v707
    %v1877 = vunpack.c.l.b16 %v708
    %v1878 = vunpack.c.h.b16 %v708
    %v1879 = vunpack.c.l.b16 %v709
    %v1880 = vunpack.c.h.b16 %v709
    %v1881 = vunpack.c.l.b16 %v710
    %v1882 = vunpack.c.h.b16 %v710
    %v1883 = vunpack.c.l.b16 %v711
    %v1884 = vunpack.c.l.b16 %v712
    %v1885 = vunpack.c.h.b16 %v712
    %v1886 = vunpack.c.l.b16 %v713
    %v1887 = vunpack.c.h.b16 %v713
    %v1888 = vunpack.c.l.b16 %v714
    %v1889 = vunpack.c.h.b16 %v714
    %v1890 = vunpack.c.l.b16 %v715
    %v1891 = vunpack.c.l.b16 %v716
    %v1892 = vunpack.c.h.b16 %v716
    %v1893 = vunpack.c.l.b16 %v717
    %v1894 = vunpack.c.h.b16 %v717
    %v1895 = vunpack.c.l.b16 %v718
    %v1896 = vunpack.c.h.b16 %v718
    %v1897 = vunpack.c.l.b16 %v719
    %v1898 = vunpack.c.l.b16 %v720
    %v1899 = vunpack.c.h.b16 %v720
    %v1900 = vunpack.c.l.b16 %v721
    %v1901 = vunpack.c.h.b16 %v721
    %v1902 = vunpack.c.l.b16 %v722
    %v1903 = vunpack.c.h.b16 %v722
    %v1904 = vunpack.c.l.b16 %v723
    %v1905 = vunpack.c.l.b16 %v724
    %v1906 = vunpack.c.h.b16 %v724
    %v1907 = vunpack.c.l.b16 %v725
    %v1908 = vunpack.c.h.b16 %v725
    %v1909 = vunpack.c.l.b16 %v726
    %v1910 = vunpack.c.h.b16 %v726
    %v1911 = vunpack.c.l.b16 %v727
    %v1912 = vunpack.c.l.b16 %v728
    %v1913 = vunpack.c.h.b16 %v728
    %v1914 = vunpack.c.l.b16 %v729
    %v1915 = vunpack.c.h.b16 %v729
    %v1916 = vunpack.c.l.b16 %v730
    %v1917 = vunpack.c.h.b16 %v730
    %v1918 = vunpack.c.l.b16 %v731
    %v1919 = vunpack.c.l.b16 %v732
    %v1920 = vunpack.c.h.b16 %v732
    %v1921 = vunpack.c.l.b16 %v733
    %v1922 = vunpack.c.h.b16 %v733
    %v1923 = vunpack.c.l.b16 %v734
    %v1924 = vunpack.c.h.b16 %v734
    %v1925 = vunpack.c.l.b16 %v735
    %v1926 = vunpack.c.l.b16 %v736
    %v1927 = vunpack.c.h.b16 %v736
    %v1928 = vunpack.c.l.b16 %v737
    %v1929 = vunpack.c.h.b16 %v737
    %v1930 = vunpack.c.l.b16 %v738
    %v1931 = vunpack.c.h.b16 %v738
    %v1932 = vunpack.c.l.b16 %v739
    %v1933 = vunpack.c.l.b16 %v740
    %v1934 = vunpack.c.h.b16 %v740
    %v1935 = vunpack.c.l.b16 %v741
    %v1936 = vunpack.c.h.b16 %v741
    %v1937 = vunpack.c.l.b16 %v742
    %v1938 = vunpack.c.h.b16 %v742
    %v1939 = vunpack.c.l.b16 %v743
    %v1940 = vunpack.c.l.b16 %v744
    %v1941 = vunpack.c.h.b16 %v744
    %v1942 = vunpack.c.l.b16 %v745
    %v1943 = vunpack.c.h.b16 %v745
    %v1944 = vunpack.c.l.b16 %v746
    %v1945 = vunpack.c.h.b16 %v746
    %v1946 = vunpack.c.l.b16 %v747
    %v1947 = vunpack.c.l.b16 %v748
    %v1948 = vunpack.c.h.b16 %v748
    %v1949 = vunpack.c.l.b16 %v749
    %v1950 = vunpack.c.h.b16 %v749
    %v1951 = vunpack.c.l.b16 %v750
    %v1952 = vunpack.c.h.b16 %v750
    %v1953 = vunpack.c.l.b16 %v751
    %v1954 = vunpack.c.l.b16 %v752
    %v1955 = vunpack.c.h.b16 %v752
    %v1956 = vunpack.c.l.b16 %v753
    %v1957 = vunpack.c.h.b16 %v753
    %v1958 = vunpack.c.l.b16 %v754
    %v1959 = vunpack.c.h.b16 %v754
    %v1960 = vunpack.c.l.b16 %v755
    %v1961 = vunpack.c.l.b16 %v756
    %v1962 = vunpack.c.h.b16 %v756
    %v1963 = vunpack.c.l.b16 %v757
    %v1964 = vunpack.c.h.b16 %v757
    %v1965 = vunpack.c.l.b16 %v758
    %v1966 = vunpack.c.h.b16 %v758
    %v1967 = vunpack.c.l.b16 %v759
    %v1968 = vunpack.c.l.b16 %v760
    %v1969 = vunpack.c.h.b16 %v760
    %v1970 = vunpack.c.l.b16 %v761
    %v1971 = vunpack.c.h.b16 %v761
    %v1972 = vunpack.c.l.b16 %v762
    %v1973 = vunpack.c.h.b16 %v762
    %v1974 = vunpack.c.l.b16 %v763
    %v1975 = vunpack.c.l.b16 %v764
    %v1976 = vunpack.c.h.b16 %v764
    %v1977 = vunpack.c.l.b16 %v765
    %v1978 = vunpack.c.h.b16 %v765
    %v1979 = vunpack.c.l.b16 %v766
    %v1980 = vunpack.c.h.b16 %v766
    %v1981 = vunpack.c.l.b16 %v767
    %v1982 = vunpack.c.l.b16 %v768
    %v1983 = vunpack.c.h.b16 %v768
    %v1984 = vunpack.c.l.b16 %v769
    %v1985 = vunpack.c.h.b16 %v769
    %v1986 = vunpack.c.l.b16 %v770
    %v1987 = vunpack.c.h.b16 %v770
    %v1988 = vunpack.c.l.b16 %v771
    %v1989 = vunpack.c.l.b16 %v772
    %v1990 = vunpack.c.h.b16 %v772
    %v1991 = vunpack.c.l.b16 %v773
    %v1992 = vunpack.c.h.b16 %v773
    %v1993 = vunpack.c.l.b16 %v774
    %v1994 = vunpack.c.h.b16 %v774
    %v1995 = vunpack.c.l.b16 %v775
    %v1996 = vunpack.c.l.b16 %v776
    %v1997 = vunpack.c.h.b16 %v776
    %v1998 = vunpack.c.l.b16 %v777
    %v1999 = vunpack.c.h.b16 %v777
    %v2000 = vunpack.c.l.b16 %v778
    %v2001 = vunpack.c.h.b16 %v778
    %v2002 = vunpack.c.l.b16 %v779
    %v2003 = vunpack.c.l.b16 %v780
    %v2004 = vunpack.c.h.b16 %v780
    %v2005 = vunpack.c.l.b16 %v781
    %v2006 = vunpack.c.h.b16 %v781
    %v2007 = vunpack.c.l.b16 %v782
    %v2008 = vunpack.c.h.b16 %v782
    %v2009 = vunpack.c.l.b16 %v783
    %v2010 = vunpack.c.l.b16 %v784
    %v2011 = vunpack.c.h.b16 %v784
    %v2012 = vunpack.c.l.b16 %v785
    %v2013 = vunpack.c.h.b16 %v785
    %v2014 = vunpack.c.l.b16 %v786
    %v2015 = vunpack.c.h.b16 %v786
    %v2016 = vunpack.c.l.b16 %v787
    %v2017 = vunpack.c.l.b16 %v788
    %v2018 = vunpack.c.h.b16 %v788
    %v2019 = vunpack.c.l.b16 %v789
    %v2020 = vunpack.c.h.b16 %v789
    %v2021 = vunpack.c.l.b16 %v790
    %v2022 = vunpack.c.h.b16 %v790
    %v2023 = vunpack.c.l.b16 %v791
    %v2024 = vunpack.c.l.b16 %v792
    %v2025 = vunpack.c.h.b16 %v792
    %v2026 = vunpack.c.l.b16 %v793
    %v2027 = vunpack.c.h.b16 %v793
    %v2028 = vunpack.c.l.b16 %v794
    %v2029 = vunpack.c.h.b16 %v794
    %v2030 = vunpack.c.l.b16 %v795
    %v2031 = vunpack.c.l.b16 %v796
    %v2032 = vunpack.c.h.b16 %v796
    %v2033 = vunpack.c.l.b16 %v797
    %v2034 = vunpack.c.h.b16 %v797
    %v2035 = vunpack.c.l.b16 %v798
    %v2036 = vunpack.c.h.b16 %v798
    %v2037 = vunpack.c.l.b16 %v799
    %v2038 = vunpack.c.l.b16 %v800
    %v2039 = vunpack.c.h.b16 %v800
    %v2040 = vunpack.c.l.b16 %v801
    %v2041 = vunpack.c.h.b16 %v801
    %v2042 = vunpack.c.l.b16 %v802
    %v2043 = vunpack.c.h.b16 %v802
    %v2044 = vunpack.c.l.b16 %v803
    %v2045 = vunpack.c.l.b16 %v804
    %v2046 = vunpack.c.h.b16 %v804
    %v2047 = vunpack.c.l.b16 %v805
    %v2048 = vunpack.c.h.b16 %v805
    %v2049 = vunpack.c.l.b16 %v806
    %v2050 = vunpack.c.h.b16 %v806
    %v2051 = vunpack.c.l.b16 %v807
    %v2052 = vunpack.c.l.b16 %v808
    %v2053 = vunpack.c.h.b16 %v808
    %v2054 = vunpack.c.l.b16 %v809
    %v2055 = vunpack.c.h.b16 %v809
    %v2056 = vunpack.c.l.b16 %v810
    %v2057 = vunpack.c.h.b16 %v810
    %v2058 = vunpack.c.l.b16 %v811
    %v2059 = vunpack.c.l.b16 %v812
    %v2060 = vunpack.c.h.b16 %v812
    %v2061 = vunpack.c.l.b16 %v813
    %v2062 = vunpack.c.h.b16 %v813
    %v2063 = vunpack.c.l.b16 %v814
    %v2064 = vunpack.c.h.b16 %v814
    %v2065 = vunpack.c.l.b16 %v815
    %v2066 = vunpack.c.l.b16 %v816
    %v2067 = vunpack.c.h.b16 %v816
    %v2068 = vunpack.c.l.b16 %v817
    %v2069 = vunpack.c.h.b16 %v817
    %v2070 = vunpack.c.l.b16 %v818
    %v2071 = vunpack.c.h.b16 %v818
    %v2072 = vunpack.c.l.b16 %v819
    %v2073 = vunpack.c.l.b16 %v820
    %v2074 = vunpack.c.h.b16 %v820
    %v2075 = vunpack.c.l.b16 %v821
    %v2076 = vunpack.c.h.b16 %v821
    %v2077 = vunpack.c.l.b16 %v822
    %v2078 = vunpack.c.h.b16 %v822
    %v2079 = vunpack.c.l.b16 %v823
    %v2080 = vunpack.c.l.b16 %v824
    %v2081 = vunpack.c.h.b16 %v824
    %v2082 = vunpack.c.l.b16 %v825
    %v2083 = vunpack.c.h.b16 %v825
    %v2084 = vunpack.c.l.b16 %v826
    %v2085 = vunpack.c.h.b16 %v826
    %v2086 = vunpack.c.l.b16 %v827
    %v2087 = vunpack.c.l.b16 %v828
    %v2088 = vunpack.c.h.b16 %v828
    %v2089 = vunpack.c.l.b16 %v829
    %v2090 = vunpack.c.h.b16 %v829
    %v2091 = vunpack.c.l.b16 %v830
    %v2092 = vunpack.c.h.b16 %v830
    %v2093 = vunpack.c.l.b16 %v831
    %v2094 = vunpack.c.l.b16 %v832
    %v2095 = vunpack.c.h.b16 %v832
    %v2096 = vunpack.c.l.b16 %v833
    %v2097 = vunpack.c.h.b16 %v833
    %v2098 = vunpack.c.l.b16 %v834
    %v2099 = vunpack.c.h.b16 %v834
    %v2100 = vunpack.c.l.b16 %v835
    %v2101 = vunpack.c.l.b16 %v836
    %v2102 = vunpack.c.h.b16 %v836
    %v2103 = vunpack.c.l.b16 %v837
    %v2104 = vunpack.c.h.b16 %v837
    %v2105 = vunpack.c.l.b16 %v838
    %v2106 = vunpack.c.h.b16 %v838
    %v2107 = vunpack.c.l.b16 %v839
    %v2108 = vunpack.c.l.b16 %v840
    %v2109 = vunpack.c.h.b16 %v840
    %v2110 = vunpack.c.l.b16 %v841
    %v2111 = vunpack.c.h.b16 %v841
    %v2112 = vunpack.c.l.b16 %v842
    %v2113 = vunpack.c.h.b16 %v842
    %v2114 = vunpack.c.l.b16 %v843
    %v2115 = vunpack.c.l.b16 %v844
    %v2116 = vunpack.c.h.b16 %v844
    %v2117 = vunpack.c.l.b16 %v845
    %v2118 = vunpack.c.h.b16 %v845
    %v2119 = vunpack.c.l.b16 %v846
    %v2120 = vunpack.c.h.b16 %v846
    %v2121 = vunpack.c.l.b16 %v847
    %v2122 = vunpack.c.l.b16 %v848
    %v2123 = vunpack.c.h.b16 %v848
    %v2124 = vunpack.c.l.b16 %v849
    %v2125 = vunpack.c.h.b16 %v849
    %v2126 = vunpack.c.l.b16 %v850
    %v2127 = vunpack.c.h.b16 %v850
    %v2128 = vunpack.c.l.b16 %v851
    %v2129 = vunpack.c.l.b16 %v852
    %v2130 = vunpack.c.h.b16 %v852
    %v2131 = vunpack.c.l.b16 %v853
    %v2132 = vunpack.c.h.b16 %v853
    %v2133 = vunpack.c.l.b16 %v854
    %v2134 = vunpack.c.h.b16 %v854
    %v2135 = vunpack.c.l.b16 %v855
    %v2136 = vunpack.c.l.b16 %v856
    %v2137 = vunpack.c.h.b16 %v856
    %v2138 = vunpack.c.l.b16 %v857
    %v2139 = vunpack.c.h.b16 %v857
    %v2140 = vunpack.c.l.b16 %v858
    %v2141 = vunpack.c.h.b16 %v858
    %v2142 = vunpack.c.l.b16 %v859
    %v2143 = vunpack.c.l.b16 %v860
    %v2144 = vunpack.c.h.b16 %v860
    %v2145 = vunpack.c.l.b16 %v861
    %v2146 = vunpack.c.h.b16 %v861
    %v2147 = vunpack.c.l.b16 %v862
    %v2148 = vunpack.c.h.b16 %v862
    %v2149 = vunpack.c.l.b16 %v863
    %v2150 = vunpack.c.l.b16 %v864
    %v2151 = vunpack.c.h.b16 %v864
    %v2152 = vunpack.c.l.b16 %v865
    %v2153 = vunpack.c.h.b16 %v865
    %v2154 = vunpack.c.l.b16 %v866
    %v2155 = vunpack.c.h.b16 %v866
    %v2156 = vunpack.c.l.b16 %v867
    %v2157 = vunpack.c.l.b16 %v868
    %v2158 = vunpack.c.h.b16 %v868
    %v2159 = vunpack.c.l.b16 %v869
    %v2160 = vunpack.c.h.b16 %v869
    %v2161 = vunpack.c.l.b16 %v870
    %v2162 = vunpack.c.h.b16 %v870
    %v2163 = vunpack.c.l.b16 %v871
    %v2164 = vunpack.c.l.b16 %v872
    %v2165 = vunpack.c.h.b16 %v872
    %v2166 = vunpack.c.l.b16 %v873
    %v2167 = vunpack.c.h.b16 %v873
    %v2168 = vunpack.c.l.b16 %v874
    %v2169 = vunpack.c.h.b16 %v874
    %v2170 = vunpack.c.l.b16 %v875
    %v2171 = vunpack.c.l.b16 %v876
    %v2172 = vunpack.c.h.b16 %v876
    %v2173 = vunpack.c.l.b16 %v877
    %v2174 = vunpack.c.h.b16 %v877
    %v2175 = vunpack.c.l.b16 %v878
    %v2176 = vunpack.c.h.b16 %v878
    %v2177 = vunpack.c.l.b16 %v879
    %v2178 = vunpack.c.l.b16 %v880
    %v2179 = vunpack.c.h.b16 %v880
    %v2180 = vunpack.c.l.b16 %v881
    %v2181 = vunpack.c.h.b16 %v881
    %v2182 = vunpack.c.l.b16 %v882
    %v2183 = vunpack.c.h.b16 %v882
    %v2184 = vunpack.c.l.b16 %v883
    %v2185 = vunpack.c.l.b16 %v884
    %v2186 = vunpack.c.h.b16 %v884
    %v2187 = vunpack.c.l.b16 %v885
    %v2188 = vunpack.c.h.b16 %v885
    %v2189 = vunpack.c.l.b16 %v886
    %v2190 = vunpack.c.h.b16 %v886
    %v2191 = vunpack.c.l.b16 %v887
    %v2192 = vunpack.c.l.b16 %v888
    %v2193 = vunpack.c.h.b16 %v888
    %v2194 = vunpack.c.l.b16 %v889
    %v2195 = vunpack.c.h.b16 %v889
    %v2196 = vunpack.c.l.b16 %v890
    %v2197 = vunpack.c.h.b16 %v890
    %v2198 = vunpack.c.l.b16 %v891
    %v2199 = vunpack.c.l.b16 %v892
    %v2200 = vunpack.c.h.b16 %v892
    %v2201 = vunpack.c.l.b16 %v893
    %v2202 = vunpack.c.h.b16 %v893
    %v2203 = vunpack.c.l.b16 %v894
    %v2204 = vunpack.c.h.b16 %v894
    %v2205 = vunpack.c.l.b16 %v895
    %v2206 = vunpack.c.l.b16 %v896
    %v2207 = vunpack.c.h.b16 %v896
    %v2208 = vunpack.c.l.b16 %v897
    %v2209 = vunpack.c.h.b16 %v897
    %v2210 = vunpack.c.l.b16 %v898
    %v2211 = vunpack.c.h.b16 %v898
    %v2212 = vunpack.c.l.b16 %v899
    %v2213 = vunpack.c.l.b16 %v900
    %v2214 = vunpack.c.h.b16 %v900
    %v2215 = vunpack.c.l.b16 %v901
    %v2216 = vunpack.c.h.b16 %v901
    %v2217 = vunpack.c.l.b16 %v902
    %v2218 = vunpack.c.h.b16 %v902
    %v2219 = vunpack.c.l.b16 %v903
    %v2220 = vunpack.c.l.b16 %v904
    %v2221 = vunpack.c.h.b16 %v904
    %v2222 = vunpack.c.l.b16 %v905
    %v2223 = vunpack.c.h.b16 %v905
    %v2224 = vunpack.c.l.b16 %v906
    %v2225 = vunpack.c.h.b16 %v906
    %v2226 = vunpack.c.l.b16 %v907
    %v2227 = vunpack.c.l.b16 %v908
    %v2228 = vunpack.c.h.b16 %v908
    %v2229 = vunpack.c.l.b16 %v909
    %v2230 = vunpack.c.h.b16 %v909
    %v2231 = vunpack.c.l.b16 %v910
    %v2232 = vunpack.c.h.b16 %v910
    %v2233 = vunpack.c.l.b16 %v911
    %v2234 = vunpack.c.l.b16 %v912
    %v2235 = vunpack.c.h.b16 %v912
    %v2236 = vunpack.c.l.b16 %v913
    %v2237 = vunpack.c.h.b16 %v913
    %v2238 = vunpack.c.l.b16 %v914
    %v2239 = vunpack.c.h.b16 %v914
    %v2240 = vunpack.c.l.b16 %v915
    %v2241 = vunpack.c.l.b16 %v916
    %v2242 = vunpack.c.h.b16 %v916
    %v2243 = vunpack.c.l.b16 %v917
    %v2244 = vunpack.c.h.b16 %v917
    %v2245 = vunpack.c.l.b16 %v918
    %v2246 = vunpack.c.h.b16 %v918
    %v2247 = vunpack.c.l.b16 %v919
    %v2248 = vunpack.c.l.b16 %v920
    %v2249 = vunpack.c.h.b16 %v920
    %v2250 = vunpack.c.l.b16 %v921
    %v2251 = vunpack.c.h.b16 %v921
    %v2252 = vunpack.c.l.b16 %v922
    %v2253 = vunpack.c.h.b16 %v922
    %v2254 = vunpack.c.l.b16 %v923
    %v2255 = vunpack.c.l.b16 %v924
    %v2256 = vunpack.c.h.b16 %v924
    %v2257 = vunpack.c.l.b16 %v925
    %v2258 = vunpack.c.h.b16 %v925
    %v2259 = vunpack.c.l.b16 %v926
    %v2260 = vunpack.c.h.b16 %v926
    %v2261 = vunpack.c.l.b16 %v927
    %v2262 = vunpack.c.l.b16 %v928
    %v2263 = vunpack.c.h.b16 %v928
    %v2264 = vunpack.c.l.b16 %v929
    %v2265 = vunpack.c.h.b16 %v929
    %v2266 = vunpack.c.l.b16 %v930
    %v2267 = vunpack.c.h.b16 %v930
    %v2268 = vunpack.c.l.b16 %v931
    %v2269 = vunpack.c.l.b16 %v932
    %v2270 = vunpack.c.h.b16 %v932
    %v2271 = vunpack.c.l.b16 %v933
    %v2272 = vunpack.c.h.b16 %v933
    %v2273 = vunpack.c.l.b16 %v934
    %v2274 = vunpack.c.h.b16 %v934
    %v2275 = vunpack.c.l.b16 %v935
    %v2276 = vunpack.c.l.b16 %v936
    %v2277 = vunpack.c.h.b16 %v936
    %v2278 = vunpack.c.l.b16 %v937
    %v2279 = vunpack.c.h.b16 %v937
    %v2280 = vunpack.c.l.b16 %v938
    %v2281 = vunpack.c.h.b16 %v938
    %v2282 = vunpack.c.l.b16 %v939
    %v2283 = vunpack.c.l.b16 %v940
    %v2284 = vunpack.c.h.b16 %v940
    %v2285 = vunpack.c.l.b16 %v941
    %v2286 = vunpack.c.h.b16 %v941
    %v2287 = vunpack.c.l.b16 %v942
    %v2288 = vunpack.c.h.b16 %v942
    %v2289 = vunpack.c.l.b16 %v943
    %v2290 = vunpack.c.l.b16 %v944
    %v2291 = vunpack.c.h.b16 %v944
    %v2292 = vunpack.c.l.b16 %v945
    %v2293 = vunpack.c.h.b16 %v945
    %v2294 = vunpack.c.l.b16 %v946
    %v2295 = vunpack.c.h.b16 %v946
    %v2296 = vunpack.c.l.b16 %v947
    %v2297 = vunpack.c.l.b16 %v948
    %v2298 = vunpack.c.h.b16 %v948
    %v2299 = vunpack.c.l.b16 %v949
    %v2300 = vunpack.c.h.b16 %v949
    %v2301 = vunpack.c.l.b16 %v950
    %v2302 = vunpack.c.h.b16 %v950
    %v2303 = vunpack.c.l.b16 %v951
    %v2304 = vunpack.c.l.b16 %v952
    %v2305 = vunpack.c.h.b16 %v952
    %v2306 = vunpack.c.l.b16 %v953
    %v2307 = vunpack.c.h.b16 %v953
    %v2308 = vunpack.c.l.b16 %v954
    %v2309 = vunpack.c.h.b16 %v954
    %v2310 = vunpack.c.l.b16 %v955
    %v2311 = vunpack.c.l.b16 %v956
    %v2312 = vunpack.c.h.b16 %v956
    %v2313 = vunpack.c.l.b16 %v957
    %v2314 = vunpack.c.h.b16 %v957
    %v2315 = vunpack.c.l.b16 %v958
    %v2316 = vunpack.c.h.b16 %v958
    %v2317 = vunpack.c.l.b16 %v959
    %v2318 = vunpack.c.l.b16 %v960
    %v2319 = vunpack.c.h.b16 %v960
    %v2320 = vunpack.c.l.b16 %v961
    %v2321 = vunpack.c.h.b16 %v961
    %v2322 = vunpack.c.l.b16 %v962
    %v2323 = vunpack.c.h.b16 %v962
    %v2324 = vunpack.c.l.b16 %v963
    %v2325 = vunpack.c.l.b16 %v964
    %v2326 = vunpack.c.h.b16 %v964
    %v2327 = vunpack.c.l.b16 %v965
    %v2328 = vunpack.c.h.b16 %v965
    %v2329 = vunpack.c.l.b16 %v966
    %v2330 = vunpack.c.h.b16 %v966
    %v2331 = vunpack.c.l.b16 %v967
    %v2332 = vunpack.c.l.b16 %v968
    %v2333 = vunpack.c.h.b16 %v968
    %v2334 = vunpack.c.l.b16 %v969
    %v2335 = vunpack.c.h.b16 %v969
    %v2336 = vunpack.c.l.b16 %v970
    %v2337 = vunpack.c.h.b16 %v970
    %v2338 = vunpack.c.l.b16 %v971
    %v2339 = vunpack.c.l.b16 %v972
    %v2340 = vunpack.c.h.b16 %v972
    %v2341 = vunpack.c.l.b16 %v973
    %v2342 = vunpack.c.h.b16 %v973
    %v2343 = vunpack.c.l.b16 %v974
    %v2344 = vunpack.c.h.b16 %v974
    %v2345 = vunpack.c.l.b16 %v975
    %v2346 = vunpack.c.l.b16 %v976
    %v2347 = vunpack.c.h.b16 %v976
    %v2348 = vunpack.c.l.b16 %v977
    %v2349 = vunpack.c.h.b16 %v977
    %v2350 = vunpack.c.l.b16 %v978
    %v2351 = vunpack.c.h.b16 %v978
    %v2352 = vunpack.c.l.b16 %v979
    %v2353 = vunpack.c.l.b16 %v980
    %v2354 = vunpack.c.h.b16 %v980
    %v2355 = vunpack.c.l.b16 %v981
    %v2356 = vunpack.c.h.b16 %v981
    %v2357 = vunpack.c.l.b16 %v982
    %v2358 = vunpack.c.h.b16 %v982
    %v2359 = vunpack.c.l.b16 %v983
    %v2360 = vunpack.c.l.b16 %v984
    %v2361 = vunpack.c.h.b16 %v984
    %v2362 = vunpack.c.l.b16 %v985
    %v2363 = vunpack.c.h.b16 %v985
    %v2364 = vunpack.c.l.b16 %v986
    %v2365 = vunpack.c.h.b16 %v986
    %v2366 = vunpack.c.l.b16 %v987
    %v2367 = vunpack.c.l.b16 %v988
    %v2368 = vunpack.c.h.b16 %v988
    %v2369 = vunpack.c.l.b16 %v989
    %v2370 = vunpack.c.h.b16 %v989
    %v2371 = vunpack.c.l.b16 %v990
    %v2372 = vunpack.c.h.b16 %v990
    %v2373 = vunpack.c.l.b16 %v991
    %v2374 = vunpack.c.l.b16 %v992
    %v2375 = vunpack.c.h.b16 %v992
    %v2376 = vunpack.c.l.b16 %v993
    %v2377 = vunpack.c.h.b16 %v993
    %v2378 = vunpack.c.l.b16 %v994
    %v2379 = vunpack.c.h.b16 %v994
    %v2380 = vunpack.c.l.b16 %v995
    %v2381 = vunpack.c.l.b16 %v996
    %v2382 = vunpack.c.h.b16 %v996
    %v2383 = vunpack.c.l.b16 %v997
    %v2384 = vunpack.c.h.b16 %v997
    %v2385 = vunpack.c.l.b16 %v998
    %v2386 = vunpack.c.h.b16 %v998
    %v2387 = vunpack.c.l.b16 %v999
    %v2388 = vunpack.c.l.b16 %v1000
    %v2389 = vunpack.c.h.b16 %v1000
    %v2390 = vunpack.c.l.b16 %v1001
    %v2391 = vunpack.c.h.b16 %v1001
    %v2392 = vunpack.c.l.b16 %v1002
    %v2393 = vunpack.c.h.b16 %v1002
    %v2394 = vunpack.c.l.b16 %v1003
    %v2395 = vunpack.c.l.b16 %v1004
    %v2396 = vunpack.c.h.b16 %v1004
    %v2397 = vunpack.c.l.b16 %v1005
    %v2398 = vunpack.c.h.b16 %v1005
    %v2399 = vunpack.c.l.b16 %v1006
    %v2400 = vunpack.c.h.b16 %v1006
    %v2401 = vunpack.c.l.b16 %v1007
    %v2402 = vunpack.c.l.b16 %v1008
    %v2403 = vunpack.c.h.b16 %v1008
    %v2404 = vunpack.c.l.b16 %v1009
    %v2405 = vunpack.c.h.b16 %v1009
    %v2406 = vunpack.c.l.b16 %v1010
    %v2407 = vunpack.c.h.b16 %v1010
    %v2408 = vunpack.c.l.b16 %v1011
    %v2409 = vunpack.c.l.b16 %v1012
    %v2410 = vunpack.c.h.b16 %v1012
    %v2411 = vunpack.c.l.b16 %v1013
    %v2412 = vunpack.c.h.b16 %v1013
    %v2413 = vunpack.c.l.b16 %v1014
    %v2414 = vunpack.c.h.b16 %v1014
    %v2415 = vunpack.c.l.b16 %v1015
    %v2416 = vunpack.c.l.b16 %v1016
    %v2417 = vunpack.c.h.b16 %v1016
    %v2418 = vunpack.c.l.b16 %v1017
    %v2419 = vunpack.c.h.b16 %v1017
    %v2420 = vunpack.c.l.b16 %v1018
    %v2421 = vunpack.c.h.b16 %v1018
    %v2422 = vunpack.c.l.b16 %v1019
    %v2423 = vunpack.c.l.b16 %v1020
    %v2424 = vunpack.c.h.b16 %v1020
    %v2425 = vunpack.c.l.b16 %v1021
    %v2426 = vunpack.c.h.b16 %v1021
    %v2427 = vunpack.c.l.b16 %v1022
    %v2428 = vunpack.c.h.b16 %v1022
    %v2429 = vunpack.c.l.b16 %v1023
    %v2430 = vunpack.c.l.b16 %v1024
    %v2431 = vunpack.c.h.b16 %v1024
    %v2432 = vunpack.c.l.b16 %v1025
    %v2433 = vunpack.c.h.b16 %v1025
    %v2434 = vunpack.c.l.b16 %v1026
    %v2435 = vunpack.c.h.b16 %v1026
    %v2436 = vunpack.c.l.b16 %v1027
    %v2437 = vunpack.c.l.b16 %v1028
    %v2438 = vunpack.c.h.b16 %v1028
    %v2439 = vunpack.c.l.b16 %v1029
    %v2440 = vunpack.c.h.b16 %v1029
    %v2441 = vunpack.c.l.b16 %v1030
    %v2442 = vunpack.c.h.b16 %v1030
    %v2443 = vunpack.c.l.b16 %v1031
    %v2444 = vunpack.c.l.b16 %v1032
    %v2445 = vunpack.c.h.b16 %v1032
    %v2446 = vunpack.c.l.b16 %v1033
    %v2447 = vunpack.c.h.b16 %v1033
    %v2448 = vunpack.c.l.b16 %v1034
    %v2449 = vunpack.c.h.b16 %v1034
    %v2450 = vunpack.c.l.b16 %v1035
    %v2451 = vunpack.c.l.b16 %v1036
    %v2452 = vunpack.c.h.b16 %v1036
    %v2453 = vunpack.c.l.b16 %v1037
    %v2454 = vunpack.c.h.b16 %v1037
    %v2455 = vunpack.c.l.b16 %v1038
    %v2456 = vunpack.c.h.b16 %v1038
    %v2457 = vunpack.c.l.b16 %v1039
    %v2458 = vunpack.c.l.b16 %v1040
    %v2459 = vunpack.c.h.b16 %v1040
    %v2460 = vunpack.c.l.b16 %v1041
    %v2461 = vunpack.c.h.b16 %v1041
    %v2462 = vunpack.c.l.b16 %v1042
    %v2463 = vunpack.c.h.b16 %v1042
    %v2464 = vunpack.c.l.b16 %v1043
    %v2465 = vunpack.c.l.b16 %v1044
    %v2466 = vunpack.c.h.b16 %v1044
    %v2467 = vunpack.c.l.b16 %v1045
    %v2468 = vunpack.c.h.b16 %v1045
    %v2469 = vunpack.c.l.b16 %v1046
    %v2470 = vunpack.c.h.b16 %v1046
    %v2471 = vunpack.c.l.b16 %v1047
    %v2472 = vunpack.c.l.b16 %v1048
    %v2473 = vunpack.c.h.b16 %v1048
    %v2474 = vunpack.c.l.b16 %v1049
    %v2475 = vunpack.c.h.b16 %v1049
    %v2476 = vunpack.c.l.b16 %v1050
    %v2477 = vunpack.c.h.b16 %v1050
    %v2478 = vunpack.c.l.b16 %v1051
    %v2479 = vunpack.c.l.b16 %v1052
    %v2480 = vunpack.c.h.b16 %v1052
    %v2481 = vunpack.c.l.b16 %v1053
    %v2482 = vunpack.c.h.b16 %v1053
    %v2483 = vunpack.c.l.b16 %v1054
    %v2484 = vunpack.c.h.b16 %v1054
    %v2485 = vunpack.c.l.b16 %v1055
    %v2486 = vunpack.c.l.b16 %v1056
    %v2487 = vunpack.c.h.b16 %v1056
    %v2488 = vunpack.c.l.b16 %v1057
    %v2489 = vunpack.c.h.b16 %v1057
    %v2490 = vunpack.c.l.b16 %v1058
    %v2491 = vunpack.c.h.b16 %v1058
    %v2492 = vunpack.c.l.b16 %v1059
    %v2493 = vunpack.c.l.b16 %v1060
    %v2494 = vunpack.c.h.b16 %v1060
    %v2495 = vunpack.c.l.b16 %v1061
    %v2496 = vunpack.c.h.b16 %v1061
    %v2497 = vunpack.c.l.b16 %v1062
    %v2498 = vunpack.c.h.b16 %v1062
    %v2499 = vunpack.c.l.b16 %v1063
    %v2500 = vunpack.c.l.b16 %v1064
    %v2501 = vunpack.c.h.b16 %v1064
    %v2502 = vunpack.c.l.b16 %v1065
    %v2503 = vunpack.c.h.b16 %v1065
    %v2504 = vunpack.c.l.b16 %v1066
    %v2505 = vunpack.c.h.b16 %v1066
    %v2506 = vunpack.c.l.b16 %v1067
    %v2507 = vunpack.c.l.b16 %v1068
    %v2508 = vunpack.c.h.b16 %v1068
    %v2509 = vunpack.c.l.b16 %v1069
    %v2510 = vunpack.c.h.b16 %v1069
    %v2511 = vunpack.c.l.b16 %v1070
    %v2512 = vunpack.c.h.b16 %v1070
    %v2513 = vunpack.c.l.b16 %v1071
    %v2514 = vunpack.c.l.b16 %v1072
    %v2515 = vunpack.c.h.b16 %v1072
    %v2516 = vunpack.c.l.b16 %v1073
    %v2517 = vunpack.c.h.b16 %v1073
    %v2518 = vunpack.c.l.b16 %v1074
    %v2519 = vunpack.c.h.b16 %v1074
    %v2520 = vunpack.c.l.b16 %v1075
    %v2521 = vpack.c.b16 %v1632, %v1625
    %v2522 = vpack.c.b16 %v1633, %v1626
    %v2523 = vpack.c.b16 %v1634, %v1627
    %v2524 = vpack.c.b16 %v1635, %v1628
    %v2525 = vpack.c.b16 %v1636, %v1629
    %v2526 = vpack.c.b16 %v1637, %v1630
    %v2527 = vpack.c.b16 %v1638, %v1631
    %v2528 = vpack.c.b16 %v1646, %v1639
    %v2529 = vpack.c.b16 %v1647, %v1640
    %v2530 = vpack.c.b16 %v1648, %v1641
    %v2531 = vpack.c.b16 %v1649, %v1642
    %v2532 = vpack.c.b16 %v1650, %v1643
    %v2533 = vpack.c.b16 %v1651, %v1644
    %v2534 = vpack.c.b16 %v1652, %v1645
    %v2535 = vpack.c.b16 %v1660, %v1653
    %v2536 = vpack.c.b16 %v1661, %v1654
    %v2537 = vpack.c.b16 %v1662, %v1655
    %v2538 = vpack.c.b16 %v1663, %v1656
    %v2539 = vpack.c.b16 %v1664, %v1657
    %v2540 = vpack.c.b16 %v1665, %v1658
    %v2541 = vpack.c.b16 %v1666, %v1659
    %v2542 = vpack.c.b16 %v1674, %v1667
    %v2543 = vpack.c.b16 %v1675, %v1668
    %v2544 = vpack.c.b16 %v1676, %v1669
    %v2545 = vpack.c.b16 %v1677, %v1670
    %v2546 = vpack.c.b16 %v1678, %v1671
    %v2547 = vpack.c.b16 %v1679, %v1672
    %v2548 = vpack.c.b16 %v1680, %v1673
    %v2549 = vpack.c.b16 %v1688, %v1681
    %v2550 = vpack.c.b16 %v1689, %v1682
    %v2551 = vpack.c.b16 %v1690, %v1683
    %v2552 = vpack.c.b16 %v1691, %v1684
    %v2553 = vpack.c.b16 %v1692, %v1685
    %v2554 = vpack.c.b16 %v1693, %v1686
    %v2555 = vpack.c.b16 %v1694, %v1687
    %v2556 = vpack.c.b16 %v1702, %v1695
    %v2557 = vpack.c.b16 %v1703, %v1696
    %v2558 = vpack.c.b16 %v1704, %v1697
    %v2559 = vpack.c.b16 %v1705, %v1698
    %v2560 = vpack.c.b16 %v1706, %v1699
    %v2561 = vpack.c.b16 %v1707, %v1700
    %v2562 = vpack.c.b16 %v1708, %v1701
    %v2563 = vpack.c.b16 %v1716, %v1709
    %v2564 = vpack.c.b16 %v1717, %v1710
    %v2565 = vpack.c.b16 %v1718, %v1711
    %v2566 = vpack.c.b16 %v1719, %v1712
    %v2567 = vpack.c.b16 %v1720, %v1713
    %v2568 = vpack.c.b16 %v1721, %v1714
    %v2569 = vpack.c.b16 %v1722, %v1715
    %v2570 = vpack.c.b16 %v1730, %v1723
    %v2571 = vpack.c.b16 %v1731, %v1724
    %v2572 = vpack.c.b16 %v1732, %v1725
    %v2573 = vpack.c.b16 %v1733, %v1726
    %v2574 = vpack.c.b16 %v1734, %v1727
    %v2575 = vpack.c.b16 %v1735, %v1728
    %v2576 = vpack.c.b16 %v1736, %v1729
    %v2577 = vpack.c.b16 %v1744, %v1737
    %v2578 = vpack.c.b16 %v1745, %v1738
    %v2579 = vpack.c.b16 %v1746, %v1739
    %v2580 = vpack.c.b16 %v1747, %v1740
    %v2581 = vpack.c.b16 %v1748, %v1741
    %v2582 = vpack.c.b16 %v1749, %v1742
    %v2583 = vpack.c.b16 %v1750, %v1743
    %v2584 = vpack.c.b16 %v1758, %v1751
    %v2585 = vpack.c.b16 %v1759, %v1752
    %v2586 = vpack.c.b16 %v1760, %v1753
    %v2587 = vpack.c.b16 %v1761, %v1754
    %v2588 = vpack.c.b16 %v1762, %v1755
    %v2589 = vpack.c.b16 %v1763, %v1756
    %v2590 = vpack.c.b16 %v1764, %v1757
    %v2591 = vpack.c.b16 %v1772, %v1765
    %v2592 = vpack.c.b16 %v1773, %v1766
    %v2593 = vpack.c.b16 %v1774, %v1767
    %v2594 = vpack.c.b16 %v1775, %v1768
    %v2595 = vpack.c.b16 %v1776, %v1769
    %v2596 = vpack.c.b16 %v1777, %v1770
    %v2597 = vpack.c.b16 %v1778, %v1771
    %v2598 = vpack.c.b16 %v1786, %v1779
    %v2599 = vpack.c.b16 %v1787, %v1780
    %v2600 = vpack.c.b16 %v1788, %v1781
    %v2601 = vpack.c.b16 %v1789, %v1782
    %v2602 = vpack.c.b16 %v1790, %v1783
    %v2603 = vpack.c.b16 %v1791, %v1784
    %v2604 = vpack.c.b16 %v1792, %v1785
    %v2605 = vpack.c.b16 %v1800, %v1793
    %v2606 = vpack.c.b16 %v1801, %v1794
    %v2607 = vpack.c.b16 %v1802, %v1795
    %v2608 = vpack.c.b16 %v1803, %v1796
    %v2609 = vpack.c.b16 %v1804, %v1797
    %v2610 = vpack.c.b16 %v1805, %v1798
    %v2611 = vpack.c.b16 %v1806, %v1799
    %v2612 = vpack.c.b16 %v1814, %v1807
    %v2613 = vpack.c.b16 %v1815, %v1808
    %v2614 = vpack.c.b16 %v1816, %v1809
    %v2615 = vpack.c.b16 %v1817, %v1810
    %v2616 = vpack.c.b16 %v1818, %v1811
    %v2617 = vpack.c.b16 %v1819, %v1812
    %v2618 = vpack.c.b16 %v1820, %v1813
    %v2619 = vpack.c.b16 %v1828, %v1821
    %v2620 = vpack.c.b16 %v1829, %v1822
    %v2621 = vpack.c.b16 %v1830, %v1823
    %v2622 = vpack.c.b16 %v1831, %v1824
    %v2623 = vpack.c.b16 %v1832, %v1825
    %v2624 = vpack.c.b16 %v1833, %v1826
    %v2625 = vpack.c.b16 %v1834, %v1827
    %v2626 = vpack.c.b16 %v1842, %v1835
    %v2627 = vpack.c.b16 %v1843, %v1836
    %v2628 = vpack.c.b16 %v1844, %v1837
    %v2629 = vpack.c.b16 %v1845, %v1838
    %v2630 = vpack.c.b16 %v1846, %v1839
    %v2631 = vpack.c.b16 %v1847, %v1840
    %v2632 = vpack.c.b16 %v1848, %v1841
    %v2633 = vpack.c.b16 %v1856, %v1849
    %v2634 = vpack.c.b16 %v1857, %v1850
    %v2635 = vpack.c.b16 %v1858, %v1851
    %v2636 = vpack.c.b16 %v1859, %v1852
    %v2637 = vpack.c.b16 %v1860, %v1853
    %v2638 = vpack.c.b16 %v1861, %v1854
    %v2639 = vpack.c.b16 %v1862, %v1855
    %v2640 = vpack.c.b16 %v1870, %v1863
    %v2641 = vpack.c.b16 %v1871, %v1864
    %v2642 = vpack.c.b16 %v1872, %v1865
    %v2643 = vpack.c.b16 %v1873, %v1866
    %v2644 = vpack.c.b16 %v1874, %v1867
    %v2645 = vpack.c.b16 %v1875, %v1868
    %v2646 = vpack.c.b16 %v1876, %v1869
    %v2647 = vpack.c.b16 %v1884, %v1877
    %v2648 = vpack.c.b16 %v1885, %v1878
    %v2649 = vpack.c.b16 %v1886, %v1879
    %v2650 = vpack.c.b16 %v1887, %v1880
    %v2651 = vpack.c.b16 %v1888, %v1881
    %v2652 = vpack.c.b16 %v1889, %v1882
    %v2653 = vpack.c.b16 %v1890, %v1883
    %v2654 = vpack.c.b16 %v1898, %v1891
    %v2655 = vpack.c.b16 %v1899, %v1892
    %v2656 = vpack.c.b16 %v1900, %v1893
    %v2657 = vpack.c.b16 %v1901, %v1894
    %v2658 = vpack.c.b16 %v1902, %v1895
    %v2659 = vpack.c.b16 %v1903, %v1896
    %v2660 = vpack.c.b16 %v1904, %v1897
    %v2661 = vpack.c.b16 %v1912, %v1905
    %v2662 = vpack.c.b16 %v1913, %v1906
    %v2663 = vpack.c.b16 %v1914, %v1907
    %v2664 = vpack.c.b16 %v1915, %v1908
    %v2665 = vpack.c.b16 %v1916, %v1909
    %v2666 = vpack.c.b16 %v1917, %v1910
    %v2667 = vpack.c.b16 %v1918, %v1911
    %v2668 = vpack.c.b16 %v1926, %v1919
    %v2669 = vpack.c.b16 %v1927, %v1920
    %v2670 = vpack.c.b16 %v1928, %v1921
    %v2671 = vpack.c.b16 %v1929, %v1922
    %v2672 = vpack.c.b16 %v1930, %v1923
    %v2673 = vpack.c.b16 %v1931, %v1924
    %v2674 = vpack.c.b16 %v1932, %v1925
    %v2675 = vpack.c.b16 %v1940, %v1933
    %v2676 = vpack.c.b16 %v1941, %v1934
    %v2677 = vpack.c.b16 %v1942, %v1935
    %v2678 = vpack.c.b16 %v1943, %v1936
    %v2679 = vpack.c.b16 %v1944, %v1937
    %v2680 = vpack.c.b16 %v1945, %v1938
    %v2681 = vpack.c.b16 %v1946, %v1939
    %v2682 = vpack.c.b16 %v1954, %v1947
    %v2683 = vpack.c.b16 %v1955, %v1948
    %v2684 = vpack.c.b16 %v1956, %v1949
    %v2685 = vpack.c.b16 %v1957, %v1950
    %v2686 = vpack.c.b16 %v1958, %v1951
    %v2687 = vpack.c.b16 %v1959, %v1952
    %v2688 = vpack.c.b16 %v1960, %v1953
    %v2689 = vpack.c.b16 %v1968, %v1961
    %v2690 = vpack.c.b16 %v1969, %v1962
    %v2691 = vpack.c.b16 %v1970, %v1963
    %v2692 = vpack.c.b16 %v1971, %v1964
    %v2693 = vpack.c.b16 %v1972, %v1965
    %v2694 = vpack.c.b16 %v1973, %v1966
    %v2695 = vpack.c.b16 %v1974, %v1967
    %v2696 = vpack.c.b16 %v1982, %v1975
    %v2697 = vpack.c.b16 %v1983, %v1976
    %v2698 = vpack.c.b16 %v1984, %v1977
    %v2699 = vpack.c.b16 %v1985, %v1978
    %v2700 = vpack.c.b16 %v1986, %v1979
    %v2701 = vpack.c.b16 %v1987, %v1980
    %v2702 = vpack.c.b16 %v1988, %v1981
    %v2703 = vpack.c.b16 %v1996, %v1989
    %v2704 = vpack.c.b16 %v1997, %v1990
    %v2705 = vpack.c.b16 %v1998, %v1991
    %v2706 = vpack.c.b16 %v1999, %v1992
    %v2707 = vpack.c.b16 %v2000, %v1993
    %v2708 = vpack.c.b16 %v2001, %v1994
    %v2709 = vpack.c.b16 %v2002, %v1995
    %v2710 = vpack.c.b16 %v2010, %v2003
    %v2711 = vpack.c.b16 %v2011, %v2004
    %v2712 = vpack.c.b16 %v2012, %v2005
    %v2713 = vpack.c.b16 %v2013, %v2006
    %v2714 = vpack.c.b16 %v2014, %v2007
    %v2715 = vpack.c.b16 %v2015, %v2008
    %v2716 = vpack.c.b16 %v2016, %v2009
    %v2717 = vpack.c.b16 %v2024, %v2017
    %v2718 = vpack.c.b16 %v2025, %v2018
    %v2719 = vpack.c.b16 %v2026, %v2019
    %v2720 = vpack.c.b16 %v2027, %v2020
    %v2721 = vpack.c.b16 %v2028, %v2021
    %v2722 = vpack.c.b16 %v2029, %v2022
    %v2723 = vpack.c.b16 %v2030, %v2023
    %v2724 = vpack.c.b16 %v2038, %v2031
    %v2725 = vpack.c.b16 %v2039, %v2032
    %v2726 = vpack.c.b16 %v2040, %v2033
    %v2727 = vpack.c.b16 %v2041, %v2034
    %v2728 = vpack.c.b16 %v2042, %v2035
    %v2729 = vpack.c.b16 %v2043, %v2036
    %v2730 = vpack.c.b16 %v2044, %v2037
    %v2731 = vpack.c.b16 %v2052, %v2045
    %v2732 = vpack.c.b16 %v2053, %v2046
    %v2733 = vpack.c.b16 %v2054, %v2047
    %v2734 = vpack.c.b16 %v2055, %v2048
    %v2735 = vpack.c.b16 %v2056, %v2049
    %v2736 = vpack.c.b16 %v2057, %v2050
    %v2737 = vpack.c.b16 %v2058, %v2051
    %v2738 = vpack.c.b16 %v2066, %v2059
    %v2739 = vpack.c.b16 %v2067, %v2060
    %v2740 = vpack.c.b16 %v2068, %v2061
    %v2741 = vpack.c.b16 %v2069, %v2062
    %v2742 = vpack.c.b16 %v2070, %v2063
    %v2743 = vpack.c.b16 %v2071, %v2064
    %v2744 = vpack.c.b16 %v2072, %v2065
    %v2745 = vpack.c.b16 %v2080, %v2073
    %v2746 = vpack.c.b16 %v2081, %v2074
    %v2747 = vpack.c.b16 %v2082, %v2075
    %v2748 = vpack.c.b16 %v2083, %v2076
    %v2749 = vpack.c.b16 %v2084, %v2077
    %v2750 = vpack.c.b16 %v2085, %v2078
    %v2751 = vpack.c.b16 %v2086, %v2079
    %v2752 = vpack.c.b16 %v2094, %v2087
    %v2753 = vpack.c.b16 %v2095, %v2088
    %v2754 = vpack.c.b16 %v2096, %v2089
    %v2755 = vpack.c.b16 %v2097, %v2090
    %v2756 = vpack.c.b16 %v2098, %v2091
    %v2757 = vpack.c.b16 %v2099, %v2092
    %v2758 = vpack.c.b16 %v2100, %v2093
    %v2759 = vpack.c.b16 %v2108, %v2101
    %v2760 = vpack.c.b16 %v2109, %v2102
    %v2761 = vpack.c.b16 %v2110, %v2103
    %v2762 = vpack.c.b16 %v2111, %v2104
    %v2763 = vpack.c.b16 %v2112, %v2105
    %v2764 = vpack.c.b16 %v2113, %v2106
    %v2765 = vpack.c.b16 %v2114, %v2107
    %v2766 = vpack.c.b16 %v2122, %v2115
    %v2767 = vpack.c.b16 %v2123, %v2116
    %v2768 = vpack.c.b16 %v2124, %v2117
    %v2769 = vpack.c.b16 %v2125, %v2118
    %v2770 = vpack.c.b16 %v2126, %v2119
    %v2771 = vpack.c.b16 %v2127, %v2120
    %v2772 = vpack.c.b16 %v2128, %v2121
    %v2773 = vpack.c.b16 %v2136, %v2129
    %v2774 = vpack.c.b16 %v2137, %v2130
    %v2775 = vpack.c.b16 %v2138, %v2131
    %v2776 = vpack.c.b16 %v2139, %v2132
    %v2777 = vpack.c.b16 %v2140, %v2133
    %v2778 = vpack.c.b16 %v2141, %v2134
    %v2779 = vpack.c.b16 %v2142, %v2135
    %v2780 = vpack.c.b16 %v2150, %v2143
    %v2781 = vpack.c.b16 %v2151, %v2144
    %v2782 = vpack.c.b16 %v2152, %v2145
    %v2783 = vpack.c.b16 %v2153, %v2146
    %v2784 = vpack.c.b16 %v2154, %v2147
    %v2785 = vpack.c.b16 %v2155, %v2148
    %v2786 = vpack.c.b16 %v2156, %v2149
    %v2787 = vpack.c.b16 %v2164, %v2157
    %v2788 = vpack.c.b16 %v2165, %v2158
    %v2789 = vpack.c.b16 %v2166, %v2159
    %v2790 = vpack.c.b16 %v2167, %v2160
    %v2791 = vpack.c.b16 %v2168, %v2161
    %v2792 = vpack.c.b16 %v2169, %v2162
    %v2793 = vpack.c.b16 %v2170, %v2163
    %v2794 = vpack.c.b16 %v2178, %v2171
    %v2795 = vpack.c.b16 %v2179, %v2172
    %v2796 = vpack.c.b16 %v2180, %v2173
    %v2797 = vpack.c.b16 %v2181, %v2174
    %v2798 = vpack.c.b16 %v2182, %v2175
    %v2799 = vpack.c.b16 %v2183, %v2176
    %v2800 = vpack.c.b16 %v2184, %v2177
    %v2801 = vpack.c.b16 %v2192, %v2185
    %v2802 = vpack.c.b16 %v2193, %v2186
    %v2803 = vpack.c.b16 %v2194, %v2187
    %v2804 = vpack.c.b16 %v2195, %v2188
    %v2805 = vpack.c.b16 %v2196, %v2189
    %v2806 = vpack.c.b16 %v2197, %v2190
    %v2807 = vpack.c.b16 %v2198, %v2191
    %v2808 = vpack.c.b16 %v2206, %v2199
    %v2809 = vpack.c.b16 %v2207, %v2200
    %v2810 = vpack.c.b16 %v2208, %v2201
    %v2811 = vpack.c.b16 %v2209, %v2202
    %v2812 = vpack.c.b16 %v2210, %v2203
    %v2813 = vpack.c.b16 %v2211, %v2204
    %v2814 = vpack.c.b16 %v2212, %v2205
    %v2815 = vpack.c.b16 %v2220, %v2213
    %v2816 = vpack.c.b16 %v2221, %v2214
    %v2817 = vpack.c.b16 %v2222, %v2215
    %v2818 = vpack.c.b16 %v2223, %v2216
    %v2819 = vpack.c.b16 %v2224, %v2217
    %v2820 = vpack.c.b16 %v2225, %v2218
    %v2821 = vpack.c.b16 %v2226, %v2219
    %v2822 = vpack.c.b16 %v2234, %v2227
    %v2823 = vpack.c.b16 %v2235, %v2228
    %v2824 = vpack.c.b16 %v2236, %v2229
    %v2825 = vpack.c.b16 %v2237, %v2230
    %v2826 = vpack.c.b16 %v2238, %v2231
    %v2827 = vpack.c.b16 %v2239, %v2232
    %v2828 = vpack.c.b16 %v2240, %v2233
    %v2829 = vpack.c.b16 %v2248, %v2241
    %v2830 = vpack.c.b16 %v2249, %v2242
    %v2831 = vpack.c.b16 %v2250, %v2243
    %v2832 = vpack.c.b16 %v2251, %v2244
    %v2833 = vpack.c.b16 %v2252, %v2245
    %v2834 = vpack.c.b16 %v2253, %v2246
    %v2835 = vpack.c.b16 %v2254, %v2247
    %v2836 = vpack.c.b16 %v2262, %v2255
    %v2837 = vpack.c.b16 %v2263, %v2256
    %v2838 = vpack.c.b16 %v2264, %v2257
    %v2839 = vpack.c.b16 %v2265, %v2258
    %v2840 = vpack.c.b16 %v2266, %v2259
    %v2841 = vpack.c.b16 %v2267, %v2260
    %v2842 = vpack.c.b16 %v2268, %v2261
    %v2843 = vpack.c.b16 %v2276, %v2269
    %v2844 = vpack.c.b16 %v2277, %v2270
    %v2845 = vpack.c.b16 %v2278, %v2271
    %v2846 = vpack.c.b16 %v2279, %v2272
    %v2847 = vpack.c.b16 %v2280, %v2273
    %v2848 = vpack.c.b16 %v2281, %v2274
    %v2849 = vpack.c.b16 %v2282, %v2275
    %v2850 = vpack.c.b16 %v2290, %v2283
    %v2851 = vpack.c.b16 %v2291, %v2284
    %v2852 = vpack.c.b16 %v2292, %v2285
    %v2853 = vpack.c.b16 %v2293, %v2286
    %v2854 = vpack.c.b16 %v2294, %v2287
    %v2855 = vpack.c.b16 %v2295, %v2288
    %v2856 = vpack.c.b16 %v2296, %v2289
    %v2857 = vpack.c.b16 %v2304, %v2297
    %v2858 = vpack.c.b16 %v2305, %v2298
    %v2859 = vpack.c.b16 %v2306, %v2299
    %v2860 = vpack.c.b16 %v2307, %v2300
    %v2861 = vpack.c.b16 %v2308, %v2301
    %v2862 = vpack.c.b16 %v2309, %v2302
    %v2863 = vpack.c.b16 %v2310, %v2303
    %v2864 = vpack.c.b16 %v2318, %v2311
    %v2865 = vpack.c.b16 %v2319, %v2312
    %v2866 = vpack.c.b16 %v2320, %v2313
    %v2867 = vpack.c.b16 %v2321, %v2314
    %v2868 = vpack.c.b16 %v2322, %v2315
    %v2869 = vpack.c.b16 %v2323, %v2316
    %v2870 = vpack.c.b16 %v2324, %v2317
    %v2871 = vpack.c.b16 %v2332, %v2325
    %v2872 = vpack.c.b16 %v2333, %v2326
    %v2873 = vpack.c.b16 %v2334, %v2327
    %v2874 = vpack.c.b16 %v2335, %v2328
    %v2875 = vpack.c.b16 %v2336, %v2329
    %v2876 = vpack.c.b16 %v2337, %v2330
    %v2877 = vpack.c.b16 %v2338, %v2331
    %v2878 = vpack.c.b16 %v2346, %v2339
    %v2879 = vpack.c.b16 %v2347, %v2340
    %v2880 = vpack.c.b16 %v2348, %v2341
    %v2881 = vpack.c.b16 %v2349, %v2342
    %v2882 = vpack.c.b16 %v2350, %v2343
    %v2883 = vpack.c.b16 %v2351, %v2344
    %v2884 = vpack.c.b16 %v2352, %v2345
    %v2885 = vpack.c.b16 %v2360, %v2353
    %v2886 = vpack.c.b16 %v2361, %v2354
    %v2887 = vpack.c.b16 %v2362, %v2355
    %v2888 = vpack.c.b16 %v2363, %v2356
    %v2889 = vpack.c.b16 %v2364, %v2357
    %v2890 = vpack.c.b16 %v2365, %v2358
    %v2891 = vpack.c.b16 %v2366, %v2359
    %v2892 = vpack.c.b16 %v2374, %v2367
    %v2893 = vpack.c.b16 %v2375, %v2368
    %v2894 = vpack.c.b16 %v2376, %v2369
    %v2895 = vpack.c.b16 %v2377, %v2370
    %v2896 = vpack.c.b16 %v2378, %v2371
    %v2897 = vpack.c.b16 %v2379, %v2372
    %v2898 = vpack.c.b16 %v2380, %v2373
    %v2899 = vpack.c.b16 %v2388, %v2381
    %v2900 = vpack.c.b16 %v2389, %v2382
    %v2901 = vpack.c.b16 %v2390, %v2383
    %v2902 = vpack.c.b16 %v2391, %v2384
    %v2903 = vpack.c.b16 %v2392, %v2385
    %v2904 = vpack.c.b16 %v2393, %v2386
    %v2905 = vpack.c.b16 %v2394, %v2387
    %v2906 = vpack.c.b16 %v2402, %v2395
    %v2907 = vpack.c.b16 %v2403, %v2396
    %v2908 = vpack.c.b16 %v2404, %v2397
    %v2909 = vpack.c.b16 %v2405, %v2398
    %v2910 = vpack.c.b16 %v2406, %v2399
    %v2911 = vpack.c.b16 %v2407, %v2400
    %v2912 = vpack.c.b16 %v2408, %v2401
    %v2913 = vpack.c.b16 %v2416, %v2409
    %v2914 = vpack.c.b16 %v2417, %v2410
    %v2915 = vpack.c.b16 %v2418, %v2411
    %v2916 = vpack.c.b16 %v2419, %v2412
    %v2917 = vpack.c.b16 %v2420, %v2413
    %v2918 = vpack.c.b16 %v2421, %v2414
    %v2919 = vpack.c.b16 %v2422, %v2415
    %v2920 = vpack.c.b16 %v2430, %v2423
    %v2921 = vpack.c.b16 %v2431, %v2424
    %v2922 = vpack.c.b16 %v2432, %v2425
    %v2923 = vpack.c.b16 %v2433, %v2426
    %v2924 = vpack.c.b16 %v2434, %v2427
    %v2925 = vpack.c.b16 %v2435, %v2428
    %v2926 = vpack.c.b16 %v2436, %v2429
    %v2927 = vpack.c.b16 %v2444, %v2437
    %v2928 = vpack.c.b16 %v2445, %v2438
    %v2929 = vpack.c.b16 %v2446, %v2439
    %v2930 = vpack.c.b16 %v2447, %v2440
    %v2931 = vpack.c.b16 %v2448, %v2441
    %v2932 = vpack.c.b16 %v2449, %v2442
    %v2933 = vpack.c.b16 %v2450, %v2443
    %v2934 = vpack.c.b16 %v2458, %v2451
    %v2935 = vpack.c.b16 %v2459, %v2452
    %v2936 = vpack.c.b16 %v2460, %v2453
    %v2937 = vpack.c.b16 %v2461, %v2454
    %v2938 = vpack.c.b16 %v2462, %v2455
    %v2939 = vpack.c.b16 %v2463, %v2456
    %v2940 = vpack.c.b16 %v2464, %v2457
    %v2941 = vpack.c.b16 %v2472, %v2465
    %v2942 = vpack.c.b16 %v2473, %v2466
    %v2943 = vpack.c.b16 %v2474, %v2467
    %v2944 = vpack.c.b16 %v2475, %v2468
    %v2945 = vpack.c.b16 %v2476, %v2469
    %v2946 = vpack.c.b16 %v2477, %v2470
    %v2947 = vpack.c.b16 %v2478, %v2471
    %v2948 = vpack.c.b16 %v2486, %v2479
    %v2949 = vpack.c.b16 %v2487, %v2480
    %v2950 = vpack.c.b16 %v2488, %v2481
    %v2951 = vpack.c.b16 %v2489, %v2482
    %v2952 = vpack.c.b16 %v2490, %v2483
    %v2953 = vpack.c.b16 %v2491, %v2484
    %v2954 = vpack.c.b16 %v2492, %v2485
    %v2955 = vpack.c.b16 %v2500, %v2493
    %v2956 = vpack.c.b16 %v2501, %v2494
    %v2957 = vpack.c.b16 %v2502, %v2495
    %v2958 = vpack.c.b16 %v2503, %v2496
    %v2959 = vpack.c.b16 %v2504, %v2497
    %v2960 = vpack.c.b16 %v2505, %v2498
    %v2961 = vpack.c.b16 %v2506, %v2499
    %v2962 = vpack.c.b16 %v2514, %v2507
    %v2963 = vpack.c.b16 %v2515, %v2508
    %v2964 = vpack.c.b16 %v2516, %v2509
    %v2965 = vpack.c.b16 %v2517, %v2510
    %v2966 = vpack.c.b16 %v2518, %v2511
    %v2967 = vpack.c.b16 %v2519, %v2512
    %v2968 = vpack.c.b16 %v2520, %v2513
    %3417 = vmatprep.subr.bf16.mxu0 %v2571
    %3418 = vmatpush1.bf16.msra.mxu0 %v2570
    %3419 = vmatprep.subr.bf16.mxu0 %v2564
    %3420 = vmatpush1.bf16.msra.mxu0 %v2563
    %3421 = vmatprep.subr.bf16.mxu0 %v2557
    %3422 = vmatpush1.bf16.msra.mxu0 %v2556
    %3423 = vmatprep.subr.bf16.mxu0 %v2550
    %3424 = vmatpush1.bf16.msra.mxu0 %v2549
    %3425 = vmatprep.subr.bf16.mxu0 %v2543
    %3426 = vmatpush1.bf16.msra.mxu0 %v2542
    %3427 = vmatprep.subr.bf16.mxu0 %v2536
    %3428 = vmatpush1.bf16.msra.mxu0 %v2535
    %3429 = vmatprep.subr.bf16.mxu0 %v2529
    %3430 = vmatpush1.bf16.msra.mxu0 %v2528
    %3431 = vmatprep.subr.bf16.mxu0 %v2522
    %3432 = vmatpush1.bf16.msra.mxu0 %v2521
    %3433 = vmatprep.subr.bf16.mxu0 %v2627
    %3434 = vmatpush2.bf16.msra.mxu0 %v2626
    %3435 = vmatprep.subr.bf16.mxu0 %v2620
    %3436 = vmatpush2.bf16.msra.mxu0 %v2619
    %3437 = vmatprep.subr.bf16.mxu0 %v2613
    %3438 = vmatpush2.bf16.msra.mxu0 %v2612
    %3439 = vmatprep.subr.bf16.mxu0 %v2606
    %3440 = vmatpush2.bf16.msra.mxu0 %v2605
    %3441 = vmatprep.subr.bf16.mxu0 %v2599
    %3442 = vmatpush2.bf16.msra.mxu0 %v2598
    %3443 = vmatprep.subr.bf16.mxu0 %v2592
    %3444 = vmatpush2.bf16.msra.mxu0 %v2591
    %3445 = vmatprep.subr.bf16.mxu0 %v2585
    %3446 = vmatpush2.bf16.msra.mxu0 %v2584
    %3447 = vmatprep.subr.bf16.mxu0 %v2578
    %3448 = vmatpush2.bf16.msra.mxu0 %v2577
    %3449 = vmatprep.mubr.bf16.mxu0 %v557
    %3450 = vmatmul.mubr.bf16.gmra.mxu0 %v556
    %v3451 = vpop.f32.mrf.mxu0
    %v3452 = vadd.f32 %v1081, %v3451
    %v3453 = vpop.f32.mrf.mxu0
    %v3454 = vadd.f32 %v1085, %v3453
    %v3455 = vpop.f32.mrf.mxu0
    %v3456 = vpop.f32.mrf.mxu0
    %3457 = vdwg.mxu0
    %3458 = vmatprep.subr.bf16.mxu0 %v2683
    %3459 = vmatpush1.bf16.msra.mxu0 %v2682
    %3460 = vmatprep.subr.bf16.mxu0 %v2676
    %3461 = vmatpush1.bf16.msra.mxu0 %v2675
    %3462 = vmatprep.subr.bf16.mxu0 %v2669
    %3463 = vmatpush1.bf16.msra.mxu0 %v2668
    %3464 = vmatprep.subr.bf16.mxu0 %v2662
    %3465 = vmatpush1.bf16.msra.mxu0 %v2661
    %3466 = vmatprep.subr.bf16.mxu0 %v2655
    %3467 = vmatpush1.bf16.msra.mxu0 %v2654
    %3468 = vmatprep.subr.bf16.mxu0 %v2648
    %3469 = vmatpush1.bf16.msra.mxu0 %v2647
    %3470 = vmatprep.subr.bf16.mxu0 %v2641
    %3471 = vmatpush1.bf16.msra.mxu0 %v2640
    %3472 = vmatprep.subr.bf16.mxu0 %v2634
    %3473 = vmatpush1.bf16.msra.mxu0 %v2633
    %3474 = vmatprep.subr.bf16.mxu0 %v2739
    %3475 = vmatpush2.bf16.msra.mxu0 %v2738
    %3476 = vmatprep.subr.bf16.mxu0 %v2732
    %3477 = vmatpush2.bf16.msra.mxu0 %v2731
    %3478 = vmatprep.subr.bf16.mxu0 %v2725
    %3479 = vmatpush2.bf16.msra.mxu0 %v2724
    %3480 = vmatprep.subr.bf16.mxu0 %v2718
    %3481 = vmatpush2.bf16.msra.mxu0 %v2717
    %3482 = vmatprep.subr.bf16.mxu0 %v2711
    %3483 = vmatpush2.bf16.msra.mxu0 %v2710
    %3484 = vmatprep.subr.bf16.mxu0 %v2704
    %3485 = vmatpush2.bf16.msra.mxu0 %v2703
    %3486 = vmatprep.subr.bf16.mxu0 %v2697
    %3487 = vmatpush2.bf16.msra.mxu0 %v2696
    %3488 = vmatprep.subr.bf16.mxu0 %v2690
    %3489 = vmatpush2.bf16.msra.mxu0 %v2689
    %3490 = vmatprep.mubr.bf16.mxu0 %v559
    %3491 = vmatmul.mubr.bf16.gmra.mxu0 %v558
    %v3492 = vpop.f32.mrf.mxu0
    %v3493 = vadd.f32 %v3452, %v3492
    %v3494 = vpop.f32.mrf.mxu0
    %v3495 = vadd.f32 %v3454, %v3494
    %v3496 = vpop.f32.mrf.mxu0
    %v3497 = vpop.f32.mrf.mxu0
    %3498 = vdwg.mxu0
    %3499 = vmatprep.subr.bf16.mxu0 %v2795
    %3500 = vmatpush1.bf16.msra.mxu0 %v2794
    %3501 = vmatprep.subr.bf16.mxu0 %v2788
    %3502 = vmatpush1.bf16.msra.mxu0 %v2787
    %3503 = vmatprep.subr.bf16.mxu0 %v2781
    %3504 = vmatpush1.bf16.msra.mxu0 %v2780
    %3505 = vmatprep.subr.bf16.mxu0 %v2774
    %3506 = vmatpush1.bf16.msra.mxu0 %v2773
    %3507 = vmatprep.subr.bf16.mxu0 %v2767
    %3508 = vmatpush1.bf16.msra.mxu0 %v2766
    %3509 = vmatprep.subr.bf16.mxu0 %v2760
    %3510 = vmatpush1.bf16.msra.mxu0 %v2759
    %3511 = vmatprep.subr.bf16.mxu0 %v2753
    %3512 = vmatpush1.bf16.msra.mxu0 %v2752
    %3513 = vmatprep.subr.bf16.mxu0 %v2746
    %3514 = vmatpush1.bf16.msra.mxu0 %v2745
    %3515 = vmatprep.subr.bf16.mxu0 %v2851
    %3516 = vmatpush2.bf16.msra.mxu0 %v2850
    %3517 = vmatprep.subr.bf16.mxu0 %v2844
    %3518 = vmatpush2.bf16.msra.mxu0 %v2843
    %3519 = vmatprep.subr.bf16.mxu0 %v2837
    %3520 = vmatpush2.bf16.msra.mxu0 %v2836
    %3521 = vmatprep.subr.bf16.mxu0 %v2830
    %3522 = vmatpush2.bf16.msra.mxu0 %v2829
    %3523 = vmatprep.subr.bf16.mxu0 %v2823
    %3524 = vmatpush2.bf16.msra.mxu0 %v2822
    %3525 = vmatprep.subr.bf16.mxu0 %v2816
    %3526 = vmatpush2.bf16.msra.mxu0 %v2815
    %3527 = vmatprep.subr.bf16.mxu0 %v2809
    %3528 = vmatpush2.bf16.msra.mxu0 %v2808
    %3529 = vmatprep.subr.bf16.mxu0 %v2802
    %3530 = vmatpush2.bf16.msra.mxu0 %v2801
    %3531 = vmatprep.mubr.bf16.mxu0 %v561
    %3532 = vmatmul.mubr.bf16.gmra.mxu0 %v560
    %v3533 = vpop.f32.mrf.mxu0
    %v3534 = vadd.f32 %v3493, %v3533
    %v3535 = vpop.f32.mrf.mxu0
    %v3536 = vadd.f32 %v3495, %v3535
    %v3537 = vpop.f32.mrf.mxu0
    %v3538 = vpop.f32.mrf.mxu0
    %3539 = vdwg.mxu0
    %3540 = vmatprep.subr.bf16.mxu0 %v2907
    %3541 = vmatpush1.bf16.msra.mxu0 %v2906
    %3542 = vmatprep.subr.bf16.mxu0 %v2900
    %3543 = vmatpush1.bf16.msra.mxu0 %v2899
    %3544 = vmatprep.subr.bf16.mxu0 %v2893
    %3545 = vmatpush1.bf16.msra.mxu0 %v2892
    %3546 = vmatprep.subr.bf16.mxu0 %v2886
    %3547 = vmatpush1.bf16.msra.mxu0 %v2885
    %3548 = vmatprep.subr.bf16.mxu0 %v2879
    %3549 = vmatpush1.bf16.msra.mxu0 %v2878
    %3550 = vmatprep.subr.bf16.mxu0 %v2872
    %3551 = vmatpush1.bf16.msra.mxu0 %v2871
    %3552 = vmatprep.subr.bf16.mxu0 %v2865
    %3553 = vmatpush1.bf16.msra.mxu0 %v2864
    %3554 = vmatprep.subr.bf16.mxu0 %v2858
    %3555 = vmatpush1.bf16.msra.mxu0 %v2857
    %3556 = vmatprep.subr.bf16.mxu0 %v2963
    %3557 = vmatpush2.bf16.msra.mxu0 %v2962
    %3558 = vmatprep.subr.bf16.mxu0 %v2956
    %3559 = vmatpush2.bf16.msra.mxu0 %v2955
    %3560 = vmatprep.subr.bf16.mxu0 %v2949
    %3561 = vmatpush2.bf16.msra.mxu0 %v2948
    %3562 = vmatprep.subr.bf16.mxu0 %v2942
    %3563 = vmatpush2.bf16.msra.mxu0 %v2941
    %3564 = vmatprep.subr.bf16.mxu0 %v2935
    %3565 = vmatpush2.bf16.msra.mxu0 %v2934
    %3566 = vmatprep.subr.bf16.mxu0 %v2928
    %3567 = vmatpush2.bf16.msra.mxu0 %v2927
    %3568 = vmatprep.subr.bf16.mxu0 %v2921
    %3569 = vmatpush2.bf16.msra.mxu0 %v2920
    %3570 = vmatprep.subr.bf16.mxu0 %v2914
    %3571 = vmatpush2.bf16.msra.mxu0 %v2913
    %3572 = vmatprep.mubr.bf16.mxu0 %v563
    %3573 = vmatmul.mubr.bf16.gmra.mxu0 %v562
    %v3574 = vpop.f32.mrf.mxu0
    %v3575 = vadd.f32 %v3534, %v3574
    %v3576 = vpop.f32.mrf.mxu0
    %v3577 = vadd.f32 %v3536, %v3576
    %v3578 = vpop.f32.mrf.mxu0
    %v3579 = vpop.f32.mrf.mxu0
    %3580 = vdwg.mxu0
    %3581 = vmatprep.subr.bf16.mxu0 %v2573
    %3582 = vmatpush1.bf16.msra.mxu0 %v2572
    %3583 = vmatprep.subr.bf16.mxu0 %v2566
    %3584 = vmatpush1.bf16.msra.mxu0 %v2565
    %3585 = vmatprep.subr.bf16.mxu0 %v2559
    %3586 = vmatpush1.bf16.msra.mxu0 %v2558
    %3587 = vmatprep.subr.bf16.mxu0 %v2552
    %3588 = vmatpush1.bf16.msra.mxu0 %v2551
    %3589 = vmatprep.subr.bf16.mxu0 %v2545
    %3590 = vmatpush1.bf16.msra.mxu0 %v2544
    %3591 = vmatprep.subr.bf16.mxu0 %v2538
    %3592 = vmatpush1.bf16.msra.mxu0 %v2537
    %3593 = vmatprep.subr.bf16.mxu0 %v2531
    %3594 = vmatpush1.bf16.msra.mxu0 %v2530
    %3595 = vmatprep.subr.bf16.mxu0 %v2524
    %3596 = vmatpush1.bf16.msra.mxu0 %v2523
    %3597 = vmatprep.subr.bf16.mxu0 %v2629
    %3598 = vmatpush2.bf16.msra.mxu0 %v2628
    %3599 = vmatprep.subr.bf16.mxu0 %v2622
    %3600 = vmatpush2.bf16.msra.mxu0 %v2621
    %3601 = vmatprep.subr.bf16.mxu0 %v2615
    %3602 = vmatpush2.bf16.msra.mxu0 %v2614
    %3603 = vmatprep.subr.bf16.mxu0 %v2608
    %3604 = vmatpush2.bf16.msra.mxu0 %v2607
    %3605 = vmatprep.subr.bf16.mxu0 %v2601
    %3606 = vmatpush2.bf16.msra.mxu0 %v2600
    %3607 = vmatprep.subr.bf16.mxu0 %v2594
    %3608 = vmatpush2.bf16.msra.mxu0 %v2593
    %3609 = vmatprep.subr.bf16.mxu0 %v2587
    %3610 = vmatpush2.bf16.msra.mxu0 %v2586
    %3611 = vmatprep.subr.bf16.mxu0 %v2580
    %3612 = vmatpush2.bf16.msra.mxu0 %v2579
    %3613 = vmatprep.mubr.bf16.mxu0 %v557
    %3614 = vmatmul.mubr.bf16.gmra.mxu0 %v556
    %v3615 = vpop.f32.mrf.mxu0
    %v3616 = vadd.f32 %v1089, %v3615
    %v3617 = vpop.f32.mrf.mxu0
    %v3618 = vadd.f32 %v1093, %v3617
    %v3619 = vpop.f32.mrf.mxu0
    %v3620 = vpop.f32.mrf.mxu0
    %3621 = vdwg.mxu0
    %3622 = vmatprep.subr.bf16.mxu0 %v2685
    %3623 = vmatpush1.bf16.msra.mxu0 %v2684
    %3624 = vmatprep.subr.bf16.mxu0 %v2678
    %3625 = vmatpush1.bf16.msra.mxu0 %v2677
    %3626 = vmatprep.subr.bf16.mxu0 %v2671
    %3627 = vmatpush1.bf16.msra.mxu0 %v2670
    %3628 = vmatprep.subr.bf16.mxu0 %v2664
    %3629 = vmatpush1.bf16.msra.mxu0 %v2663
    %3630 = vmatprep.subr.bf16.mxu0 %v2657
    %3631 = vmatpush1.bf16.msra.mxu0 %v2656
    %3632 = vmatprep.subr.bf16.mxu0 %v2650
    %3633 = vmatpush1.bf16.msra.mxu0 %v2649
    %3634 = vmatprep.subr.bf16.mxu0 %v2643
    %3635 = vmatpush1.bf16.msra.mxu0 %v2642
    %3636 = vmatprep.subr.bf16.mxu0 %v2636
    %3637 = vmatpush1.bf16.msra.mxu0 %v2635
    %3638 = vmatprep.subr.bf16.mxu0 %v2741
    %3639 = vmatpush2.bf16.msra.mxu0 %v2740
    %3640 = vmatprep.subr.bf16.mxu0 %v2734
    %3641 = vmatpush2.bf16.msra.mxu0 %v2733
    %3642 = vmatprep.subr.bf16.mxu0 %v2727
    %3643 = vmatpush2.bf16.msra.mxu0 %v2726
    %3644 = vmatprep.subr.bf16.mxu0 %v2720
    %3645 = vmatpush2.bf16.msra.mxu0 %v2719
    %3646 = vmatprep.subr.bf16.mxu0 %v2713
    %3647 = vmatpush2.bf16.msra.mxu0 %v2712
    %3648 = vmatprep.subr.bf16.mxu0 %v2706
    %3649 = vmatpush2.bf16.msra.mxu0 %v2705
    %3650 = vmatprep.subr.bf16.mxu0 %v2699
    %3651 = vmatpush2.bf16.msra.mxu0 %v2698
    %3652 = vmatprep.subr.bf16.mxu0 %v2692
    %3653 = vmatpush2.bf16.msra.mxu0 %v2691
    %3654 = vmatprep.mubr.bf16.mxu0 %v559
    %3655 = vmatmul.mubr.bf16.gmra.mxu0 %v558
    %v3656 = vpop.f32.mrf.mxu0
    %v3657 = vadd.f32 %v3616, %v3656
    %v3658 = vpop.f32.mrf.mxu0
    %v3659 = vadd.f32 %v3618, %v3658
    %v3660 = vpop.f32.mrf.mxu0
    %v3661 = vpop.f32.mrf.mxu0
    %3662 = vdwg.mxu0
    %3663 = vmatprep.subr.bf16.mxu0 %v2797
    %3664 = vmatpush1.bf16.msra.mxu0 %v2796
    %3665 = vmatprep.subr.bf16.mxu0 %v2790
    %3666 = vmatpush1.bf16.msra.mxu0 %v2789
    %3667 = vmatprep.subr.bf16.mxu0 %v2783
    %3668 = vmatpush1.bf16.msra.mxu0 %v2782
    %3669 = vmatprep.subr.bf16.mxu0 %v2776
    %3670 = vmatpush1.bf16.msra.mxu0 %v2775
    %3671 = vmatprep.subr.bf16.mxu0 %v2769
    %3672 = vmatpush1.bf16.msra.mxu0 %v2768
    %3673 = vmatprep.subr.bf16.mxu0 %v2762
    %3674 = vmatpush1.bf16.msra.mxu0 %v2761
    %3675 = vmatprep.subr.bf16.mxu0 %v2755
    %3676 = vmatpush1.bf16.msra.mxu0 %v2754
    %3677 = vmatprep.subr.bf16.mxu0 %v2748
    %3678 = vmatpush1.bf16.msra.mxu0 %v2747
    %3679 = vmatprep.subr.bf16.mxu0 %v2853
    %3680 = vmatpush2.bf16.msra.mxu0 %v2852
    %3681 = vmatprep.subr.bf16.mxu0 %v2846
    %3682 = vmatpush2.bf16.msra.mxu0 %v2845
    %3683 = vmatprep.subr.bf16.mxu0 %v2839
    %3684 = vmatpush2.bf16.msra.mxu0 %v2838
    %3685 = vmatprep.subr.bf16.mxu0 %v2832
    %3686 = vmatpush2.bf16.msra.mxu0 %v2831
    %3687 = vmatprep.subr.bf16.mxu0 %v2825
    %3688 = vmatpush2.bf16.msra.mxu0 %v2824
    %3689 = vmatprep.subr.bf16.mxu0 %v2818
    %3690 = vmatpush2.bf16.msra.mxu0 %v2817
    %3691 = vmatprep.subr.bf16.mxu0 %v2811
    %3692 = vmatpush2.bf16.msra.mxu0 %v2810
    %3693 = vmatprep.subr.bf16.mxu0 %v2804
    %3694 = vmatpush2.bf16.msra.mxu0 %v2803
    %3695 = vmatprep.mubr.bf16.mxu0 %v561
    %3696 = vmatmul.mubr.bf16.gmra.mxu0 %v560
    %v3697 = vpop.f32.mrf.mxu0
    %v3698 = vadd.f32 %v3657, %v3697
    %v3699 = vpop.f32.mrf.mxu0
    %v3700 = vadd.f32 %v3659, %v3699
    %v3701 = vpop.f32.mrf.mxu0
    %v3702 = vpop.f32.mrf.mxu0
    %3703 = vdwg.mxu0
    %3704 = vmatprep.subr.bf16.mxu0 %v2909
    %3705 = vmatpush1.bf16.msra.mxu0 %v2908
    %3706 = vmatprep.subr.bf16.mxu0 %v2902
    %3707 = vmatpush1.bf16.msra.mxu0 %v2901
    %3708 = vmatprep.subr.bf16.mxu0 %v2895
    %3709 = vmatpush1.bf16.msra.mxu0 %v2894
    %3710 = vmatprep.subr.bf16.mxu0 %v2888
    %3711 = vmatpush1.bf16.msra.mxu0 %v2887
    %3712 = vmatprep.subr.bf16.mxu0 %v2881
    %3713 = vmatpush1.bf16.msra.mxu0 %v2880
    %3714 = vmatprep.subr.bf16.mxu0 %v2874
    %3715 = vmatpush1.bf16.msra.mxu0 %v2873
    %3716 = vmatprep.subr.bf16.mxu0 %v2867
    %3717 = vmatpush1.bf16.msra.mxu0 %v2866
    %3718 = vmatprep.subr.bf16.mxu0 %v2860
    %3719 = vmatpush1.bf16.msra.mxu0 %v2859
    %3720 = vmatprep.subr.bf16.mxu0 %v2965
    %3721 = vmatpush2.bf16.msra.mxu0 %v2964
    %3722 = vmatprep.subr.bf16.mxu0 %v2958
    %3723 = vmatpush2.bf16.msra.mxu0 %v2957
    %3724 = vmatprep.subr.bf16.mxu0 %v2951
    %3725 = vmatpush2.bf16.msra.mxu0 %v2950
    %3726 = vmatprep.subr.bf16.mxu0 %v2944
    %3727 = vmatpush2.bf16.msra.mxu0 %v2943
    %3728 = vmatprep.subr.bf16.mxu0 %v2937
    %3729 = vmatpush2.bf16.msra.mxu0 %v2936
    %3730 = vmatprep.subr.bf16.mxu0 %v2930
    %3731 = vmatpush2.bf16.msra.mxu0 %v2929
    %3732 = vmatprep.subr.bf16.mxu0 %v2923
    %3733 = vmatpush2.bf16.msra.mxu0 %v2922
    %3734 = vmatprep.subr.bf16.mxu0 %v2916
    %3735 = vmatpush2.bf16.msra.mxu0 %v2915
    %3736 = vmatprep.mubr.bf16.mxu0 %v563
    %3737 = vmatmul.mubr.bf16.gmra.mxu0 %v562
    %v3738 = vpop.f32.mrf.mxu0
    %v3739 = vadd.f32 %v3698, %v3738
    %v3740 = vpop.f32.mrf.mxu0
    %v3741 = vadd.f32 %v3700, %v3740
    %v3742 = vpop.f32.mrf.mxu0
    %v3743 = vpop.f32.mrf.mxu0
    %3744 = vdwg.mxu0
    %3745 = vmatprep.subr.bf16.mxu0 %v2575
    %3746 = vmatpush1.bf16.msra.mxu0 %v2574
    %3747 = vmatprep.subr.bf16.mxu0 %v2568
    %3748 = vmatpush1.bf16.msra.mxu0 %v2567
    %3749 = vmatprep.subr.bf16.mxu0 %v2561
    %3750 = vmatpush1.bf16.msra.mxu0 %v2560
    %3751 = vmatprep.subr.bf16.mxu0 %v2554
    %3752 = vmatpush1.bf16.msra.mxu0 %v2553
    %3753 = vmatprep.subr.bf16.mxu0 %v2547
    %3754 = vmatpush1.bf16.msra.mxu0 %v2546
    %3755 = vmatprep.subr.bf16.mxu0 %v2540
    %3756 = vmatpush1.bf16.msra.mxu0 %v2539
    %3757 = vmatprep.subr.bf16.mxu0 %v2533
    %3758 = vmatpush1.bf16.msra.mxu0 %v2532
    %3759 = vmatprep.subr.bf16.mxu0 %v2526
    %3760 = vmatpush1.bf16.msra.mxu0 %v2525
    %3761 = vmatprep.subr.bf16.mxu0 %v2631
    %3762 = vmatpush2.bf16.msra.mxu0 %v2630
    %3763 = vmatprep.subr.bf16.mxu0 %v2624
    %3764 = vmatpush2.bf16.msra.mxu0 %v2623
    %3765 = vmatprep.subr.bf16.mxu0 %v2617
    %3766 = vmatpush2.bf16.msra.mxu0 %v2616
    %3767 = vmatprep.subr.bf16.mxu0 %v2610
    %3768 = vmatpush2.bf16.msra.mxu0 %v2609
    %3769 = vmatprep.subr.bf16.mxu0 %v2603
    %3770 = vmatpush2.bf16.msra.mxu0 %v2602
    %3771 = vmatprep.subr.bf16.mxu0 %v2596
    %3772 = vmatpush2.bf16.msra.mxu0 %v2595
    %3773 = vmatprep.subr.bf16.mxu0 %v2589
    %3774 = vmatpush2.bf16.msra.mxu0 %v2588
    %3775 = vmatprep.subr.bf16.mxu0 %v2582
    %3776 = vmatpush2.bf16.msra.mxu0 %v2581
    %3777 = vmatprep.mubr.bf16.mxu0 %v557
    %3778 = vmatmul.mubr.bf16.gmra.mxu0 %v556
    %v3779 = vpop.f32.mrf.mxu0
    %v3780 = vadd.f32 %v1097, %v3779
    %v3781 = vpop.f32.mrf.mxu0
    %v3782 = vadd.f32 %v1101, %v3781
    %v3783 = vpop.f32.mrf.mxu0
    %v3784 = vpop.f32.mrf.mxu0
    %3785 = vdwg.mxu0
    %3786 = vmatprep.subr.bf16.mxu0 %v2687
    %3787 = vmatpush1.bf16.msra.mxu0 %v2686
    %3788 = vmatprep.subr.bf16.mxu0 %v2680
    %3789 = vmatpush1.bf16.msra.mxu0 %v2679
    %3790 = vmatprep.subr.bf16.mxu0 %v2673
    %3791 = vmatpush1.bf16.msra.mxu0 %v2672
    %3792 = vmatprep.subr.bf16.mxu0 %v2666
    %3793 = vmatpush1.bf16.msra.mxu0 %v2665
    %3794 = vmatprep.subr.bf16.mxu0 %v2659
    %3795 = vmatpush1.bf16.msra.mxu0 %v2658
    %3796 = vmatprep.subr.bf16.mxu0 %v2652
    %3797 = vmatpush1.bf16.msra.mxu0 %v2651
    %3798 = vmatprep.subr.bf16.mxu0 %v2645
    %3799 = vmatpush1.bf16.msra.mxu0 %v2644
    %3800 = vmatprep.subr.bf16.mxu0 %v2638
    %3801 = vmatpush1.bf16.msra.mxu0 %v2637
    %3802 = vmatprep.subr.bf16.mxu0 %v2743
    %3803 = vmatpush2.bf16.msra.mxu0 %v2742
    %3804 = vmatprep.subr.bf16.mxu0 %v2736
    %3805 = vmatpush2.bf16.msra.mxu0 %v2735
    %3806 = vmatprep.subr.bf16.mxu0 %v2729
    %3807 = vmatpush2.bf16.msra.mxu0 %v2728
    %3808 = vmatprep.subr.bf16.mxu0 %v2722
    %3809 = vmatpush2.bf16.msra.mxu0 %v2721
    %3810 = vmatprep.subr.bf16.mxu0 %v2715
    %3811 = vmatpush2.bf16.msra.mxu0 %v2714
    %3812 = vmatprep.subr.bf16.mxu0 %v2708
    %3813 = vmatpush2.bf16.msra.mxu0 %v2707
    %3814 = vmatprep.subr.bf16.mxu0 %v2701
    %3815 = vmatpush2.bf16.msra.mxu0 %v2700
    %3816 = vmatprep.subr.bf16.mxu0 %v2694
    %3817 = vmatpush2.bf16.msra.mxu0 %v2693
    %3818 = vmatprep.mubr.bf16.mxu0 %v559
    %3819 = vmatmul.mubr.bf16.gmra.mxu0 %v558
    %v3820 = vpop.f32.mrf.mxu0
    %v3821 = vadd.f32 %v3780, %v3820
    %v3822 = vpop.f32.mrf.mxu0
    %v3823 = vadd.f32 %v3782, %v3822
    %v3824 = vpop.f32.mrf.mxu0
    %v3825 = vpop.f32.mrf.mxu0
    %3826 = vdwg.mxu0
    %3827 = vmatprep.subr.bf16.mxu0 %v2799
    %3828 = vmatpush1.bf16.msra.mxu0 %v2798
    %3829 = vmatprep.subr.bf16.mxu0 %v2792
    %3830 = vmatpush1.bf16.msra.mxu0 %v2791
    %3831 = vmatprep.subr.bf16.mxu0 %v2785
    %3832 = vmatpush1.bf16.msra.mxu0 %v2784
    %3833 = vmatprep.subr.bf16.mxu0 %v2778
    %3834 = vmatpush1.bf16.msra.mxu0 %v2777
    %3835 = vmatprep.subr.bf16.mxu0 %v2771
    %3836 = vmatpush1.bf16.msra.mxu0 %v2770
    %3837 = vmatprep.subr.bf16.mxu0 %v2764
    %3838 = vmatpush1.bf16.msra.mxu0 %v2763
    %3839 = vmatprep.subr.bf16.mxu0 %v2757
    %3840 = vmatpush1.bf16.msra.mxu0 %v2756
    %3841 = vmatprep.subr.bf16.mxu0 %v2750
    %3842 = vmatpush1.bf16.msra.mxu0 %v2749
    %3843 = vmatprep.subr.bf16.mxu0 %v2855
    %3844 = vmatpush2.bf16.msra.mxu0 %v2854
    %3845 = vmatprep.subr.bf16.mxu0 %v2848
    %3846 = vmatpush2.bf16.msra.mxu0 %v2847
    %3847 = vmatprep.subr.bf16.mxu0 %v2841
    %3848 = vmatpush2.bf16.msra.mxu0 %v2840
    %3849 = vmatprep.subr.bf16.mxu0 %v2834
    %3850 = vmatpush2.bf16.msra.mxu0 %v2833
    %3851 = vmatprep.subr.bf16.mxu0 %v2827
    %3852 = vmatpush2.bf16.msra.mxu0 %v2826
    %3853 = vmatprep.subr.bf16.mxu0 %v2820
    %3854 = vmatpush2.bf16.msra.mxu0 %v2819
    %3855 = vmatprep.subr.bf16.mxu0 %v2813
    %3856 = vmatpush2.bf16.msra.mxu0 %v2812
    %3857 = vmatprep.subr.bf16.mxu0 %v2806
    %3858 = vmatpush2.bf16.msra.mxu0 %v2805
    %3859 = vmatprep.mubr.bf16.mxu0 %v561
    %3860 = vmatmul.mubr.bf16.gmra.mxu0 %v560
    %v3861 = vpop.f32.mrf.mxu0
    %v3862 = vadd.f32 %v3821, %v3861
    %v3863 = vpop.f32.mrf.mxu0
    %v3864 = vadd.f32 %v3823, %v3863
    %v3865 = vpop.f32.mrf.mxu0
    %v3866 = vpop.f32.mrf.mxu0
    %3867 = vdwg.mxu0
    %3868 = vmatprep.subr.bf16.mxu0 %v2911
    %3869 = vmatpush1.bf16.msra.mxu0 %v2910
    %3870 = vmatprep.subr.bf16.mxu0 %v2904
    %3871 = vmatpush1.bf16.msra.mxu0 %v2903
    %3872 = vmatprep.subr.bf16.mxu0 %v2897
    %3873 = vmatpush1.bf16.msra.mxu0 %v2896
    %3874 = vmatprep.subr.bf16.mxu0 %v2890
    %3875 = vmatpush1.bf16.msra.mxu0 %v2889
    %3876 = vmatprep.subr.bf16.mxu0 %v2883
    %3877 = vmatpush1.bf16.msra.mxu0 %v2882
    %3878 = vmatprep.subr.bf16.mxu0 %v2876
    %3879 = vmatpush1.bf16.msra.mxu0 %v2875
    %3880 = vmatprep.subr.bf16.mxu0 %v2869
    %3881 = vmatpush1.bf16.msra.mxu0 %v2868
    %3882 = vmatprep.subr.bf16.mxu0 %v2862
    %3883 = vmatpush1.bf16.msra.mxu0 %v2861
    %3884 = vmatprep.subr.bf16.mxu0 %v2967
    %3885 = vmatpush2.bf16.msra.mxu0 %v2966
    %3886 = vmatprep.subr.bf16.mxu0 %v2960
    %3887 = vmatpush2.bf16.msra.mxu0 %v2959
    %3888 = vmatprep.subr.bf16.mxu0 %v2953
    %3889 = vmatpush2.bf16.msra.mxu0 %v2952
    %3890 = vmatprep.subr.bf16.mxu0 %v2946
    %3891 = vmatpush2.bf16.msra.mxu0 %v2945
    %3892 = vmatprep.subr.bf16.mxu0 %v2939
    %3893 = vmatpush2.bf16.msra.mxu0 %v2938
    %3894 = vmatprep.subr.bf16.mxu0 %v2932
    %3895 = vmatpush2.bf16.msra.mxu0 %v2931
    %3896 = vmatprep.subr.bf16.mxu0 %v2925
    %3897 = vmatpush2.bf16.msra.mxu0 %v2924
    %3898 = vmatprep.subr.bf16.mxu0 %v2918
    %3899 = vmatpush2.bf16.msra.mxu0 %v2917
    %3900 = vmatprep.mubr.bf16.mxu0 %v563
    %3901 = vmatmul.mubr.bf16.gmra.mxu0 %v562
    %v3902 = vpop.f32.mrf.mxu0
    %v3903 = vadd.f32 %v3862, %v3902
    %v3904 = vpop.f32.mrf.mxu0
    %v3905 = vadd.f32 %v3864, %v3904
    %v3906 = vpop.f32.mrf.mxu0
    %v3907 = vpop.f32.mrf.mxu0
    %3908 = vdwg.mxu0
    %3909 = vmatprep.subr.bf16.mxu0 0
    %3910 = vmatpush1.bf16.msra.mxu0 %v2576
    %3911 = vmatprep.subr.bf16.mxu0 0
    %3912 = vmatpush1.bf16.msra.mxu0 %v2569
    %3913 = vmatprep.subr.bf16.mxu0 0
    %3914 = vmatpush1.bf16.msra.mxu0 %v2562
    %3915 = vmatprep.subr.bf16.mxu0 0
    %3916 = vmatpush1.bf16.msra.mxu0 %v2555
    %3917 = vmatprep.subr.bf16.mxu0 0
    %3918 = vmatpush1.bf16.msra.mxu0 %v2548
    %3919 = vmatprep.subr.bf16.mxu0 0
    %3920 = vmatpush1.bf16.msra.mxu0 %v2541
    %3921 = vmatprep.subr.bf16.mxu0 0
    %3922 = vmatpush1.bf16.msra.mxu0 %v2534
    %3923 = vmatprep.subr.bf16.mxu0 0
    %3924 = vmatpush1.bf16.msra.mxu0 %v2527
    %3925 = vmatprep.subr.bf16.mxu0 0
    %3926 = vmatpush2.bf16.msra.mxu0 %v2632
    %3927 = vmatprep.subr.bf16.mxu0 0
    %3928 = vmatpush2.bf16.msra.mxu0 %v2625
    %3929 = vmatprep.subr.bf16.mxu0 0
    %3930 = vmatpush2.bf16.msra.mxu0 %v2618
    %3931 = vmatprep.subr.bf16.mxu0 0
    %3932 = vmatpush2.bf16.msra.mxu0 %v2611
    %3933 = vmatprep.subr.bf16.mxu0 0
    %3934 = vmatpush2.bf16.msra.mxu0 %v2604
    %3935 = vmatprep.subr.bf16.mxu0 0
    %3936 = vmatpush2.bf16.msra.mxu0 %v2597
    %3937 = vmatprep.subr.bf16.mxu0 0
    %3938 = vmatpush2.bf16.msra.mxu0 %v2590
    %3939 = vmatprep.subr.bf16.mxu0 0
    %3940 = vmatpush2.bf16.msra.mxu0 %v2583
    %3941 = vmatprep.mubr.bf16.mxu0 %v557
    %3942 = vmatmul.mubr.bf16.gmra.mxu0 %v556
    %v3943 = vpop.f32.mrf.mxu0
    %v3944 = vadd.f32 %v1105, %v3943
    %v3945 = vpop.f32.mrf.mxu0
    %v3946 = vpop.f32.mrf.mxu0
    %v3947 = vpop.f32.mrf.mxu0
    %3948 = vdwg.mxu0
    %3949 = vmatprep.subr.bf16.mxu0 0
    %3950 = vmatpush1.bf16.msra.mxu0 %v2688
    %3951 = vmatprep.subr.bf16.mxu0 0
    %3952 = vmatpush1.bf16.msra.mxu0 %v2681
    %3953 = vmatprep.subr.bf16.mxu0 0
    %3954 = vmatpush1.bf16.msra.mxu0 %v2674
    %3955 = vmatprep.subr.bf16.mxu0 0
    %3956 = vmatpush1.bf16.msra.mxu0 %v2667
    %3957 = vmatprep.subr.bf16.mxu0 0
    %3958 = vmatpush1.bf16.msra.mxu0 %v2660
    %3959 = vmatprep.subr.bf16.mxu0 0
    %3960 = vmatpush1.bf16.msra.mxu0 %v2653
    %3961 = vmatprep.subr.bf16.mxu0 0
    %3962 = vmatpush1.bf16.msra.mxu0 %v2646
    %3963 = vmatprep.subr.bf16.mxu0 0
    %3964 = vmatpush1.bf16.msra.mxu0 %v2639
    %3965 = vmatprep.subr.bf16.mxu0 0
    %3966 = vmatpush2.bf16.msra.mxu0 %v2744
    %3967 = vmatprep.subr.bf16.mxu0 0
    %3968 = vmatpush2.bf16.msra.mxu0 %v2737
    %3969 = vmatprep.subr.bf16.mxu0 0
    %3970 = vmatpush2.bf16.msra.mxu0 %v2730
    %3971 = vmatprep.subr.bf16.mxu0 0
    %3972 = vmatpush2.bf16.msra.mxu0 %v2723
    %3973 = vmatprep.subr.bf16.mxu0 0
    %3974 = vmatpush2.bf16.msra.mxu0 %v2716
    %3975 = vmatprep.subr.bf16.mxu0 0
    %3976 = vmatpush2.bf16.msra.mxu0 %v2709
    %3977 = vmatprep.subr.bf16.mxu0 0
    %3978 = vmatpush2.bf16.msra.mxu0 %v2702
    %3979 = vmatprep.subr.bf16.mxu0 0
    %3980 = vmatpush2.bf16.msra.mxu0 %v2695
    %3981 = vmatprep.mubr.bf16.mxu0 %v559
    %3982 = vmatmul.mubr.bf16.gmra.mxu0 %v558
    %v3983 = vpop.f32.mrf.mxu0
    %v3984 = vadd.f32 %v3944, %v3983
    %v3985 = vpop.f32.mrf.mxu0
    %v3986 = vpop.f32.mrf.mxu0
    %v3987 = vpop.f32.mrf.mxu0
    %3988 = vdwg.mxu0
    %3989 = vmatprep.subr.bf16.mxu0 0
    %3990 = vmatpush1.bf16.msra.mxu0 %v2800
    %3991 = vmatprep.subr.bf16.mxu0 0
    %3992 = vmatpush1.bf16.msra.mxu0 %v2793
    %3993 = vmatprep.subr.bf16.mxu0 0
    %3994 = vmatpush1.bf16.msra.mxu0 %v2786
    %3995 = vmatprep.subr.bf16.mxu0 0
    %3996 = vmatpush1.bf16.msra.mxu0 %v2779
    %3997 = vmatprep.subr.bf16.mxu0 0
    %3998 = vmatpush1.bf16.msra.mxu0 %v2772
    %3999 = vmatprep.subr.bf16.mxu0 0
    %4000 = vmatpush1.bf16.msra.mxu0 %v2765
    %4001 = vmatprep.subr.bf16.mxu0 0
    %4002 = vmatpush1.bf16.msra.mxu0 %v2758
    %4003 = vmatprep.subr.bf16.mxu0 0
    %4004 = vmatpush1.bf16.msra.mxu0 %v2751
    %4005 = vmatprep.subr.bf16.mxu0 0
    %4006 = vmatpush2.bf16.msra.mxu0 %v2856
    %4007 = vmatprep.subr.bf16.mxu0 0
    %4008 = vmatpush2.bf16.msra.mxu0 %v2849
    %4009 = vmatprep.subr.bf16.mxu0 0
    %4010 = vmatpush2.bf16.msra.mxu0 %v2842
    %4011 = vmatprep.subr.bf16.mxu0 0
    %4012 = vmatpush2.bf16.msra.mxu0 %v2835
    %4013 = vmatprep.subr.bf16.mxu0 0
    %4014 = vmatpush2.bf16.msra.mxu0 %v2828
    %4015 = vmatprep.subr.bf16.mxu0 0
    %4016 = vmatpush2.bf16.msra.mxu0 %v2821
    %4017 = vmatprep.subr.bf16.mxu0 0
    %4018 = vmatpush2.bf16.msra.mxu0 %v2814
    %4019 = vmatprep.subr.bf16.mxu0 0
    %4020 = vmatpush2.bf16.msra.mxu0 %v2807
    %4021 = vmatprep.mubr.bf16.mxu0 %v561
    %4022 = vmatmul.mubr.bf16.gmra.mxu0 %v560
    %v4023 = vpop.f32.mrf.mxu0
    %v4024 = vadd.f32 %v3984, %v4023
    %v4025 = vpop.f32.mrf.mxu0
    %v4026 = vpop.f32.mrf.mxu0
    %v4027 = vpop.f32.mrf.mxu0
    %4028 = vdwg.mxu0
    %4029 = vmatprep.subr.bf16.mxu0 0
    %4030 = vmatpush1.bf16.msra.mxu0 %v2912
    %4031 = vmatprep.subr.bf16.mxu0 0
    %4032 = vmatpush1.bf16.msra.mxu0 %v2905
    %4033 = vmatprep.subr.bf16.mxu0 0
    %4034 = vmatpush1.bf16.msra.mxu0 %v2898
    %4035 = vmatprep.subr.bf16.mxu0 0
    %4036 = vmatpush1.bf16.msra.mxu0 %v2891
    %4037 = vmatprep.subr.bf16.mxu0 0
    %4038 = vmatpush1.bf16.msra.mxu0 %v2884
    %4039 = vmatprep.subr.bf16.mxu0 0
    %4040 = vmatpush1.bf16.msra.mxu0 %v2877
    %4041 = vmatprep.subr.bf16.mxu0 0
    %4042 = vmatpush1.bf16.msra.mxu0 %v2870
    %4043 = vmatprep.subr.bf16.mxu0 0
    %4044 = vmatpush1.bf16.msra.mxu0 %v2863
    %4045 = vmatprep.subr.bf16.mxu0 0
    %4046 = vmatpush2.bf16.msra.mxu0 %v2968
    %4047 = vmatprep.subr.bf16.mxu0 0
    %4048 = vmatpush2.bf16.msra.mxu0 %v2961
    %4049 = vmatprep.subr.bf16.mxu0 0
    %4050 = vmatpush2.bf16.msra.mxu0 %v2954
    %4051 = vmatprep.subr.bf16.mxu0 0
    %4052 = vmatpush2.bf16.msra.mxu0 %v2947
    %4053 = vmatprep.subr.bf16.mxu0 0
    %4054 = vmatpush2.bf16.msra.mxu0 %v2940
    %4055 = vmatprep.subr.bf16.mxu0 0
    %4056 = vmatpush2.bf16.msra.mxu0 %v2933
    %4057 = vmatprep.subr.bf16.mxu0 0
    %4058 = vmatpush2.bf16.msra.mxu0 %v2926
    %4059 = vmatprep.subr.bf16.mxu0 0
    %4060 = vmatpush2.bf16.msra.mxu0 %v2919
    %4061 = vmatprep.mubr.bf16.mxu0 %v563
    %4062 = vmatmul.mubr.bf16.gmra.mxu0 %v562
    %v4063 = vpop.f32.mrf.mxu0
    %v4064 = vadd.f32 %v4024, %v4063
    %v4065 = vpop.f32.mrf.mxu0
    %v4066 = vpop.f32.mrf.mxu0
    %v4067 = vpop.f32.mrf.mxu0
    %4068 = vdwg.mxu0
    %v4069 = vxor.u32 %v3575, 2147483648
    %v4070 = vxor.u32 %v3577, 2147483648
    %v4071 = vxor.u32 %v3739, 2147483648
    %v4072 = vxor.u32 %v3741, 2147483648
    %v4073 = vxor.u32 %v3903, 2147483648
    %v4074 = vxor.u32 %v3905, 2147483648
    %v4075 = vxor.u32 %v4064, 2147483648
    %v4076 = vmul.f32 %v4069, 1.442695
    %v4077 = vpow.pop %v4076
    %v4078 = vmul.f32 %v4070, 1.442695
    %v4079 = vpow.pop %v4078
    %v4080 = vmul.f32 %v4071, 1.442695
    %v4081 = vpow.pop %v4080
    %v4082 = vmul.f32 %v4072, 1.442695
    %v4083 = vpow.pop %v4082
    %v4084 = vmul.f32 %v4073, 1.442695
    %v4085 = vpow.pop %v4084
    %v4086 = vmul.f32 %v4074, 1.442695
    %v4087 = vpow.pop %v4086
    %v4088 = vmul.f32 %v4075, 1.442695
    %v4089 = vpow.pop %v4088
    %v4090 = vadd.f32 %v4077, 1.0
    %v4091 = vadd.f32 %v4079, 1.0
    %v4092 = vadd.f32 %v4081, 1.0
    %v4093 = vadd.f32 %v4083, 1.0
    %v4094 = vadd.f32 %v4085, 1.0
    %v4095 = vadd.f32 %v4087, 1.0
    %v4096 = vadd.f32 %v4089, 1.0
    %v4097 = vrcp.pop %v4090
    %v4098 = vmul.f32 1.0, %v4097
    %v4099 = vrcp.pop %v4091
    %v4100 = vmul.f32 1.0, %v4099
    %v4101 = vrcp.pop %v4092
    %v4102 = vmul.f32 1.0, %v4101
    %v4103 = vrcp.pop %v4093
    %v4104 = vmul.f32 1.0, %v4103
    %v4105 = vrcp.pop %v4094
    %v4106 = vmul.f32 1.0, %v4105
    %v4107 = vrcp.pop %v4095
    %v4108 = vmul.f32 1.0, %v4107
    %v4109 = vrcp.pop %v4096
    %v4110 = vmul.f32 1.0, %v4109
    %4111 = vst [vmem:[%s7] sm:$0xff] %v4098
    %4112 = vst [vmem:[%s7 + $0x8] sm:$0xff] %v4100
    %4113 = vst [vmem:[%s7 + $0x10] sm:$0xff] %v4102
    %4114 = vst [vmem:[%s7 + $0x18] sm:$0xff] %v4104
    %4115 = vst [vmem:[%s7 + $0x20] sm:$0xff] %v4106
    %4116 = vst [vmem:[%s7 + $0x28] sm:$0xff] %v4108
    %4117 = vst [vmem:[%s7 + $0x30] sm:$0xff] %v4110
    // Predicated region
    $region54: #{mnist_decoder_forward.1} parent=1 // pred_check
      _
    $region55: #{mnist_decoder_forward.1} parent=1 // pred_check_branch
      %4119 = sbr.rel (0) target = $region57
    $region56: #{mnist_decoder_forward.1} parent=1 // pred_region
      _
    $region57: #{mnist_decoder_forward.1} parent=1 // pred_fallthru
      _
    // Predicated region
    $region58: #{mnist_decoder_forward.1} parent=1 // pred_check
      _
    $region59: #{mnist_decoder_forward.1} parent=1 // pred_check_branch
      %4121 = sbr.rel (0) target = $region61
    $region60: #{mnist_decoder_forward.1} parent=1 // pred_region
      _
    $region61: #{mnist_decoder_forward.1} parent=1 // pred_fallthru
      _
    %4122 = vsyncpa [#allocation3], 1
    %4123 = vsyncpa [#allocation5], 1
    %4124 = vsyncpa [#allocation8], 1
    %4125 = vsyncpa [#allocation11], 1

</llo_original>
